<compile_context>
chip_gen: v6e
topology: v6e:2x2x1
jax: 0.10.0
libtpu: 0.0.40
codegen_flags: <defaults>
</compile_context>

<pallas_src>
import functools

import jax
import jax.numpy as jnp
from jax.experimental import pallas as pl
from jax.experimental.pallas import tpu as pltpu


def _round_up(n, m):
    return ((n + m - 1) // m) * m


def _vae_clf_kernel(
    x_ref, eps_ref,
    w_e1_ref, w_muv_ref, w_d1_ref, w_d2_ref, w_c1_ref, w_c2_ref,
    b_ref,
    out_ref,
    *, d_in, hidden, latent, pad_classes,
):
    bf16 = jnp.bfloat16
    x = x_ref[...]        # (TILE_B, D)  bf16
    eps = eps_ref[...]    # (TILE_B, Z)  f32
    b = b_ref[...]        # (6, BMAX)    f32 packed biases

    # ---- VAE encoder ----
    h_enc = jnp.dot(x, w_e1_ref[...], preferred_element_type=jnp.float32)
    h_enc = jnp.maximum(h_enc + b[0:1, :hidden], 0.0)                       # relu

    # fused mu || logvar head: one MXU push instead of two
    muv = jnp.dot(h_enc.astype(bf16), w_muv_ref[...],
                  preferred_element_type=jnp.float32)
    muv = muv + b[1:2, : 2 * latent]
    mu = muv[:, :latent]
    logvar = muv[:, latent:]

    # ---- reparameterize (torch.no_grad in the reference) ----
    z = mu + eps * jnp.exp(0.5 * logvar)

    # ---- VAE decoder -> reconstruction  (== vae(x)[0]) ----
    h_dec = jnp.dot(z.astype(bf16), w_d1_ref[...],
                    preferred_element_type=jnp.float32)
    h_dec = jnp.maximum(h_dec + b[2:3, :hidden], 0.0)                       # relu

    recon = jnp.dot(h_dec.astype(bf16), w_d2_ref[...],
                    preferred_element_type=jnp.float32)
    recon = jax.nn.sigmoid(recon + b[3:4, :d_in])                           # [0, 1]

    # ---- base_classifier on the reconstruction ----
    h_clf = jnp.dot(recon.astype(bf16), w_c1_ref[...],
                    preferred_element_type=jnp.float32)
    h_clf = jnp.maximum(h_clf + b[4:5, :hidden], 0.0)                       # relu

    logits = jnp.dot(h_clf.astype(bf16), w_c2_ref[...],
                     preferred_element_type=jnp.float32)
    logits = logits + b[5:6, :pad_classes]

    out_ref[...] = logits.astype(out_ref.dtype)                            # lane-dense store


def vae_clf_forward(x_nchw, eps, params, *, tile_b=128):
    """Forward of VAE_CLF.

    x_nchw: (B, C, H, W) float32 (flattened row-major, same as torch .view(B,-1)).
    eps:    (B, Z) single noise sample, or (B, N, Z) N smoothing samples per input.
    Returns logits (B, num_classes) or (B, N, num_classes).
    """
    d_in, hidden = params["w_e1"].shape
    latent = params["w_d1"].shape[0]
    num_classes = params["w_c2"].shape[1]

    B = x_nchw.shape[0]
    x_flat = x_nchw.reshape(B, -1).astype(jnp.float32)

    squeeze = (eps.ndim == 2)
    eps3 = eps[:, None, :] if squeeze else eps
    n_samples = eps3.shape[1]

    # One row per (input, noise-sample): large effective batch amortizes the
    # weight DMA and fills the MXU rows.
    x_eff = jnp.repeat(x_flat, n_samples, axis=0)                # (B*N, D)
    eps_eff = eps3.reshape(B * n_samples, latent).astype(jnp.float32)
    b_eff = B * n_samples

    tile = tile_b if b_eff >= tile_b else _round_up(b_eff, 8)
    b_pad = _round_up(b_eff, tile)
    if b_pad != b_eff:
        x_eff = jnp.pad(x_eff, ((0, b_pad - b_eff), (0, 0)))
        eps_eff = jnp.pad(eps_eff, ((0, b_pad - b_eff), (0, 0)))

    # bf16 weights/activations; accumulation stays f32 on the MXU.
    bf16 = jnp.bfloat16
    x_eff = x_eff.astype(bf16)
    w_e1 = params["w_e1"].astype(bf16)
    w_muv = params["w_muv"].astype(bf16)
    w_d1 = params["w_d1"].astype(bf16)
    w_d2 = params["w_d2"].astype(bf16)
    w_c1 = params["w_c1"].astype(bf16)

    # Lane-dense classifier head: pad output classes to a multiple of 128.
    pad_classes = _round_up(num_classes, 128)
    w_c2 = jnp.pad(params["w_c2"],
                   ((0, 0), (0, pad_classes - num_classes))).astype(bf16)

    # Pack all bias vectors into one small f32 operand (one DMA descriptor).
    bmax = max(hidden, 2 * latent, d_in, pad_classes)

    def _row(v):
        v = v.reshape(-1).astype(jnp.float32)
        return jnp.pad(v, (0, bmax - v.shape[0]))

    biases = jnp.stack([
        _row(params["b_e1"]), _row(params["b_muv"]), _row(params["b_d1"]),
        _row(params["b_d2"]), _row(params["b_c1"]), _row(params["b_c2"]),
    ])                                                            # (6, bmax)

    const = lambda i: (0, 0)   # resident full-array blocks (DMA'd once)
    kernel = functools.partial(_vae_clf_kernel, d_in=d_in, hidden=hidden,
                               latent=latent, pad_classes=pad_classes)

    out = pl.pallas_call(
        kernel,
        out_shape=jax.ShapeDtypeStruct((b_pad, pad_classes), jnp.float32),
        grid=(b_pad // tile,),
        in_specs=[
            pl.BlockSpec((tile, d_in), lambda i: (i, 0)),        # x tile
            pl.BlockSpec((tile, latent), lambda i: (i, 0)),      # eps tile
            pl.BlockSpec(w_e1.shape, const),                     # resident weights
            pl.BlockSpec(w_muv.shape, const),
            pl.BlockSpec(w_d1.shape, const),
            pl.BlockSpec(w_d2.shape, const),
            pl.BlockSpec(w_c1.shape, const),
            pl.BlockSpec(w_c2.shape, const),
            pl.BlockSpec(biases.shape, const),                   # packed biases
        ],
        out_specs=pl.BlockSpec((tile, pad_classes), lambda i: (i, 0)),
        compiler_params=pltpu.CompilerParams(
            dimension_semantics=("parallel",),
            vmem_limit_bytes=16 << 20,   # actual footprint ~4 MiB; ample headroom, safe on v7x
        ),
    )(x_eff, eps_eff, w_e1, w_muv, w_d1, w_d2, w_c1, w_c2, biases)

    logits = out[:b_eff, :num_classes]
    if squeeze:
        return logits.reshape(B, num_classes)
    return logits.reshape(B, n_samples, num_classes)


def init_params(key, d_in, hidden, latent, num_classes):
    """Deterministic synthetic parameter init (scaled normal)."""
    def dense(k, fan_in, fan_out):
        kw, kb = jax.random.split(k)
        scale = 1.0 / jnp.sqrt(jnp.float32(fan_in))
        w = jax.random.normal(kw, (fan_in, fan_out), jnp.float32) * scale
        b = jax.random.normal(kb, (fan_out,), jnp.float32) * 0.01
        return w, b

    keys = jax.random.split(key, 6)
    p = {}
    p["w_e1"], p["b_e1"] = dense(keys[0], d_in, hidden)            # encoder fc
    p["w_muv"], p["b_muv"] = dense(keys[1], hidden, 2 * latent)    # fused mu||logvar heads
    p["w_d1"], p["b_d1"] = dense(keys[2], latent, hidden)          # decoder fc
    p["w_d2"], p["b_d2"] = dense(keys[3], hidden, d_in)            # recon head
    p["w_c1"], p["b_c1"] = dense(keys[4], d_in, hidden)            # classifier fc1
    p["w_c2"], p["b_c2"] = dense(keys[5], hidden, num_classes)     # classifier fc2
    return p


def ref_forward(x_flat, eps2d, params):
    """Pure-JAX reference with the same bf16 compute / f32 accumulate recipe."""
    bf16 = jnp.bfloat16
    latent = params["w_d1"].shape[0]

    def dot(a, w):
        return jnp.dot(a.astype(bf16), w.astype(bf16),
                       preferred_element_type=jnp.float32)

    he = jnp.maximum(dot(x_flat, params["w_e1"]) + params["b_e1"], 0.0)
    muv = dot(he, params["w_muv"]) + params["b_muv"]
    mu, lv = muv[:, :latent], muv[:, latent:]
    z = mu + eps2d * jnp.exp(0.5 * lv)
    hd = jnp.maximum(dot(z, params["w_d1"]) + params["b_d1"], 0.0)
    rec = jax.nn.sigmoid(dot(hd, params["w_d2"]) + params["b_d2"])
    hc = jnp.maximum(dot(rec, params["w_c1"]) + params["b_c1"], 0.0)
    return dot(hc, params["w_c2"]) + params["b_c2"]


if __name__ == "__main__":
    # Small image-like shapes consistent with the module's forward.
    B, C, H, W = 2, 4, 16, 16
    D = C * H * W            # 1024
    HIDDEN = 128
    LATENT = 32
    NUM_CLASSES = 10
    N_SAMPLES = 128          # smoothing noise samples per input -> B_eff = 256

    root = jax.random.PRNGKey(0)
    k_x, k_eps, k_p = jax.random.split(root, 3)

    x = jax.random.uniform(k_x, (B, C, H, W), jnp.float32)
    eps = jax.random.normal(k_eps, (B, N_SAMPLES, LATENT), jnp.float32)
    params = init_params(k_p, D, HIDDEN, LATENT, NUM_CLASSES)

    # Batched (smoothing) path: 2 inputs x 128 noise samples in one call.
    fwd = jax.jit(functools.partial(vae_clf_forward, tile_b=128))
    logits = jax.block_until_ready(fwd(x, eps, params))
    assert logits.shape == (B, N_SAMPLES, NUM_CLASSES)
    assert bool(jnp.all(jnp.isfinite(logits)))

    # Pure-JAX reference check.
    x_rep = jnp.repeat(x.reshape(B, -1), N_SAMPLES, axis=0)
    ref = ref_forward(x_rep, eps.reshape(B * N_SAMPLES, LATENT), params)
    ref = ref.reshape(B, N_SAMPLES, NUM_CLASSES)
    assert bool(jnp.allclose(logits, ref, atol=5e-2, rtol=5e-2))

    # Plain module-style forward (one fixed eps per input).
    eps1 = eps[:, 0, :]
    logits1 = jax.block_until_ready(vae_clf_forward(x, eps1, params))
    assert logits1.shape == (B, NUM_CLASSES)
    assert bool(jnp.allclose(logits1, ref[:, 0, :], atol=5e-2, rtol=5e-2))

    print("KERNEL_OK")
</pallas_src>

<mosaic_0001>
module attributes {stable_mosaic.version = 11 : i64} {
  func.func @_vae_clf_kernel(%arg0: i32, %arg1: memref<128x1024xbf16, #tpu.memory_space<vmem>>, %arg2: memref<128x32xf32, #tpu.memory_space<vmem>>, %arg3: memref<1024x128xbf16, #tpu.memory_space<vmem>>, %arg4: memref<128x64xbf16, #tpu.memory_space<vmem>>, %arg5: memref<32x128xbf16, #tpu.memory_space<vmem>>, %arg6: memref<128x1024xbf16, #tpu.memory_space<vmem>>, %arg7: memref<1024x128xbf16, #tpu.memory_space<vmem>>, %arg8: memref<128x128xbf16, #tpu.memory_space<vmem>>, %arg9: memref<6x1024xf32, #tpu.memory_space<vmem>>, %arg10: memref<128x128xf32, #tpu.memory_space<vmem>>) attributes {dimension_semantics = [#tpu.dimension_semantics<parallel>], iteration_bounds = array<i64: 2>, scalar_prefetch = 0 : i64, scratch_operands = 0 : i64, tpu.core_type = #tpu.core_type<tc>, window_params = [{transform_indices = @transform_0, window_bounds = array<i64: 128, 1024>}, {transform_indices = @transform_1, window_bounds = array<i64: 128, 32>}, {pipeline_mode = #tpu.pipeline_mode<synchronous>, transform_indices = @transform_2, window_bounds = array<i64: 1024, 128>}, {pipeline_mode = #tpu.pipeline_mode<synchronous>, transform_indices = @transform_3, window_bounds = array<i64: 128, 64>}, {pipeline_mode = #tpu.pipeline_mode<synchronous>, transform_indices = @transform_4, window_bounds = array<i64: 32, 128>}, {pipeline_mode = #tpu.pipeline_mode<synchronous>, transform_indices = @transform_5, window_bounds = array<i64: 128, 1024>}, {pipeline_mode = #tpu.pipeline_mode<synchronous>, transform_indices = @transform_6, window_bounds = array<i64: 1024, 128>}, {pipeline_mode = #tpu.pipeline_mode<synchronous>, transform_indices = @transform_7, window_bounds = array<i64: 128, 128>}, {pipeline_mode = #tpu.pipeline_mode<synchronous>, transform_indices = @transform_8, window_bounds = array<i64: 6, 1024>}, {transform_indices = @transform_9, window_bounds = array<i64: 128, 128>}]} {
    %c0 = arith.constant 0 : index
    %c0_0 = arith.constant 0 : index
    %0 = vector.load %arg1[%c0, %c0_0] : memref<128x1024xbf16, #tpu.memory_space<vmem>>, vector<128x1024xbf16>
    %c0_1 = arith.constant 0 : index
    %c0_2 = arith.constant 0 : index
    %1 = vector.load %arg2[%c0_1, %c0_2] : memref<128x32xf32, #tpu.memory_space<vmem>>, vector<128x32xf32>
    %c0_3 = arith.constant 0 : index
    %c0_4 = arith.constant 0 : index
    %2 = vector.load %arg9[%c0_3, %c0_4] : memref<6x1024xf32, #tpu.memory_space<vmem>>, vector<6x1024xf32>
    %c0_5 = arith.constant 0 : index
    %c0_6 = arith.constant 0 : index
    %3 = vector.load %arg3[%c0_5, %c0_6] : memref<1024x128xbf16, #tpu.memory_space<vmem>>, vector<1024x128xbf16>
    %cst = arith.constant dense<0.000000e+00> : vector<128x128xf32>
    %4 = tpu.matmul %0, %3, %cst {dimension_numbers = #tpu.dot_dimension_numbers<[1], [0], [0], [1], [0, 0, 1, 1], [], []>} : vector<128x1024xbf16>, vector<1024x128xbf16>, vector<128x128xf32> -> vector<128x128xf32>
    %5 = vector.extract_strided_slice %2 {offsets = [0, 0], sizes = [1, 128], strides = [1, 1]} : vector<6x1024xf32> to vector<1x128xf32>
    %6 = vector.broadcast %5 : vector<1x128xf32> to vector<128x128xf32>
    %7 = arith.addf %4, %6 : vector<128x128xf32>
    %cst_7 = arith.constant 0.000000e+00 : f32
    %8 = vector.broadcast %cst_7 : f32 to vector<128x128xf32>
    %9 = arith.maximumf %7, %8 : vector<128x128xf32>
    %10 = arith.truncf %9 : vector<128x128xf32> to vector<128x128xbf16>
    %c0_8 = arith.constant 0 : index
    %c0_9 = arith.constant 0 : index
    %11 = vector.load %arg4[%c0_8, %c0_9] : memref<128x64xbf16, #tpu.memory_space<vmem>>, vector<128x64xbf16>
    %cst_10 = arith.constant dense<0.000000e+00> : vector<128x64xf32>
    %12 = tpu.matmul %10, %11, %cst_10 {dimension_numbers = #tpu.dot_dimension_numbers<[1], [0], [0], [1], [0, 0, 1, 1], [], []>} : vector<128x128xbf16>, vector<128x64xbf16>, vector<128x64xf32> -> vector<128x64xf32>
    %13 = vector.extract_strided_slice %2 {offsets = [1, 0], sizes = [1, 64], strides = [1, 1]} : vector<6x1024xf32> to vector<1x64xf32>
    %14 = vector.broadcast %13 : vector<1x64xf32> to vector<128x64xf32>
    %15 = arith.addf %12, %14 : vector<128x64xf32>
    %16 = vector.extract_strided_slice %15 {offsets = [0, 0], sizes = [128, 32], strides = [1, 1]} : vector<128x64xf32> to vector<128x32xf32>
    %17 = vector.extract_strided_slice %15 {offsets = [0, 32], sizes = [128, 32], strides = [1, 1]} : vector<128x64xf32> to vector<128x32xf32>
    %cst_11 = arith.constant 5.000000e-01 : f32
    %18 = vector.broadcast %cst_11 : f32 to vector<128x32xf32>
    %19 = arith.mulf %18, %17 : vector<128x32xf32>
    %20 = math.exp %19 : vector<128x32xf32>
    %21 = arith.mulf %1, %20 : vector<128x32xf32>
    %22 = arith.addf %16, %21 : vector<128x32xf32>
    %23 = arith.truncf %22 : vector<128x32xf32> to vector<128x32xbf16>
    %c0_12 = arith.constant 0 : index
    %c0_13 = arith.constant 0 : index
    %24 = vector.load %arg5[%c0_12, %c0_13] : memref<32x128xbf16, #tpu.memory_space<vmem>>, vector<32x128xbf16>
    %cst_14 = arith.constant dense<0.000000e+00> : vector<128x128xf32>
    %25 = tpu.matmul %23, %24, %cst_14 {dimension_numbers = #tpu.dot_dimension_numbers<[1], [0], [0], [1], [0, 0, 1, 1], [], []>} : vector<128x32xbf16>, vector<32x128xbf16>, vector<128x128xf32> -> vector<128x128xf32>
    %26 = vector.extract_strided_slice %2 {offsets = [2, 0], sizes = [1, 128], strides = [1, 1]} : vector<6x1024xf32> to vector<1x128xf32>
    %27 = vector.broadcast %26 : vector<1x128xf32> to vector<128x128xf32>
    %28 = arith.addf %25, %27 : vector<128x128xf32>
    %cst_15 = arith.constant 0.000000e+00 : f32
    %29 = vector.broadcast %cst_15 : f32 to vector<128x128xf32>
    %30 = arith.maximumf %28, %29 : vector<128x128xf32>
    %31 = arith.truncf %30 : vector<128x128xf32> to vector<128x128xbf16>
    %c0_16 = arith.constant 0 : index
    %c0_17 = arith.constant 0 : index
    %32 = vector.load %arg6[%c0_16, %c0_17] : memref<128x1024xbf16, #tpu.memory_space<vmem>>, vector<128x1024xbf16>
    %cst_18 = arith.constant dense<0.000000e+00> : vector<128x1024xf32>
    %33 = tpu.matmul %31, %32, %cst_18 {dimension_numbers = #tpu.dot_dimension_numbers<[1], [0], [0], [1], [0, 0, 1, 1], [], []>} : vector<128x128xbf16>, vector<128x1024xbf16>, vector<128x1024xf32> -> vector<128x1024xf32>
    %34 = vector.extract_strided_slice %2 {offsets = [3, 0], sizes = [1, 1024], strides = [1, 1]} : vector<6x1024xf32> to vector<1x1024xf32>
    %35 = vector.broadcast %34 : vector<1x1024xf32> to vector<128x1024xf32>
    %36 = arith.addf %33, %35 : vector<128x1024xf32>
    %37 = arith.negf %36 : vector<128x1024xf32>
    %38 = math.exp %37 : vector<128x1024xf32>
    %cst_19 = arith.constant 1.000000e+00 : f32
    %39 = vector.broadcast %cst_19 : f32 to vector<128x1024xf32>
    %40 = arith.addf %39, %38 : vector<128x1024xf32>
    %41 = arith.divf %39, %40 : vector<128x1024xf32>
    %42 = arith.truncf %41 : vector<128x1024xf32> to vector<128x1024xbf16>
    %c0_20 = arith.constant 0 : index
    %c0_21 = arith.constant 0 : index
    %43 = vector.load %arg7[%c0_20, %c0_21] : memref<1024x128xbf16, #tpu.memory_space<vmem>>, vector<1024x128xbf16>
    %cst_22 = arith.constant dense<0.000000e+00> : vector<128x128xf32>
    %44 = tpu.matmul %42, %43, %cst_22 {dimension_numbers = #tpu.dot_dimension_numbers<[1], [0], [0], [1], [0, 0, 1, 1], [], []>} : vector<128x1024xbf16>, vector<1024x128xbf16>, vector<128x128xf32> -> vector<128x128xf32>
    %45 = vector.extract_strided_slice %2 {offsets = [4, 0], sizes = [1, 128], strides = [1, 1]} : vector<6x1024xf32> to vector<1x128xf32>
    %46 = vector.broadcast %45 : vector<1x128xf32> to vector<128x128xf32>
    %47 = arith.addf %44, %46 : vector<128x128xf32>
    %cst_23 = arith.constant 0.000000e+00 : f32
    %48 = vector.broadcast %cst_23 : f32 to vector<128x128xf32>
    %49 = arith.maximumf %47, %48 : vector<128x128xf32>
    %50 = arith.truncf %49 : vector<128x128xf32> to vector<128x128xbf16>
    %c0_24 = arith.constant 0 : index
    %c0_25 = arith.constant 0 : index
    %51 = vector.load %arg8[%c0_24, %c0_25] : memref<128x128xbf16, #tpu.memory_space<vmem>>, vector<128x128xbf16>
    %cst_26 = arith.constant dense<0.000000e+00> : vector<128x128xf32>
    %52 = tpu.matmul %50, %51, %cst_26 {dimension_numbers = #tpu.dot_dimension_numbers<[1], [0], [0], [1], [0, 0, 1, 1], [], []>} : vector<128x128xbf16>, vector<128x128xbf16>, vector<128x128xf32> -> vector<128x128xf32>
    %53 = vector.extract_strided_slice %2 {offsets = [5, 0], sizes = [1, 128], strides = [1, 1]} : vector<6x1024xf32> to vector<1x128xf32>
    %54 = vector.broadcast %53 : vector<1x128xf32> to vector<128x128xf32>
    %55 = arith.addf %52, %54 : vector<128x128xf32>
    %c0_27 = arith.constant 0 : index
    %c0_28 = arith.constant 0 : index
    %56 = vector.load %arg10[%c0_27, %c0_28] : memref<128x128xf32, #tpu.memory_space<vmem>>, vector<128x128xf32>
    tpu.vector_store %arg10[%c0_27, %c0_28], %55 {strides = array<i32>} : memref<128x128xf32, #tpu.memory_space<vmem>>, vector<128x128xf32>,
    return
  }
  func.func @transform_0(%arg0: i32) -> (i32, i32) {
    %c0_i32 = arith.constant 0 : i32
    %c0_i32_0 = arith.constant 0 : i32
    return %arg0, %c0_i32 : i32, i32
  }
  func.func @transform_1(%arg0: i32) -> (i32, i32) {
    %c0_i32 = arith.constant 0 : i32
    %c0_i32_0 = arith.constant 0 : i32
    return %arg0, %c0_i32 : i32, i32
  }
  func.func @transform_2(%arg0: i32) -> (i32, i32) {
    %c0_i32 = arith.constant 0 : i32
    %c0_i32_0 = arith.constant 0 : i32
    %c0_i32_1 = arith.constant 0 : i32
    return %c0_i32, %c0_i32_0 : i32, i32
  }
  func.func @transform_3(%arg0: i32) -> (i32, i32) {
    %c0_i32 = arith.constant 0 : i32
    %c0_i32_0 = arith.constant 0 : i32
    %c0_i32_1 = arith.constant 0 : i32
    return %c0_i32, %c0_i32_0 : i32, i32
  }
  func.func @transform_4(%arg0: i32) -> (i32, i32) {
    %c0_i32 = arith.constant 0 : i32
    %c0_i32_0 = arith.constant 0 : i32
    %c0_i32_1 = arith.constant 0 : i32
    return %c0_i32, %c0_i32_0 : i32, i32
  }
  func.func @transform_5(%arg0: i32) -> (i32, i32) {
    %c0_i32 = arith.constant 0 : i32
    %c0_i32_0 = arith.constant 0 : i32
    %c0_i32_1 = arith.constant 0 : i32
    return %c0_i32, %c0_i32_0 : i32, i32
  }
  func.func @transform_6(%arg0: i32) -> (i32, i32) {
    %c0_i32 = arith.constant 0 : i32
    %c0_i32_0 = arith.constant 0 : i32
    %c0_i32_1 = arith.constant 0 : i32
    return %c0_i32, %c0_i32_0 : i32, i32
  }
  func.func @transform_7(%arg0: i32) -> (i32, i32) {
    %c0_i32 = arith.constant 0 : i32
    %c0_i32_0 = arith.constant 0 : i32
    %c0_i32_1 = arith.constant 0 : i32
    return %c0_i32, %c0_i32_0 : i32, i32
  }
  func.func @transform_8(%arg0: i32) -> (i32, i32) {
    %c0_i32 = arith.constant 0 : i32
    %c0_i32_0 = arith.constant 0 : i32
    %c0_i32_1 = arith.constant 0 : i32
    return %c0_i32, %c0_i32_0 : i32, i32
  }
  func.func @transform_9(%arg0: i32) -> (i32, i32) {
    %c0_i32 = arith.constant 0 : i32
    %c0_i32_0 = arith.constant 0 : i32
    return %arg0, %c0_i32 : i32, i32
  }
}

</mosaic_0001>

<llo_original>
// kernel: vae_clf_forward.1
$region0: #{vae_clf_forward.1}
  #allocation0 [shape = 'u32[]', space=smem, size = 0x4, offset = 0x4, fixed_abs, tag = 'smem constant byte address 0x4 - core index']
  #allocation1 [shape = 'u32[144,128]{1,0:T(1,128)}', space=vmem, size = 0x12000, scoped, tag = 'internal scratch']
  %s0 = inlined_call_operand.vmem [shape: bf16[256,1024], index: 0, kind: input, shape index: {}]
  %s1 = inlined_call_operand.vmem [shape: f32[256,32], index: 1, kind: input, shape index: {}]
  %s2 = inlined_call_operand.vmem [shape: bf16[1024,128], index: 2, kind: input, shape index: {}]
  %s3 = inlined_call_operand.vmem [shape: bf16[128,64], index: 3, kind: input, shape index: {}]
  %s4 = inlined_call_operand.vmem [shape: bf16[32,128], index: 4, kind: input, shape index: {}]
  %s5 = inlined_call_operand.vmem [shape: bf16[128,1024], index: 5, kind: input, shape index: {}]
  %s6 = inlined_call_operand.vmem [shape: bf16[1024,128], index: 6, kind: input, shape index: {}]
  %s7 = inlined_call_operand.vmem [shape: bf16[128,128], index: 7, kind: input, shape index: {}]
  %s8 = inlined_call_operand.vmem [shape: f32[6,1024], index: 8, kind: input, shape index: {}]
  %s9 = inlined_call_operand.vmem [shape: f32[256,128], index: 9, kind: output, shape index: {}]
  %s10 = sld [smem:[#allocation0]]
  $region69: #{vae_clf_forward.1} parent=0
    _
  %s12 = ssub.s32 1, %s10
  %s13 = scalar_select 0, %s12, %s10
  loop: start=0, step=1, limit=4
  $region2: #{vae_clf_forward.1} parent=0 // loop_pre_header
    _
  $region3: #{vae_clf_forward.1} parent=0 // loop_header
    %s15 = sphi 0, %s19
    %p16 = scmp.ge.s32.totalorder %s15, 4
    %s25 = sphi 0, %s27
    %s28 = sphi 0, %s25
    %s29 = sphi 0, %s28
    %s45 = sphi 0, %s29
    %s51 = sphi 0, %s53
    %s54 = sphi 0, %s51
    %s55 = sphi 0, %s54
    %s71 = sphi 0, %s55
    %s75 = sphi 0, %s75
    %s77 = sphi 0, %s75
    %s78 = sphi 0, %s77
    %s92 = sphi 0, %s78
    %s96 = sphi 0, %s96
    %s98 = sphi 0, %s96
    %s99 = sphi 0, %s98
    %s113 = sphi 0, %s99
    %s117 = sphi 0, %s117
    %s119 = sphi 0, %s117
    %s120 = sphi 0, %s119
    %s134 = sphi 0, %s120
    %s138 = sphi 0, %s138
    %s140 = sphi 0, %s138
    %s141 = sphi 0, %s140
    %s155 = sphi 0, %s141
    %s159 = sphi 0, %s159
    %s161 = sphi 0, %s159
    %s162 = sphi 0, %s161
    %s176 = sphi 0, %s162
    %s180 = sphi 0, %s180
    %s182 = sphi 0, %s180
    %s183 = sphi 0, %s182
    %s197 = sphi 0, %s183
    %s201 = sphi 0, %s201
    %s203 = sphi 0, %s201
    %s204 = sphi 0, %s203
    %s218 = sphi 0, %s204
    %s224 = sphi 0, %s226
    %s227 = sphi 0, %s224
    %s228 = sphi 0, %s227
    %s244 = sphi 0, %s228
  $region4: #{vae_clf_forward.1} parent=0 // loop_header_branch
    %18 = sbr.rel (%p16) target = $region8
  $region5: #{vae_clf_forward.1} parent=0 // loop_body
    %s20 = ssub.s32 %s15, 1
    %s21 = ssub.s32 %s15, 2
    %s22 = sadd.s32 %s15, 1
    %s23 = ssub.s32 %s15, %s22
    %p24 = scmp.eq.s32.totalorder %s23, 0
    %s26 = sadd.s32 %s25, 1
    %s27 = scalar_select %p24, %s25, %s26
    %p30 = pneg %p24
    %p31 = scmp.eq.s32.totalorder %s15, 1
    %p32 = por %p30, %p31
    %p33 = scmp.ne.s32.totalorder %s25, %s28
    %p34 = scmp.eq.s32.totalorder %s15, 0
    %p35 = por %p33, %p34
    %p36 = scmp.ne.s32.totalorder %s25, %s28
    %p37 = scmp.eq.s32.totalorder %s20, 1
    %p38 = por %p36, %p37
    %p39 = scmp.ne.s32.totalorder %s28, %s29
    %p40 = scmp.eq.s32.totalorder %s20, 0
    %p41 = por %p39, %p40
    %p42 = scmp.ne.s32.totalorder %s28, %s29
    %p43 = scmp.eq.s32.totalorder %s21, 1
    %p44 = por %p42, %p43
    %p46 = scmp.ne.s32.totalorder %s29, %s45
    %p47 = scmp.eq.s32.totalorder %s21, 0
    %p48 = por %p46, %p47
    %s49 = ssub.s32 %s15, %s22
    %p50 = scmp.eq.s32.totalorder %s49, 0
    %s52 = sadd.s32 %s51, 1
    %s53 = scalar_select %p50, %s51, %s52
    %p56 = pneg %p50
    %p57 = scmp.eq.s32.totalorder %s15, 1
    %p58 = por %p56, %p57
    %p59 = scmp.ne.s32.totalorder %s51, %s54
    %p60 = scmp.eq.s32.totalorder %s15, 0
    %p61 = por %p59, %p60
    %p62 = scmp.ne.s32.totalorder %s51, %s54
    %p63 = scmp.eq.s32.totalorder %s20, 1
    %p64 = por %p62, %p63
    %p65 = scmp.ne.s32.totalorder %s54, %s55
    %p66 = scmp.eq.s32.totalorder %s20, 0
    %p67 = por %p65, %p66
    %p68 = scmp.ne.s32.totalorder %s54, %s55
    %p69 = scmp.eq.s32.totalorder %s21, 1
    %p70 = por %p68, %p69
    %p72 = scmp.ne.s32.totalorder %s55, %s71
    %p73 = scmp.eq.s32.totalorder %s21, 0
    %p74 = por %p72, %p73
    %s76 = sadd.s32 %s75, 1
    %p79 = scmp.eq.s32.totalorder %s15, 1
    %p80 = scmp.ne.s32.totalorder %s75, %s77
    %p81 = scmp.eq.s32.totalorder %s15, 0
    %p82 = por %p80, %p81
    %p83 = scmp.ne.s32.totalorder %s75, %s77
    %p84 = scmp.eq.s32.totalorder %s20, 1
    %p85 = por %p83, %p84
    %p86 = scmp.ne.s32.totalorder %s77, %s78
    %p87 = scmp.eq.s32.totalorder %s20, 0
    %p88 = por %p86, %p87
    %p89 = scmp.ne.s32.totalorder %s77, %s78
    %p90 = scmp.eq.s32.totalorder %s21, 1
    %p91 = por %p89, %p90
    %p93 = scmp.ne.s32.totalorder %s78, %s92
    %p94 = scmp.eq.s32.totalorder %s21, 0
    %p95 = por %p93, %p94
    %s97 = sadd.s32 %s96, 1
    %p100 = scmp.eq.s32.totalorder %s15, 1
    %p101 = scmp.ne.s32.totalorder %s96, %s98
    %p102 = scmp.eq.s32.totalorder %s15, 0
    %p103 = por %p101, %p102
    %p104 = scmp.ne.s32.totalorder %s96, %s98
    %p105 = scmp.eq.s32.totalorder %s20, 1
    %p106 = por %p104, %p105
    %p107 = scmp.ne.s32.totalorder %s98, %s99
    %p108 = scmp.eq.s32.totalorder %s20, 0
    %p109 = por %p107, %p108
    %p110 = scmp.ne.s32.totalorder %s98, %s99
    %p111 = scmp.eq.s32.totalorder %s21, 1
    %p112 = por %p110, %p111
    %p114 = scmp.ne.s32.totalorder %s99, %s113
    %p115 = scmp.eq.s32.totalorder %s21, 0
    %p116 = por %p114, %p115
    %s118 = sadd.s32 %s117, 1
    %p121 = scmp.eq.s32.totalorder %s15, 1
    %p122 = scmp.ne.s32.totalorder %s117, %s119
    %p123 = scmp.eq.s32.totalorder %s15, 0
    %p124 = por %p122, %p123
    %p125 = scmp.ne.s32.totalorder %s117, %s119
    %p126 = scmp.eq.s32.totalorder %s20, 1
    %p127 = por %p125, %p126
    %p128 = scmp.ne.s32.totalorder %s119, %s120
    %p129 = scmp.eq.s32.totalorder %s20, 0
    %p130 = por %p128, %p129
    %p131 = scmp.ne.s32.totalorder %s119, %s120
    %p132 = scmp.eq.s32.totalorder %s21, 1
    %p133 = por %p131, %p132
    %p135 = scmp.ne.s32.totalorder %s120, %s134
    %p136 = scmp.eq.s32.totalorder %s21, 0
    %p137 = por %p135, %p136
    %s139 = sadd.s32 %s138, 1
    %p142 = scmp.eq.s32.totalorder %s15, 1
    %p143 = scmp.ne.s32.totalorder %s138, %s140
    %p144 = scmp.eq.s32.totalorder %s15, 0
    %p145 = por %p143, %p144
    %p146 = scmp.ne.s32.totalorder %s138, %s140
    %p147 = scmp.eq.s32.totalorder %s20, 1
    %p148 = por %p146, %p147
    %p149 = scmp.ne.s32.totalorder %s140, %s141
    %p150 = scmp.eq.s32.totalorder %s20, 0
    %p151 = por %p149, %p150
    %p152 = scmp.ne.s32.totalorder %s140, %s141
    %p153 = scmp.eq.s32.totalorder %s21, 1
    %p154 = por %p152, %p153
    %p156 = scmp.ne.s32.totalorder %s141, %s155
    %p157 = scmp.eq.s32.totalorder %s21, 0
    %p158 = por %p156, %p157
    %s160 = sadd.s32 %s159, 1
    %p163 = scmp.eq.s32.totalorder %s15, 1
    %p164 = scmp.ne.s32.totalorder %s159, %s161
    %p165 = scmp.eq.s32.totalorder %s15, 0
    %p166 = por %p164, %p165
    %p167 = scmp.ne.s32.totalorder %s159, %s161
    %p168 = scmp.eq.s32.totalorder %s20, 1
    %p169 = por %p167, %p168
    %p170 = scmp.ne.s32.totalorder %s161, %s162
    %p171 = scmp.eq.s32.totalorder %s20, 0
    %p172 = por %p170, %p171
    %p173 = scmp.ne.s32.totalorder %s161, %s162
    %p174 = scmp.eq.s32.totalorder %s21, 1
    %p175 = por %p173, %p174
    %p177 = scmp.ne.s32.totalorder %s162, %s176
    %p178 = scmp.eq.s32.totalorder %s21, 0
    %p179 = por %p177, %p178
    %s181 = sadd.s32 %s180, 1
    %p184 = scmp.eq.s32.totalorder %s15, 1
    %p185 = scmp.ne.s32.totalorder %s180, %s182
    %p186 = scmp.eq.s32.totalorder %s15, 0
    %p187 = por %p185, %p186
    %p188 = scmp.ne.s32.totalorder %s180, %s182
    %p189 = scmp.eq.s32.totalorder %s20, 1
    %p190 = por %p188, %p189
    %p191 = scmp.ne.s32.totalorder %s182, %s183
    %p192 = scmp.eq.s32.totalorder %s20, 0
    %p193 = por %p191, %p192
    %p194 = scmp.ne.s32.totalorder %s182, %s183
    %p195 = scmp.eq.s32.totalorder %s21, 1
    %p196 = por %p194, %p195
    %p198 = scmp.ne.s32.totalorder %s183, %s197
    %p199 = scmp.eq.s32.totalorder %s21, 0
    %p200 = por %p198, %p199
    %s202 = sadd.s32 %s201, 1
    %p205 = scmp.eq.s32.totalorder %s15, 1
    %p206 = scmp.ne.s32.totalorder %s201, %s203
    %p207 = scmp.eq.s32.totalorder %s15, 0
    %p208 = por %p206, %p207
    %p209 = scmp.ne.s32.totalorder %s201, %s203
    %p210 = scmp.eq.s32.totalorder %s20, 1
    %p211 = por %p209, %p210
    %p212 = scmp.ne.s32.totalorder %s203, %s204
    %p213 = scmp.eq.s32.totalorder %s20, 0
    %p214 = por %p212, %p213
    %p215 = scmp.ne.s32.totalorder %s203, %s204
    %p216 = scmp.eq.s32.totalorder %s21, 1
    %p217 = por %p215, %p216
    %p219 = scmp.ne.s32.totalorder %s204, %s218
    %p220 = scmp.eq.s32.totalorder %s21, 0
    %p221 = por %p219, %p220
    %s222 = ssub.s32 %s15, %s22
    %p223 = scmp.eq.s32.totalorder %s222, 0
    %s225 = sadd.s32 %s224, 1
    %s226 = scalar_select %p223, %s224, %s225
    %p229 = pneg %p223
    %p230 = scmp.eq.s32.totalorder %s15, 1
    %p231 = por %p229, %p230
    %p232 = scmp.ne.s32.totalorder %s224, %s227
    %p233 = scmp.eq.s32.totalorder %s15, 0
    %p234 = por %p232, %p233
    %p235 = scmp.ne.s32.totalorder %s224, %s227
    %p236 = scmp.eq.s32.totalorder %s20, 1
    %p237 = por %p235, %p236
    %p238 = scmp.ne.s32.totalorder %s227, %s228
    %p239 = scmp.eq.s32.totalorder %s20, 0
    %p240 = por %p238, %p239
    %p241 = scmp.ne.s32.totalorder %s227, %s228
    %p242 = scmp.eq.s32.totalorder %s21, 1
    %p243 = por %p241, %p242
    %p245 = scmp.ne.s32.totalorder %s228, %s244
    %p246 = scmp.eq.s32.totalorder %s21, 0
    %p247 = por %p245, %p246
    %p248 = scmp.le.s32.totalorder 1, %s15
    %p249 = scmp.lt.s32.totalorder %s15, 3
    %p250 = pnand %p248, %p249
    %p251 = pneg %p250
    // Predicated region
    $region9: #{vae_clf_forward.1} parent=5 // pred_check
      _
    $region10: #{vae_clf_forward.1} parent=5 // pred_check_branch
      %253 = sbr.rel (%p250) target = $region12
    $region11: #{vae_clf_forward.1} parent=5 // pred_region
      %s254 = ssub.s32 %s15, 1
      // Predicated region
      $region13: #{vae_clf_forward.1} parent=11 // pred_check
        %p255 = pneg %p88
      $region14: #{vae_clf_forward.1} parent=11 // pred_check_branch
        %257 = sbr.rel (%p255) target = $region16
      $region15: #{vae_clf_forward.1} parent=11 // pred_region
        _
      $region16: #{vae_clf_forward.1} parent=11 // pred_fallthru
        _
      // Predicated region
      $region17: #{vae_clf_forward.1} parent=11 // pred_check
        %p258 = pneg %p109
      $region18: #{vae_clf_forward.1} parent=11 // pred_check_branch
        %260 = sbr.rel (%p258) target = $region20
      $region19: #{vae_clf_forward.1} parent=11 // pred_region
        _
      $region20: #{vae_clf_forward.1} parent=11 // pred_fallthru
        _
      // Predicated region
      $region21: #{vae_clf_forward.1} parent=11 // pred_check
        %p261 = pneg %p130
      $region22: #{vae_clf_forward.1} parent=11 // pred_check_branch
        %263 = sbr.rel (%p261) target = $region24
      $region23: #{vae_clf_forward.1} parent=11 // pred_region
        _
      $region24: #{vae_clf_forward.1} parent=11 // pred_fallthru
        _
      // Predicated region
      $region25: #{vae_clf_forward.1} parent=11 // pred_check
        %p264 = pneg %p151
      $region26: #{vae_clf_forward.1} parent=11 // pred_check_branch
        %266 = sbr.rel (%p264) target = $region28
      $region27: #{vae_clf_forward.1} parent=11 // pred_region
        _
      $region28: #{vae_clf_forward.1} parent=11 // pred_fallthru
        _
      // Predicated region
      $region29: #{vae_clf_forward.1} parent=11 // pred_check
        %p267 = pneg %p172
      $region30: #{vae_clf_forward.1} parent=11 // pred_check_branch
        %269 = sbr.rel (%p267) target = $region32
      $region31: #{vae_clf_forward.1} parent=11 // pred_region
        _
      $region32: #{vae_clf_forward.1} parent=11 // pred_fallthru
        _
      // Predicated region
      $region33: #{vae_clf_forward.1} parent=11 // pred_check
        %p270 = pneg %p193
      $region34: #{vae_clf_forward.1} parent=11 // pred_check_branch
        %272 = sbr.rel (%p270) target = $region36
      $region35: #{vae_clf_forward.1} parent=11 // pred_region
        _
      $region36: #{vae_clf_forward.1} parent=11 // pred_fallthru
        _
      // Predicated region
      $region37: #{vae_clf_forward.1} parent=11 // pred_check
        %p273 = pneg %p214
      $region38: #{vae_clf_forward.1} parent=11 // pred_check_branch
        %275 = sbr.rel (%p273) target = $region40
      $region39: #{vae_clf_forward.1} parent=11 // pred_region
        _
      $region40: #{vae_clf_forward.1} parent=11 // pred_fallthru
        _
    $region12: #{vae_clf_forward.1} parent=5 // pred_fallthru
      _
    %p276 = scmp.lt.s32.totalorder %s15, 2
    // Predicated region
    $region41: #{vae_clf_forward.1} parent=5 // pred_check
      %p277 = pneg %p276
    $region42: #{vae_clf_forward.1} parent=5 // pred_check_branch
      %279 = sbr.rel (%p277) target = $region44
    $region43: #{vae_clf_forward.1} parent=5 // pred_region
      // Predicated region
      $region45: #{vae_clf_forward.1} parent=43 // pred_check
        %p280 = pneg %p35
      $region46: #{vae_clf_forward.1} parent=43 // pred_check_branch
        %282 = sbr.rel (%p280) target = $region48
      $region47: #{vae_clf_forward.1} parent=43 // pred_region
        %s283 = smul.u32 16, %s15
        %p284 = scmp.lt.s32.totalorder %s283, 31
        %s285 = scalar_select %p284, %s283, 31
        %s286 = smul.addr %s285, 8
        %s287 = smul.addr %s286, 4
        %s288 = scalar_lea.vmem %s0, %s287
        %s289 = smul.u32 16, %s15
      $region48: #{vae_clf_forward.1} parent=43 // pred_fallthru
        _
      // Predicated region
      $region49: #{vae_clf_forward.1} parent=43 // pred_check
        %p290 = pneg %p61
      $region50: #{vae_clf_forward.1} parent=43 // pred_check_branch
        %292 = sbr.rel (%p290) target = $region52
      $region51: #{vae_clf_forward.1} parent=43 // pred_region
        %s293 = smul.u32 16, %s15
        %p294 = scmp.lt.s32.totalorder %s293, 31
        %s295 = scalar_select %p294, %s293, 31
        %s296 = smul.addr %s295, 8
        %s297 = scalar_lea.vmem %s1, %s296
        %s298 = smul.u32 16, %s15
      $region52: #{vae_clf_forward.1} parent=43 // pred_fallthru
        _
    $region44: #{vae_clf_forward.1} parent=5 // pred_fallthru
      _
    %p299 = scmp.le.s32.totalorder 1, %s15
    %p300 = scmp.lt.s32.totalorder %s15, 3
    %p301 = pnand %p299, %p300
    %p302 = pneg %p301
    // Predicated region
    $region53: #{vae_clf_forward.1} parent=5 // pred_check
      _
    $region54: #{vae_clf_forward.1} parent=5 // pred_check_branch
      %304 = sbr.rel (%p301) target = $region56
    $region55: #{vae_clf_forward.1} parent=5 // pred_region
      %s305 = ssub.s32 %s15, 1
      %s306 = smul.u32 16, %s20
      %p307 = scmp.lt.s32.totalorder %s306, 31
      %s308 = scalar_select %p307, %s306, 31
      %s309 = smul.addr %s308, 8
      %s310 = smul.addr %s309, 4
      %s311 = scalar_lea.vmem %s0, %s310
      %p312 = pneg %p41
      %p313 = pneg %p38
      %s314 = smul.u32 16, %s20
      %p315 = scmp.lt.s32.totalorder %s314, 31
      %s316 = scalar_select %p315, %s314, 31
      %s317 = smul.addr %s316, 8
      %s318 = scalar_lea.vmem %s1, %s317
      %p319 = pneg %p67
      %p320 = pneg %p64
      %p321 = pneg %p88
      %p322 = pneg %p85
      %p323 = pneg %p109
      %p324 = pneg %p106
      %p325 = pneg %p130
      %p326 = pneg %p127
      %p327 = pneg %p151
      %p328 = pneg %p148
      %p329 = pneg %p172
      %p330 = pneg %p169
      %p331 = pneg %p193
      %p332 = pneg %p190
      %p333 = pneg %p214
      %p334 = pneg %p211
      %p335 = pneg %p240
      %p336 = pneg %p237
      %s337 = smul.u32 16, %s20
      %p338 = scmp.lt.s32.totalorder %s337, 31
      %s339 = scalar_select %p338, %s337, 31
      %s340 = smul.addr %s339, 8
      %s341 = scalar_lea.vmem %s9, %s340
      %s342 = smul.u32 16, %s20
      %p343 = scmp.lt.s32.totalorder %s342, 31
      %s344 = scalar_select %p343, %s342, 31
      %s345 = smul.addr %s344, 8
      %s346 = smul.addr %s345, 4
      %s347 = scalar_lea.vmem %s0, %s346
      %s348 = smul.u32 16, %s20
      %s349 = smul.u32 16, %s20
      %p350 = scmp.lt.s32.totalorder %s349, 31
      %s351 = scalar_select %p350, %s349, 31
      %s352 = smul.addr %s351, 8
      %s353 = scalar_lea.vmem %s1, %s352
      %s354 = smul.u32 16, %s20
      %s355 = smul.u32 16, %s20
      %p356 = scmp.lt.s32.totalorder %s355, 31
      %s357 = scalar_select %p356, %s355, 31
      %s358 = smul.addr %s357, 8
      %s359 = scalar_lea.vmem %s9, %s358
      %s360 = smul.u32 16, %s20
      %v362 = vld [vmem:[%s347] sm:$0xff]
      %v363 = vld [vmem:[%s347 + $0x8] sm:$0xff]
      %v364 = vld [vmem:[%s347 + $0x10] sm:$0xff]
      %v365 = vld [vmem:[%s347 + $0x18] sm:$0xff]
      %v366 = vld [vmem:[%s347 + $0x20] sm:$0xff]
      %v367 = vld [vmem:[%s347 + $0x28] sm:$0xff]
      %v368 = vld [vmem:[%s347 + $0x30] sm:$0xff]
      %v369 = vld [vmem:[%s347 + $0x38] sm:$0xff]
      %v370 = vld [vmem:[%s347 + $0x40] sm:$0xff]
      %v371 = vld [vmem:[%s347 + $0x48] sm:$0xff]
      %v372 = vld [vmem:[%s347 + $0x50] sm:$0xff]
      %v373 = vld [vmem:[%s347 + $0x58] sm:$0xff]
      %v374 = vld [vmem:[%s347 + $0x60] sm:$0xff]
      %v375 = vld [vmem:[%s347 + $0x68] sm:$0xff]
      %v376 = vld [vmem:[%s347 + $0x70] sm:$0xff]
      %v377 = vld [vmem:[%s347 + $0x78] sm:$0xff]
      %v378 = vld [vmem:[%s347 + $0x80] sm:$0xff]
      %v379 = vld [vmem:[%s347 + $0x88] sm:$0xff]
      %v380 = vld [vmem:[%s347 + $0x90] sm:$0xff]
      %v381 = vld [vmem:[%s347 + $0x98] sm:$0xff]
      %v382 = vld [vmem:[%s347 + $0xa0] sm:$0xff]
      %v383 = vld [vmem:[%s347 + $0xa8] sm:$0xff]
      %v384 = vld [vmem:[%s347 + $0xb0] sm:$0xff]
      %v385 = vld [vmem:[%s347 + $0xb8] sm:$0xff]
      %v386 = vld [vmem:[%s347 + $0xc0] sm:$0xff]
      %v387 = vld [vmem:[%s347 + $0xc8] sm:$0xff]
      %v388 = vld [vmem:[%s347 + $0xd0] sm:$0xff]
      %v389 = vld [vmem:[%s347 + $0xd8] sm:$0xff]
      %v390 = vld [vmem:[%s347 + $0xe0] sm:$0xff]
      %v391 = vld [vmem:[%s347 + $0xe8] sm:$0xff]
      %v392 = vld [vmem:[%s347 + $0xf0] sm:$0xff]
      %v393 = vld [vmem:[%s347 + $0xf8] sm:$0xff]
      %v394 = vld [vmem:[%s347 + $0x100] sm:$0xff]
      %v395 = vld [vmem:[%s347 + $0x108] sm:$0xff]
      %v396 = vld [vmem:[%s347 + $0x110] sm:$0xff]
      %v397 = vld [vmem:[%s347 + $0x118] sm:$0xff]
      %v398 = vld [vmem:[%s347 + $0x120] sm:$0xff]
      %v399 = vld [vmem:[%s347 + $0x128] sm:$0xff]
      %v400 = vld [vmem:[%s347 + $0x130] sm:$0xff]
      %v401 = vld [vmem:[%s347 + $0x138] sm:$0xff]
      %v402 = vld [vmem:[%s347 + $0x140] sm:$0xff]
      %v403 = vld [vmem:[%s347 + $0x148] sm:$0xff]
      %v404 = vld [vmem:[%s347 + $0x150] sm:$0xff]
      %v405 = vld [vmem:[%s347 + $0x158] sm:$0xff]
      %v406 = vld [vmem:[%s347 + $0x160] sm:$0xff]
      %v407 = vld [vmem:[%s347 + $0x168] sm:$0xff]
      %v408 = vld [vmem:[%s347 + $0x170] sm:$0xff]
      %v409 = vld [vmem:[%s347 + $0x178] sm:$0xff]
      %v410 = vld [vmem:[%s347 + $0x180] sm:$0xff]
      %v411 = vld [vmem:[%s347 + $0x188] sm:$0xff]
      %v412 = vld [vmem:[%s347 + $0x190] sm:$0xff]
      %v413 = vld [vmem:[%s347 + $0x198] sm:$0xff]
      %v414 = vld [vmem:[%s347 + $0x1a0] sm:$0xff]
      %v415 = vld [vmem:[%s347 + $0x1a8] sm:$0xff]
      %v416 = vld [vmem:[%s347 + $0x1b0] sm:$0xff]
      %v417 = vld [vmem:[%s347 + $0x1b8] sm:$0xff]
      %v418 = vld [vmem:[%s347 + $0x1c0] sm:$0xff]
      %v419 = vld [vmem:[%s347 + $0x1c8] sm:$0xff]
      %v420 = vld [vmem:[%s347 + $0x1d0] sm:$0xff]
      %v421 = vld [vmem:[%s347 + $0x1d8] sm:$0xff]
      %v422 = vld [vmem:[%s347 + $0x1e0] sm:$0xff]
      %v423 = vld [vmem:[%s347 + $0x1e8] sm:$0xff]
      %v424 = vld [vmem:[%s347 + $0x1f0] sm:$0xff]
      %v425 = vld [vmem:[%s347 + $0x1f8] sm:$0xff]
      %v426 = vld [vmem:[%s353] sm:$0xff]
      %v427 = vld [vmem:[%s353 + $0x8] sm:$0xff]
      %v428 = vld [vmem:[%s353 + $0x10] sm:$0xff]
      %v429 = vld [vmem:[%s353 + $0x18] sm:$0xff]
      %v430 = vld [vmem:[%s353 + $0x20] sm:$0xff]
      %v431 = vld [vmem:[%s353 + $0x28] sm:$0xff]
      %v432 = vld [vmem:[%s353 + $0x30] sm:$0xff]
      %v433 = vld [vmem:[%s353 + $0x38] sm:$0xff]
      %v434 = vld [vmem:[%s353 + $0x40] sm:$0xff]
      %v435 = vld [vmem:[%s353 + $0x48] sm:$0xff]
      %v436 = vld [vmem:[%s353 + $0x50] sm:$0xff]
      %v437 = vld [vmem:[%s353 + $0x58] sm:$0xff]
      %v438 = vld [vmem:[%s353 + $0x60] sm:$0xff]
      %v439 = vld [vmem:[%s353 + $0x68] sm:$0xff]
      %v440 = vld [vmem:[%s353 + $0x70] sm:$0xff]
      %v441 = vld [vmem:[%s353 + $0x78] sm:$0xff]
      %v442 = vld [vmem:[%s8] sm:$0x3f]
      %v443 = vld [vmem:[%s8 + $0x8] sm:$0x3f]
      %v444 = vld [vmem:[%s8 + $0x10] sm:$0x3f]
      %v445 = vld [vmem:[%s8 + $0x18] sm:$0x3f]
      %v446 = vld [vmem:[%s8 + $0x20] sm:$0x3f]
      %v447 = vld [vmem:[%s8 + $0x28] sm:$0x3f]
      %v448 = vld [vmem:[%s8 + $0x30] sm:$0x3f]
      %v449 = vld [vmem:[%s8 + $0x38] sm:$0x3f]
      %v450 = vld [vmem:[%s2] sm:$0xf]
      %v451 = vld [vmem:[%s2 + $0x4] sm:$0xf]
      %v452 = vld [vmem:[%s2 + $0x8] sm:$0xf]
      %v453 = vld [vmem:[%s2 + $0xc] sm:$0xf]
      %v454 = vld [vmem:[%s2 + $0x10] sm:$0xf]
      %v455 = vld [vmem:[%s2 + $0x14] sm:$0xf]
      %v456 = vld [vmem:[%s2 + $0x18] sm:$0xf]
      %v457 = vld [vmem:[%s2 + $0x1c] sm:$0xf]
      %v458 = vld [vmem:[%s2 + $0x20] sm:$0xf]
      %v459 = vld [vmem:[%s2 + $0x24] sm:$0xf]
      %v460 = vld [vmem:[%s2 + $0x28] sm:$0xf]
      %v461 = vld [vmem:[%s2 + $0x2c] sm:$0xf]
      %v462 = vld [vmem:[%s2 + $0x30] sm:$0xf]
      %v463 = vld [vmem:[%s2 + $0x34] sm:$0xf]
      %v464 = vld [vmem:[%s2 + $0x38] sm:$0xf]
      %v465 = vld [vmem:[%s2 + $0x3c] sm:$0xf]
      %v466 = vld [vmem:[%s2 + $0x40] sm:$0xf]
      %v467 = vld [vmem:[%s2 + $0x44] sm:$0xf]
      %v468 = vld [vmem:[%s2 + $0x48] sm:$0xf]
      %v469 = vld [vmem:[%s2 + $0x4c] sm:$0xf]
      %v470 = vld [vmem:[%s2 + $0x50] sm:$0xf]
      %v471 = vld [vmem:[%s2 + $0x54] sm:$0xf]
      %v472 = vld [vmem:[%s2 + $0x58] sm:$0xf]
      %v473 = vld [vmem:[%s2 + $0x5c] sm:$0xf]
      %v474 = vld [vmem:[%s2 + $0x60] sm:$0xf]
      %v475 = vld [vmem:[%s2 + $0x64] sm:$0xf]
      %v476 = vld [vmem:[%s2 + $0x68] sm:$0xf]
      %v477 = vld [vmem:[%s2 + $0x6c] sm:$0xf]
      %v478 = vld [vmem:[%s2 + $0x70] sm:$0xf]
      %v479 = vld [vmem:[%s2 + $0x74] sm:$0xf]
      %v480 = vld [vmem:[%s2 + $0x78] sm:$0xf]
      %v481 = vld [vmem:[%s2 + $0x7c] sm:$0xf]
      %v482 = vld [vmem:[%s2 + $0x80] sm:$0xf]
      %v483 = vld [vmem:[%s2 + $0x84] sm:$0xf]
      %v484 = vld [vmem:[%s2 + $0x88] sm:$0xf]
      %v485 = vld [vmem:[%s2 + $0x8c] sm:$0xf]
      %v486 = vld [vmem:[%s2 + $0x90] sm:$0xf]
      %v487 = vld [vmem:[%s2 + $0x94] sm:$0xf]
      %v488 = vld [vmem:[%s2 + $0x98] sm:$0xf]
      %v489 = vld [vmem:[%s2 + $0x9c] sm:$0xf]
      %v490 = vld [vmem:[%s2 + $0xa0] sm:$0xf]
      %v491 = vld [vmem:[%s2 + $0xa4] sm:$0xf]
      %v492 = vld [vmem:[%s2 + $0xa8] sm:$0xf]
      %v493 = vld [vmem:[%s2 + $0xac] sm:$0xf]
      %v494 = vld [vmem:[%s2 + $0xb0] sm:$0xf]
      %v495 = vld [vmem:[%s2 + $0xb4] sm:$0xf]
      %v496 = vld [vmem:[%s2 + $0xb8] sm:$0xf]
      %v497 = vld [vmem:[%s2 + $0xbc] sm:$0xf]
      %v498 = vld [vmem:[%s2 + $0xc0] sm:$0xf]
      %v499 = vld [vmem:[%s2 + $0xc4] sm:$0xf]
      %v500 = vld [vmem:[%s2 + $0xc8] sm:$0xf]
      %v501 = vld [vmem:[%s2 + $0xcc] sm:$0xf]
      %v502 = vld [vmem:[%s2 + $0xd0] sm:$0xf]
      %v503 = vld [vmem:[%s2 + $0xd4] sm:$0xf]
      %v504 = vld [vmem:[%s2 + $0xd8] sm:$0xf]
      %v505 = vld [vmem:[%s2 + $0xdc] sm:$0xf]
      %v506 = vld [vmem:[%s2 + $0xe0] sm:$0xf]
      %v507 = vld [vmem:[%s2 + $0xe4] sm:$0xf]
      %v508 = vld [vmem:[%s2 + $0xe8] sm:$0xf]
      %v509 = vld [vmem:[%s2 + $0xec] sm:$0xf]
      %v510 = vld [vmem:[%s2 + $0xf0] sm:$0xf]
      %v511 = vld [vmem:[%s2 + $0xf4] sm:$0xf]
      %v512 = vld [vmem:[%s2 + $0xf8] sm:$0xf]
      %v513 = vld [vmem:[%s2 + $0xfc] sm:$0xf]
      %v514 = vld [vmem:[%s2 + $0x100] sm:$0xf]
      %v515 = vld [vmem:[%s2 + $0x104] sm:$0xf]
      %v516 = vld [vmem:[%s2 + $0x108] sm:$0xf]
      %v517 = vld [vmem:[%s2 + $0x10c] sm:$0xf]
      %v518 = vld [vmem:[%s2 + $0x110] sm:$0xf]
      %v519 = vld [vmem:[%s2 + $0x114] sm:$0xf]
      %v520 = vld [vmem:[%s2 + $0x118] sm:$0xf]
      %v521 = vld [vmem:[%s2 + $0x11c] sm:$0xf]
      %v522 = vld [vmem:[%s2 + $0x120] sm:$0xf]
      %v523 = vld [vmem:[%s2 + $0x124] sm:$0xf]
      %v524 = vld [vmem:[%s2 + $0x128] sm:$0xf]
      %v525 = vld [vmem:[%s2 + $0x12c] sm:$0xf]
      %v526 = vld [vmem:[%s2 + $0x130] sm:$0xf]
      %v527 = vld [vmem:[%s2 + $0x134] sm:$0xf]
      %v528 = vld [vmem:[%s2 + $0x138] sm:$0xf]
      %v529 = vld [vmem:[%s2 + $0x13c] sm:$0xf]
      %v530 = vld [vmem:[%s2 + $0x140] sm:$0xf]
      %v531 = vld [vmem:[%s2 + $0x144] sm:$0xf]
      %v532 = vld [vmem:[%s2 + $0x148] sm:$0xf]
      %v533 = vld [vmem:[%s2 + $0x14c] sm:$0xf]
      %v534 = vld [vmem:[%s2 + $0x150] sm:$0xf]
      %v535 = vld [vmem:[%s2 + $0x154] sm:$0xf]
      %v536 = vld [vmem:[%s2 + $0x158] sm:$0xf]
      %v537 = vld [vmem:[%s2 + $0x15c] sm:$0xf]
      %v538 = vld [vmem:[%s2 + $0x160] sm:$0xf]
      %v539 = vld [vmem:[%s2 + $0x164] sm:$0xf]
      %v540 = vld [vmem:[%s2 + $0x168] sm:$0xf]
      %v541 = vld [vmem:[%s2 + $0x16c] sm:$0xf]
      %v542 = vld [vmem:[%s2 + $0x170] sm:$0xf]
      %v543 = vld [vmem:[%s2 + $0x174] sm:$0xf]
      %v544 = vld [vmem:[%s2 + $0x178] sm:$0xf]
      %v545 = vld [vmem:[%s2 + $0x17c] sm:$0xf]
      %v546 = vld [vmem:[%s2 + $0x180] sm:$0xf]
      %v547 = vld [vmem:[%s2 + $0x184] sm:$0xf]
      %v548 = vld [vmem:[%s2 + $0x188] sm:$0xf]
      %v549 = vld [vmem:[%s2 + $0x18c] sm:$0xf]
      %v550 = vld [vmem:[%s2 + $0x190] sm:$0xf]
      %v551 = vld [vmem:[%s2 + $0x194] sm:$0xf]
      %v552 = vld [vmem:[%s2 + $0x198] sm:$0xf]
      %v553 = vld [vmem:[%s2 + $0x19c] sm:$0xf]
      %v554 = vld [vmem:[%s2 + $0x1a0] sm:$0xf]
      %v555 = vld [vmem:[%s2 + $0x1a4] sm:$0xf]
      %v556 = vld [vmem:[%s2 + $0x1a8] sm:$0xf]
      %v557 = vld [vmem:[%s2 + $0x1ac] sm:$0xf]
      %v558 = vld [vmem:[%s2 + $0x1b0] sm:$0xf]
      %v559 = vld [vmem:[%s2 + $0x1b4] sm:$0xf]
      %v560 = vld [vmem:[%s2 + $0x1b8] sm:$0xf]
      %v561 = vld [vmem:[%s2 + $0x1bc] sm:$0xf]
      %v562 = vld [vmem:[%s2 + $0x1c0] sm:$0xf]
      %v563 = vld [vmem:[%s2 + $0x1c4] sm:$0xf]
      %v564 = vld [vmem:[%s2 + $0x1c8] sm:$0xf]
      %v565 = vld [vmem:[%s2 + $0x1cc] sm:$0xf]
      %v566 = vld [vmem:[%s2 + $0x1d0] sm:$0xf]
      %v567 = vld [vmem:[%s2 + $0x1d4] sm:$0xf]
      %v568 = vld [vmem:[%s2 + $0x1d8] sm:$0xf]
      %v569 = vld [vmem:[%s2 + $0x1dc] sm:$0xf]
      %v570 = vld [vmem:[%s2 + $0x1e0] sm:$0xf]
      %v571 = vld [vmem:[%s2 + $0x1e4] sm:$0xf]
      %v572 = vld [vmem:[%s2 + $0x1e8] sm:$0xf]
      %v573 = vld [vmem:[%s2 + $0x1ec] sm:$0xf]
      %v574 = vld [vmem:[%s2 + $0x1f0] sm:$0xf]
      %v575 = vld [vmem:[%s2 + $0x1f4] sm:$0xf]
      %v576 = vld [vmem:[%s2 + $0x1f8] sm:$0xf]
      %v577 = vld [vmem:[%s2 + $0x1fc] sm:$0xf]
      %v578 = vlaneseq
      %v579 = vshrl.u32 %v578, 7
      %v580 = vsub.s32 0, %v579
      %v581 = vrot.slane %v442, %v580
      %v646 = vunpack.c.l.b16 %v362
      %v647 = vunpack.c.h.b16 %v362
      %v648 = vunpack.c.l.b16 %v363
      %v649 = vunpack.c.h.b16 %v363
      %v650 = vunpack.c.l.b16 %v364
      %v651 = vunpack.c.h.b16 %v364
      %v652 = vunpack.c.l.b16 %v365
      %v653 = vunpack.c.h.b16 %v365
      %v654 = vunpack.c.l.b16 %v366
      %v655 = vunpack.c.h.b16 %v366
      %v656 = vunpack.c.l.b16 %v367
      %v657 = vunpack.c.h.b16 %v367
      %v658 = vunpack.c.l.b16 %v368
      %v659 = vunpack.c.h.b16 %v368
      %v660 = vunpack.c.l.b16 %v369
      %v661 = vunpack.c.h.b16 %v369
      %v662 = vunpack.c.l.b16 %v370
      %v663 = vunpack.c.h.b16 %v370
      %v664 = vunpack.c.l.b16 %v371
      %v665 = vunpack.c.h.b16 %v371
      %v666 = vunpack.c.l.b16 %v372
      %v667 = vunpack.c.h.b16 %v372
      %v668 = vunpack.c.l.b16 %v373
      %v669 = vunpack.c.h.b16 %v373
      %v670 = vunpack.c.l.b16 %v374
      %v671 = vunpack.c.h.b16 %v374
      %v672 = vunpack.c.l.b16 %v375
      %v673 = vunpack.c.h.b16 %v375
      %v674 = vunpack.c.l.b16 %v376
      %v675 = vunpack.c.h.b16 %v376
      %v676 = vunpack.c.l.b16 %v377
      %v677 = vunpack.c.h.b16 %v377
      %v678 = vunpack.c.l.b16 %v378
      %v679 = vunpack.c.h.b16 %v378
      %v680 = vunpack.c.l.b16 %v379
      %v681 = vunpack.c.h.b16 %v379
      %v682 = vunpack.c.l.b16 %v380
      %v683 = vunpack.c.h.b16 %v380
      %v684 = vunpack.c.l.b16 %v381
      %v685 = vunpack.c.h.b16 %v381
      %v686 = vunpack.c.l.b16 %v382
      %v687 = vunpack.c.h.b16 %v382
      %v688 = vunpack.c.l.b16 %v383
      %v689 = vunpack.c.h.b16 %v383
      %v690 = vunpack.c.l.b16 %v384
      %v691 = vunpack.c.h.b16 %v384
      %v692 = vunpack.c.l.b16 %v385
      %v693 = vunpack.c.h.b16 %v385
      %v694 = vunpack.c.l.b16 %v386
      %v695 = vunpack.c.h.b16 %v386
      %v696 = vunpack.c.l.b16 %v387
      %v697 = vunpack.c.h.b16 %v387
      %v698 = vunpack.c.l.b16 %v388
      %v699 = vunpack.c.h.b16 %v388
      %v700 = vunpack.c.l.b16 %v389
      %v701 = vunpack.c.h.b16 %v389
      %v702 = vunpack.c.l.b16 %v390
      %v703 = vunpack.c.h.b16 %v390
      %v704 = vunpack.c.l.b16 %v391
      %v705 = vunpack.c.h.b16 %v391
      %v706 = vunpack.c.l.b16 %v392
      %v707 = vunpack.c.h.b16 %v392
      %v708 = vunpack.c.l.b16 %v393
      %v709 = vunpack.c.h.b16 %v393
      %v710 = vunpack.c.l.b16 %v394
      %v711 = vunpack.c.h.b16 %v394
      %v712 = vunpack.c.l.b16 %v395
      %v713 = vunpack.c.h.b16 %v395
      %v714 = vunpack.c.l.b16 %v396
      %v715 = vunpack.c.h.b16 %v396
      %v716 = vunpack.c.l.b16 %v397
      %v717 = vunpack.c.h.b16 %v397
      %v718 = vunpack.c.l.b16 %v398
      %v719 = vunpack.c.h.b16 %v398
      %v720 = vunpack.c.l.b16 %v399
      %v721 = vunpack.c.h.b16 %v399
      %v722 = vunpack.c.l.b16 %v400
      %v723 = vunpack.c.h.b16 %v400
      %v724 = vunpack.c.l.b16 %v401
      %v725 = vunpack.c.h.b16 %v401
      %v726 = vunpack.c.l.b16 %v402
      %v727 = vunpack.c.h.b16 %v402
      %v728 = vunpack.c.l.b16 %v403
      %v729 = vunpack.c.h.b16 %v403
      %v730 = vunpack.c.l.b16 %v404
      %v731 = vunpack.c.h.b16 %v404
      %v732 = vunpack.c.l.b16 %v405
      %v733 = vunpack.c.h.b16 %v405
      %v734 = vunpack.c.l.b16 %v406
      %v735 = vunpack.c.h.b16 %v406
      %v736 = vunpack.c.l.b16 %v407
      %v737 = vunpack.c.h.b16 %v407
      %v738 = vunpack.c.l.b16 %v408
      %v739 = vunpack.c.h.b16 %v408
      %v740 = vunpack.c.l.b16 %v409
      %v741 = vunpack.c.h.b16 %v409
      %v742 = vunpack.c.l.b16 %v410
      %v743 = vunpack.c.h.b16 %v410
      %v744 = vunpack.c.l.b16 %v411
      %v745 = vunpack.c.h.b16 %v411
      %v746 = vunpack.c.l.b16 %v412
      %v747 = vunpack.c.h.b16 %v412
      %v748 = vunpack.c.l.b16 %v413
      %v749 = vunpack.c.h.b16 %v413
      %v750 = vunpack.c.l.b16 %v414
      %v751 = vunpack.c.h.b16 %v414
      %v752 = vunpack.c.l.b16 %v415
      %v753 = vunpack.c.h.b16 %v415
      %v754 = vunpack.c.l.b16 %v416
      %v755 = vunpack.c.h.b16 %v416
      %v756 = vunpack.c.l.b16 %v417
      %v757 = vunpack.c.h.b16 %v417
      %v758 = vunpack.c.l.b16 %v418
      %v759 = vunpack.c.h.b16 %v418
      %v760 = vunpack.c.l.b16 %v419
      %v761 = vunpack.c.h.b16 %v419
      %v762 = vunpack.c.l.b16 %v420
      %v763 = vunpack.c.h.b16 %v420
      %v764 = vunpack.c.l.b16 %v421
      %v765 = vunpack.c.h.b16 %v421
      %v766 = vunpack.c.l.b16 %v422
      %v767 = vunpack.c.h.b16 %v422
      %v768 = vunpack.c.l.b16 %v423
      %v769 = vunpack.c.h.b16 %v423
      %v770 = vunpack.c.l.b16 %v424
      %v771 = vunpack.c.h.b16 %v424
      %v772 = vunpack.c.l.b16 %v425
      %v773 = vunpack.c.h.b16 %v425
      %v774 = vpack.c.b16 %v654, %v646
      %v775 = vpack.c.b16 %v655, %v647
      %v776 = vpack.c.b16 %v656, %v648
      %v777 = vpack.c.b16 %v657, %v649
      %v778 = vpack.c.b16 %v658, %v650
      %v779 = vpack.c.b16 %v659, %v651
      %v780 = vpack.c.b16 %v660, %v652
      %v781 = vpack.c.b16 %v661, %v653
      %v782 = vpack.c.b16 %v670, %v662
      %v783 = vpack.c.b16 %v671, %v663
      %v784 = vpack.c.b16 %v672, %v664
      %v785 = vpack.c.b16 %v673, %v665
      %v786 = vpack.c.b16 %v674, %v666
      %v787 = vpack.c.b16 %v675, %v667
      %v788 = vpack.c.b16 %v676, %v668
      %v789 = vpack.c.b16 %v677, %v669
      %v790 = vpack.c.b16 %v686, %v678
      %v791 = vpack.c.b16 %v687, %v679
      %v792 = vpack.c.b16 %v688, %v680
      %v793 = vpack.c.b16 %v689, %v681
      %v794 = vpack.c.b16 %v690, %v682
      %v795 = vpack.c.b16 %v691, %v683
      %v796 = vpack.c.b16 %v692, %v684
      %v797 = vpack.c.b16 %v693, %v685
      %v798 = vpack.c.b16 %v702, %v694
      %v799 = vpack.c.b16 %v703, %v695
      %v800 = vpack.c.b16 %v704, %v696
      %v801 = vpack.c.b16 %v705, %v697
      %v802 = vpack.c.b16 %v706, %v698
      %v803 = vpack.c.b16 %v707, %v699
      %v804 = vpack.c.b16 %v708, %v700
      %v805 = vpack.c.b16 %v709, %v701
      %v806 = vpack.c.b16 %v718, %v710
      %v807 = vpack.c.b16 %v719, %v711
      %v808 = vpack.c.b16 %v720, %v712
      %v809 = vpack.c.b16 %v721, %v713
      %v810 = vpack.c.b16 %v722, %v714
      %v811 = vpack.c.b16 %v723, %v715
      %v812 = vpack.c.b16 %v724, %v716
      %v813 = vpack.c.b16 %v725, %v717
      %v814 = vpack.c.b16 %v734, %v726
      %v815 = vpack.c.b16 %v735, %v727
      %v816 = vpack.c.b16 %v736, %v728
      %v817 = vpack.c.b16 %v737, %v729
      %v818 = vpack.c.b16 %v738, %v730
      %v819 = vpack.c.b16 %v739, %v731
      %v820 = vpack.c.b16 %v740, %v732
      %v821 = vpack.c.b16 %v741, %v733
      %v822 = vpack.c.b16 %v750, %v742
      %v823 = vpack.c.b16 %v751, %v743
      %v824 = vpack.c.b16 %v752, %v744
      %v825 = vpack.c.b16 %v753, %v745
      %v826 = vpack.c.b16 %v754, %v746
      %v827 = vpack.c.b16 %v755, %v747
      %v828 = vpack.c.b16 %v756, %v748
      %v829 = vpack.c.b16 %v757, %v749
      %v830 = vpack.c.b16 %v766, %v758
      %v831 = vpack.c.b16 %v767, %v759
      %v832 = vpack.c.b16 %v768, %v760
      %v833 = vpack.c.b16 %v769, %v761
      %v834 = vpack.c.b16 %v770, %v762
      %v835 = vpack.c.b16 %v771, %v763
      %v836 = vpack.c.b16 %v772, %v764
      %v837 = vpack.c.b16 %v773, %v765
      %v1030 = vunpack.c.l.b16 %v450
      %v1031 = vunpack.c.l.b16 %v451
      %v1032 = vunpack.c.l.b16 %v452
      %v1033 = vunpack.c.l.b16 %v453
      %v1034 = vunpack.c.l.b16 %v454
      %v1035 = vunpack.c.l.b16 %v455
      %v1036 = vunpack.c.l.b16 %v456
      %v1037 = vunpack.c.l.b16 %v457
      %v1038 = vunpack.c.l.b16 %v458
      %v1039 = vunpack.c.l.b16 %v459
      %v1040 = vunpack.c.l.b16 %v460
      %v1041 = vunpack.c.l.b16 %v461
      %v1042 = vunpack.c.l.b16 %v462
      %v1043 = vunpack.c.l.b16 %v463
      %v1044 = vunpack.c.l.b16 %v464
      %v1045 = vunpack.c.l.b16 %v465
      %v1046 = vunpack.c.l.b16 %v466
      %v1047 = vunpack.c.l.b16 %v467
      %v1048 = vunpack.c.l.b16 %v468
      %v1049 = vunpack.c.l.b16 %v469
      %v1050 = vunpack.c.l.b16 %v470
      %v1051 = vunpack.c.l.b16 %v471
      %v1052 = vunpack.c.l.b16 %v472
      %v1053 = vunpack.c.l.b16 %v473
      %v1054 = vunpack.c.l.b16 %v474
      %v1055 = vunpack.c.l.b16 %v475
      %v1056 = vunpack.c.l.b16 %v476
      %v1057 = vunpack.c.l.b16 %v477
      %v1058 = vunpack.c.l.b16 %v478
      %v1059 = vunpack.c.l.b16 %v479
      %v1060 = vunpack.c.l.b16 %v480
      %v1061 = vunpack.c.l.b16 %v481
      %v1062 = vunpack.c.l.b16 %v482
      %v1063 = vunpack.c.l.b16 %v483
      %v1064 = vunpack.c.l.b16 %v484
      %v1065 = vunpack.c.l.b16 %v485
      %v1066 = vunpack.c.l.b16 %v486
      %v1067 = vunpack.c.l.b16 %v487
      %v1068 = vunpack.c.l.b16 %v488
      %v1069 = vunpack.c.l.b16 %v489
      %v1070 = vunpack.c.l.b16 %v490
      %v1071 = vunpack.c.l.b16 %v491
      %v1072 = vunpack.c.l.b16 %v492
      %v1073 = vunpack.c.l.b16 %v493
      %v1074 = vunpack.c.l.b16 %v494
      %v1075 = vunpack.c.l.b16 %v495
      %v1076 = vunpack.c.l.b16 %v496
      %v1077 = vunpack.c.l.b16 %v497
      %v1078 = vunpack.c.l.b16 %v498
      %v1079 = vunpack.c.l.b16 %v499
      %v1080 = vunpack.c.l.b16 %v500
      %v1081 = vunpack.c.l.b16 %v501
      %v1082 = vunpack.c.l.b16 %v502
      %v1083 = vunpack.c.l.b16 %v503
      %v1084 = vunpack.c.l.b16 %v504
      %v1085 = vunpack.c.l.b16 %v505
      %v1086 = vunpack.c.l.b16 %v506
      %v1087 = vunpack.c.l.b16 %v507
      %v1088 = vunpack.c.l.b16 %v508
      %v1089 = vunpack.c.l.b16 %v509
      %v1090 = vunpack.c.l.b16 %v510
      %v1091 = vunpack.c.l.b16 %v511
      %v1092 = vunpack.c.l.b16 %v512
      %v1093 = vunpack.c.l.b16 %v513
      %v1094 = vunpack.c.l.b16 %v514
      %v1095 = vunpack.c.l.b16 %v515
      %v1096 = vunpack.c.l.b16 %v516
      %v1097 = vunpack.c.l.b16 %v517
      %v1098 = vunpack.c.l.b16 %v518
      %v1099 = vunpack.c.l.b16 %v519
      %v1100 = vunpack.c.l.b16 %v520
      %v1101 = vunpack.c.l.b16 %v521
      %v1102 = vunpack.c.l.b16 %v522
      %v1103 = vunpack.c.l.b16 %v523
      %v1104 = vunpack.c.l.b16 %v524
      %v1105 = vunpack.c.l.b16 %v525
      %v1106 = vunpack.c.l.b16 %v526
      %v1107 = vunpack.c.l.b16 %v527
      %v1108 = vunpack.c.l.b16 %v528
      %v1109 = vunpack.c.l.b16 %v529
      %v1110 = vunpack.c.l.b16 %v530
      %v1111 = vunpack.c.l.b16 %v531
      %v1112 = vunpack.c.l.b16 %v532
      %v1113 = vunpack.c.l.b16 %v533
      %v1114 = vunpack.c.l.b16 %v534
      %v1115 = vunpack.c.l.b16 %v535
      %v1116 = vunpack.c.l.b16 %v536
      %v1117 = vunpack.c.l.b16 %v537
      %v1118 = vunpack.c.l.b16 %v538
      %v1119 = vunpack.c.l.b16 %v539
      %v1120 = vunpack.c.l.b16 %v540
      %v1121 = vunpack.c.l.b16 %v541
      %v1122 = vunpack.c.l.b16 %v542
      %v1123 = vunpack.c.l.b16 %v543
      %v1124 = vunpack.c.l.b16 %v544
      %v1125 = vunpack.c.l.b16 %v545
      %v1126 = vunpack.c.l.b16 %v546
      %v1127 = vunpack.c.l.b16 %v547
      %v1128 = vunpack.c.l.b16 %v548
      %v1129 = vunpack.c.l.b16 %v549
      %v1130 = vunpack.c.l.b16 %v550
      %v1131 = vunpack.c.l.b16 %v551
      %v1132 = vunpack.c.l.b16 %v552
      %v1133 = vunpack.c.l.b16 %v553
      %v1134 = vunpack.c.l.b16 %v554
      %v1135 = vunpack.c.l.b16 %v555
      %v1136 = vunpack.c.l.b16 %v556
      %v1137 = vunpack.c.l.b16 %v557
      %v1138 = vunpack.c.l.b16 %v558
      %v1139 = vunpack.c.l.b16 %v559
      %v1140 = vunpack.c.l.b16 %v560
      %v1141 = vunpack.c.l.b16 %v561
      %v1142 = vunpack.c.l.b16 %v562
      %v1143 = vunpack.c.l.b16 %v563
      %v1144 = vunpack.c.l.b16 %v564
      %v1145 = vunpack.c.l.b16 %v565
      %v1146 = vunpack.c.l.b16 %v566
      %v1147 = vunpack.c.l.b16 %v567
      %v1148 = vunpack.c.l.b16 %v568
      %v1149 = vunpack.c.l.b16 %v569
      %v1150 = vunpack.c.l.b16 %v570
      %v1151 = vunpack.c.l.b16 %v571
      %v1152 = vunpack.c.l.b16 %v572
      %v1153 = vunpack.c.l.b16 %v573
      %v1154 = vunpack.c.l.b16 %v574
      %v1155 = vunpack.c.l.b16 %v575
      %v1156 = vunpack.c.l.b16 %v576
      %v1157 = vunpack.c.l.b16 %v577
      %v1158 = vpack.c.b16 %v1031, %v1030
      %v1159 = vpack.c.b16 %v1033, %v1032
      %v1160 = vpack.c.b16 %v1035, %v1034
      %v1161 = vpack.c.b16 %v1037, %v1036
      %v1162 = vpack.c.b16 %v1039, %v1038
      %v1163 = vpack.c.b16 %v1041, %v1040
      %v1164 = vpack.c.b16 %v1043, %v1042
      %v1165 = vpack.c.b16 %v1045, %v1044
      %v1166 = vpack.c.b16 %v1047, %v1046
      %v1167 = vpack.c.b16 %v1049, %v1048
      %v1168 = vpack.c.b16 %v1051, %v1050
      %v1169 = vpack.c.b16 %v1053, %v1052
      %v1170 = vpack.c.b16 %v1055, %v1054
      %v1171 = vpack.c.b16 %v1057, %v1056
      %v1172 = vpack.c.b16 %v1059, %v1058
      %v1173 = vpack.c.b16 %v1061, %v1060
      %v1174 = vpack.c.b16 %v1063, %v1062
      %v1175 = vpack.c.b16 %v1065, %v1064
      %v1176 = vpack.c.b16 %v1067, %v1066
      %v1177 = vpack.c.b16 %v1069, %v1068
      %v1178 = vpack.c.b16 %v1071, %v1070
      %v1179 = vpack.c.b16 %v1073, %v1072
      %v1180 = vpack.c.b16 %v1075, %v1074
      %v1181 = vpack.c.b16 %v1077, %v1076
      %v1182 = vpack.c.b16 %v1079, %v1078
      %v1183 = vpack.c.b16 %v1081, %v1080
      %v1184 = vpack.c.b16 %v1083, %v1082
      %v1185 = vpack.c.b16 %v1085, %v1084
      %v1186 = vpack.c.b16 %v1087, %v1086
      %v1187 = vpack.c.b16 %v1089, %v1088
      %v1188 = vpack.c.b16 %v1091, %v1090
      %v1189 = vpack.c.b16 %v1093, %v1092
      %v1190 = vpack.c.b16 %v1095, %v1094
      %v1191 = vpack.c.b16 %v1097, %v1096
      %v1192 = vpack.c.b16 %v1099, %v1098
      %v1193 = vpack.c.b16 %v1101, %v1100
      %v1194 = vpack.c.b16 %v1103, %v1102
      %v1195 = vpack.c.b16 %v1105, %v1104
      %v1196 = vpack.c.b16 %v1107, %v1106
      %v1197 = vpack.c.b16 %v1109, %v1108
      %v1198 = vpack.c.b16 %v1111, %v1110
      %v1199 = vpack.c.b16 %v1113, %v1112
      %v1200 = vpack.c.b16 %v1115, %v1114
      %v1201 = vpack.c.b16 %v1117, %v1116
      %v1202 = vpack.c.b16 %v1119, %v1118
      %v1203 = vpack.c.b16 %v1121, %v1120
      %v1204 = vpack.c.b16 %v1123, %v1122
      %v1205 = vpack.c.b16 %v1125, %v1124
      %v1206 = vpack.c.b16 %v1127, %v1126
      %v1207 = vpack.c.b16 %v1129, %v1128
      %v1208 = vpack.c.b16 %v1131, %v1130
      %v1209 = vpack.c.b16 %v1133, %v1132
      %v1210 = vpack.c.b16 %v1135, %v1134
      %v1211 = vpack.c.b16 %v1137, %v1136
      %v1212 = vpack.c.b16 %v1139, %v1138
      %v1213 = vpack.c.b16 %v1141, %v1140
      %v1214 = vpack.c.b16 %v1143, %v1142
      %v1215 = vpack.c.b16 %v1145, %v1144
      %v1216 = vpack.c.b16 %v1147, %v1146
      %v1217 = vpack.c.b16 %v1149, %v1148
      %v1218 = vpack.c.b16 %v1151, %v1150
      %v1219 = vpack.c.b16 %v1153, %v1152
      %v1220 = vpack.c.b16 %v1155, %v1154
      %v1221 = vpack.c.b16 %v1157, %v1156
      %1286 = vmatprep.subr.bf16.mxu0 0
      %1287 = vmatpush1.bf16.msra.mxu0 %v1165
      %1288 = vmatprep.subr.bf16.mxu0 0
      %1289 = vmatpush1.bf16.msra.mxu0 %v1164
      %1290 = vmatprep.subr.bf16.mxu0 0
      %1291 = vmatpush1.bf16.msra.mxu0 %v1163
      %1292 = vmatprep.subr.bf16.mxu0 0
      %1293 = vmatpush1.bf16.msra.mxu0 %v1162
      %1294 = vmatprep.subr.bf16.mxu0 0
      %1295 = vmatpush1.bf16.msra.mxu0 %v1161
      %1296 = vmatprep.subr.bf16.mxu0 0
      %1297 = vmatpush1.bf16.msra.mxu0 %v1160
      %1298 = vmatprep.subr.bf16.mxu0 0
      %1299 = vmatpush1.bf16.msra.mxu0 %v1159
      %1300 = vmatprep.subr.bf16.mxu0 0
      %1301 = vmatpush1.bf16.msra.mxu0 %v1158
      %1302 = vmatprep.subr.bf16.mxu0 0
      %1303 = vmatpush2.bf16.msra.mxu0 %v1173
      %1304 = vmatprep.subr.bf16.mxu0 0
      %1305 = vmatpush2.bf16.msra.mxu0 %v1172
      %1306 = vmatprep.subr.bf16.mxu0 0
      %1307 = vmatpush2.bf16.msra.mxu0 %v1171
      %1308 = vmatprep.subr.bf16.mxu0 0
      %1309 = vmatpush2.bf16.msra.mxu0 %v1170
      %1310 = vmatprep.subr.bf16.mxu0 0
      %1311 = vmatpush2.bf16.msra.mxu0 %v1169
      %1312 = vmatprep.subr.bf16.mxu0 0
      %1313 = vmatpush2.bf16.msra.mxu0 %v1168
      %1314 = vmatprep.subr.bf16.mxu0 0
      %1315 = vmatpush2.bf16.msra.mxu0 %v1167
      %1316 = vmatprep.subr.bf16.mxu0 0
      %1317 = vmatpush2.bf16.msra.mxu0 %v1166
      %1318 = vmatprep.mubr.bf16.mxu0 %v775
      %1319 = vmatmul.mubr.bf16.gmra.mxu0 %v774
      %v1320 = vpop.f32.mrf.mxu0
      %v1321 = vadd.f32 %v581, %v1320
      %v1322 = vpop.f32.mrf.mxu0
      %v1323 = vpop.f32.mrf.mxu0
      %v1324 = vadd.f32 %v581, %v1323
      %v1325 = vpop.f32.mrf.mxu0
      %1326 = vmatprep.mubr.bf16.mxu0 %v783
      %1327 = vmatmul.mubr.bf16.gmra.mxu0 %v782
      %v1328 = vpop.f32.mrf.mxu0
      %v1329 = vadd.f32 %v581, %v1328
      %v1330 = vpop.f32.mrf.mxu0
      %v1331 = vpop.f32.mrf.mxu0
      %v1332 = vadd.f32 %v581, %v1331
      %v1333 = vpop.f32.mrf.mxu0
      %1334 = vmatprep.mubr.bf16.mxu0 %v791
      %1335 = vmatmul.mubr.bf16.gmra.mxu0 %v790
      %v1336 = vpop.f32.mrf.mxu0
      %v1337 = vadd.f32 %v581, %v1336
      %v1338 = vpop.f32.mrf.mxu0
      %v1339 = vpop.f32.mrf.mxu0
      %v1340 = vadd.f32 %v581, %v1339
      %v1341 = vpop.f32.mrf.mxu0
      %1342 = vmatprep.mubr.bf16.mxu0 %v799
      %1343 = vmatmul.mubr.bf16.gmra.mxu0 %v798
      %v1344 = vpop.f32.mrf.mxu0
      %v1345 = vadd.f32 %v581, %v1344
      %v1346 = vpop.f32.mrf.mxu0
      %v1347 = vpop.f32.mrf.mxu0
      %v1348 = vadd.f32 %v581, %v1347
      %v1349 = vpop.f32.mrf.mxu0
      %1350 = vmatprep.mubr.bf16.mxu0 %v807
      %1351 = vmatmul.mubr.bf16.gmra.mxu0 %v806
      %v1352 = vpop.f32.mrf.mxu0
      %v1353 = vadd.f32 %v581, %v1352
      %v1354 = vpop.f32.mrf.mxu0
      %v1355 = vpop.f32.mrf.mxu0
      %v1356 = vadd.f32 %v581, %v1355
      %v1357 = vpop.f32.mrf.mxu0
      %1358 = vmatprep.mubr.bf16.mxu0 %v815
      %1359 = vmatmul.mubr.bf16.gmra.mxu0 %v814
      %v1360 = vpop.f32.mrf.mxu0
      %v1361 = vadd.f32 %v581, %v1360
      %v1362 = vpop.f32.mrf.mxu0
      %v1363 = vpop.f32.mrf.mxu0
      %v1364 = vadd.f32 %v581, %v1363
      %v1365 = vpop.f32.mrf.mxu0
      %1366 = vmatprep.mubr.bf16.mxu0 %v823
      %1367 = vmatmul.mubr.bf16.gmra.mxu0 %v822
      %v1368 = vpop.f32.mrf.mxu0
      %v1369 = vadd.f32 %v581, %v1368
      %v1370 = vpop.f32.mrf.mxu0
      %v1371 = vpop.f32.mrf.mxu0
      %v1372 = vadd.f32 %v581, %v1371
      %v1373 = vpop.f32.mrf.mxu0
      %1374 = vmatprep.mubr.bf16.mxu0 %v831
      %1375 = vmatmul.mubr.bf16.gmra.mxu0 %v830
      %v1376 = vpop.f32.mrf.mxu0
      %v1377 = vadd.f32 %v581, %v1376
      %v1378 = vpop.f32.mrf.mxu0
      %v1379 = vpop.f32.mrf.mxu0
      %v1380 = vadd.f32 %v581, %v1379
      %v1381 = vpop.f32.mrf.mxu0
      %1382 = vdwg.mxu0
      %1383 = vmatprep.subr.bf16.mxu0 0
      %1384 = vmatpush1.bf16.msra.mxu0 %v1181
      %1385 = vmatprep.subr.bf16.mxu0 0
      %1386 = vmatpush1.bf16.msra.mxu0 %v1180
      %1387 = vmatprep.subr.bf16.mxu0 0
      %1388 = vmatpush1.bf16.msra.mxu0 %v1179
      %1389 = vmatprep.subr.bf16.mxu0 0
      %1390 = vmatpush1.bf16.msra.mxu0 %v1178
      %1391 = vmatprep.subr.bf16.mxu0 0
      %1392 = vmatpush1.bf16.msra.mxu0 %v1177
      %1393 = vmatprep.subr.bf16.mxu0 0
      %1394 = vmatpush1.bf16.msra.mxu0 %v1176
      %1395 = vmatprep.subr.bf16.mxu0 0
      %1396 = vmatpush1.bf16.msra.mxu0 %v1175
      %1397 = vmatprep.subr.bf16.mxu0 0
      %1398 = vmatpush1.bf16.msra.mxu0 %v1174
      %1399 = vmatprep.subr.bf16.mxu0 0
      %1400 = vmatpush2.bf16.msra.mxu0 %v1189
      %1401 = vmatprep.subr.bf16.mxu0 0
      %1402 = vmatpush2.bf16.msra.mxu0 %v1188
      %1403 = vmatprep.subr.bf16.mxu0 0
      %1404 = vmatpush2.bf16.msra.mxu0 %v1187
      %1405 = vmatprep.subr.bf16.mxu0 0
      %1406 = vmatpush2.bf16.msra.mxu0 %v1186
      %1407 = vmatprep.subr.bf16.mxu0 0
      %1408 = vmatpush2.bf16.msra.mxu0 %v1185
      %1409 = vmatprep.subr.bf16.mxu0 0
      %1410 = vmatpush2.bf16.msra.mxu0 %v1184
      %1411 = vmatprep.subr.bf16.mxu0 0
      %1412 = vmatpush2.bf16.msra.mxu0 %v1183
      %1413 = vmatprep.subr.bf16.mxu0 0
      %1414 = vmatpush2.bf16.msra.mxu0 %v1182
      %1415 = vmatprep.mubr.bf16.mxu0 %v777
      %1416 = vmatmul.mubr.bf16.gmra.mxu0 %v776
      %v1417 = vpop.f32.mrf.mxu0
      %v1418 = vadd.f32 %v1321, %v1417
      %v1419 = vpop.f32.mrf.mxu0
      %v1420 = vpop.f32.mrf.mxu0
      %v1421 = vadd.f32 %v1324, %v1420
      %v1422 = vpop.f32.mrf.mxu0
      %1423 = vmatprep.mubr.bf16.mxu0 %v785
      %1424 = vmatmul.mubr.bf16.gmra.mxu0 %v784
      %v1425 = vpop.f32.mrf.mxu0
      %v1426 = vadd.f32 %v1329, %v1425
      %v1427 = vpop.f32.mrf.mxu0
      %v1428 = vpop.f32.mrf.mxu0
      %v1429 = vadd.f32 %v1332, %v1428
      %v1430 = vpop.f32.mrf.mxu0
      %1431 = vmatprep.mubr.bf16.mxu0 %v793
      %1432 = vmatmul.mubr.bf16.gmra.mxu0 %v792
      %v1433 = vpop.f32.mrf.mxu0
      %v1434 = vadd.f32 %v1337, %v1433
      %v1435 = vpop.f32.mrf.mxu0
      %v1436 = vpop.f32.mrf.mxu0
      %v1437 = vadd.f32 %v1340, %v1436
      %v1438 = vpop.f32.mrf.mxu0
      %1439 = vmatprep.mubr.bf16.mxu0 %v801
      %1440 = vmatmul.mubr.bf16.gmra.mxu0 %v800
      %v1441 = vpop.f32.mrf.mxu0
      %v1442 = vadd.f32 %v1345, %v1441
      %v1443 = vpop.f32.mrf.mxu0
      %v1444 = vpop.f32.mrf.mxu0
      %v1445 = vadd.f32 %v1348, %v1444
      %v1446 = vpop.f32.mrf.mxu0
      %1447 = vmatprep.mubr.bf16.mxu0 %v809
      %1448 = vmatmul.mubr.bf16.gmra.mxu0 %v808
      %v1449 = vpop.f32.mrf.mxu0
      %v1450 = vadd.f32 %v1353, %v1449
      %v1451 = vpop.f32.mrf.mxu0
      %v1452 = vpop.f32.mrf.mxu0
      %v1453 = vadd.f32 %v1356, %v1452
      %v1454 = vpop.f32.mrf.mxu0
      %1455 = vmatprep.mubr.bf16.mxu0 %v817
      %1456 = vmatmul.mubr.bf16.gmra.mxu0 %v816
      %v1457 = vpop.f32.mrf.mxu0
      %v1458 = vadd.f32 %v1361, %v1457
      %v1459 = vpop.f32.mrf.mxu0
      %v1460 = vpop.f32.mrf.mxu0
      %v1461 = vadd.f32 %v1364, %v1460
      %v1462 = vpop.f32.mrf.mxu0
      %1463 = vmatprep.mubr.bf16.mxu0 %v825
      %1464 = vmatmul.mubr.bf16.gmra.mxu0 %v824
      %v1465 = vpop.f32.mrf.mxu0
      %v1466 = vadd.f32 %v1369, %v1465
      %v1467 = vpop.f32.mrf.mxu0
      %v1468 = vpop.f32.mrf.mxu0
      %v1469 = vadd.f32 %v1372, %v1468
      %v1470 = vpop.f32.mrf.mxu0
      %1471 = vmatprep.mubr.bf16.mxu0 %v833
      %1472 = vmatmul.mubr.bf16.gmra.mxu0 %v832
      %v1473 = vpop.f32.mrf.mxu0
      %v1474 = vadd.f32 %v1377, %v1473
      %v1475 = vpop.f32.mrf.mxu0
      %v1476 = vpop.f32.mrf.mxu0
      %v1477 = vadd.f32 %v1380, %v1476
      %v1478 = vpop.f32.mrf.mxu0
      %1479 = vdwg.mxu0
      %1480 = vmatprep.subr.bf16.mxu0 0
      %1481 = vmatpush1.bf16.msra.mxu0 %v1197
      %1482 = vmatprep.subr.bf16.mxu0 0
      %1483 = vmatpush1.bf16.msra.mxu0 %v1196
      %1484 = vmatprep.subr.bf16.mxu0 0
      %1485 = vmatpush1.bf16.msra.mxu0 %v1195
      %1486 = vmatprep.subr.bf16.mxu0 0
      %1487 = vmatpush1.bf16.msra.mxu0 %v1194
      %1488 = vmatprep.subr.bf16.mxu0 0
      %1489 = vmatpush1.bf16.msra.mxu0 %v1193
      %1490 = vmatprep.subr.bf16.mxu0 0
      %1491 = vmatpush1.bf16.msra.mxu0 %v1192
      %1492 = vmatprep.subr.bf16.mxu0 0
      %1493 = vmatpush1.bf16.msra.mxu0 %v1191
      %1494 = vmatprep.subr.bf16.mxu0 0
      %1495 = vmatpush1.bf16.msra.mxu0 %v1190
      %1496 = vmatprep.subr.bf16.mxu0 0
      %1497 = vmatpush2.bf16.msra.mxu0 %v1205
      %1498 = vmatprep.subr.bf16.mxu0 0
      %1499 = vmatpush2.bf16.msra.mxu0 %v1204
      %1500 = vmatprep.subr.bf16.mxu0 0
      %1501 = vmatpush2.bf16.msra.mxu0 %v1203
      %1502 = vmatprep.subr.bf16.mxu0 0
      %1503 = vmatpush2.bf16.msra.mxu0 %v1202
      %1504 = vmatprep.subr.bf16.mxu0 0
      %1505 = vmatpush2.bf16.msra.mxu0 %v1201
      %1506 = vmatprep.subr.bf16.mxu0 0
      %1507 = vmatpush2.bf16.msra.mxu0 %v1200
      %1508 = vmatprep.subr.bf16.mxu0 0
      %1509 = vmatpush2.bf16.msra.mxu0 %v1199
      %1510 = vmatprep.subr.bf16.mxu0 0
      %1511 = vmatpush2.bf16.msra.mxu0 %v1198
      %1512 = vmatprep.mubr.bf16.mxu0 %v779
      %1513 = vmatmul.mubr.bf16.gmra.mxu0 %v778
      %v1514 = vpop.f32.mrf.mxu0
      %v1515 = vadd.f32 %v1418, %v1514
      %v1516 = vpop.f32.mrf.mxu0
      %v1517 = vpop.f32.mrf.mxu0
      %v1518 = vadd.f32 %v1421, %v1517
      %v1519 = vpop.f32.mrf.mxu0
      %1520 = vmatprep.mubr.bf16.mxu0 %v787
      %1521 = vmatmul.mubr.bf16.gmra.mxu0 %v786
      %v1522 = vpop.f32.mrf.mxu0
      %v1523 = vadd.f32 %v1426, %v1522
      %v1524 = vpop.f32.mrf.mxu0
      %v1525 = vpop.f32.mrf.mxu0
      %v1526 = vadd.f32 %v1429, %v1525
      %v1527 = vpop.f32.mrf.mxu0
      %1528 = vmatprep.mubr.bf16.mxu0 %v795
      %1529 = vmatmul.mubr.bf16.gmra.mxu0 %v794
      %v1530 = vpop.f32.mrf.mxu0
      %v1531 = vadd.f32 %v1434, %v1530
      %v1532 = vpop.f32.mrf.mxu0
      %v1533 = vpop.f32.mrf.mxu0
      %v1534 = vadd.f32 %v1437, %v1533
      %v1535 = vpop.f32.mrf.mxu0
      %1536 = vmatprep.mubr.bf16.mxu0 %v803
      %1537 = vmatmul.mubr.bf16.gmra.mxu0 %v802
      %v1538 = vpop.f32.mrf.mxu0
      %v1539 = vadd.f32 %v1442, %v1538
      %v1540 = vpop.f32.mrf.mxu0
      %v1541 = vpop.f32.mrf.mxu0
      %v1542 = vadd.f32 %v1445, %v1541
      %v1543 = vpop.f32.mrf.mxu0
      %1544 = vmatprep.mubr.bf16.mxu0 %v811
      %1545 = vmatmul.mubr.bf16.gmra.mxu0 %v810
      %v1546 = vpop.f32.mrf.mxu0
      %v1547 = vadd.f32 %v1450, %v1546
      %v1548 = vpop.f32.mrf.mxu0
      %v1549 = vpop.f32.mrf.mxu0
      %v1550 = vadd.f32 %v1453, %v1549
      %v1551 = vpop.f32.mrf.mxu0
      %1552 = vmatprep.mubr.bf16.mxu0 %v819
      %1553 = vmatmul.mubr.bf16.gmra.mxu0 %v818
      %v1554 = vpop.f32.mrf.mxu0
      %v1555 = vadd.f32 %v1458, %v1554
      %v1556 = vpop.f32.mrf.mxu0
      %v1557 = vpop.f32.mrf.mxu0
      %v1558 = vadd.f32 %v1461, %v1557
      %v1559 = vpop.f32.mrf.mxu0
      %1560 = vmatprep.mubr.bf16.mxu0 %v827
      %1561 = vmatmul.mubr.bf16.gmra.mxu0 %v826
      %v1562 = vpop.f32.mrf.mxu0
      %v1563 = vadd.f32 %v1466, %v1562
      %v1564 = vpop.f32.mrf.mxu0
      %v1565 = vpop.f32.mrf.mxu0
      %v1566 = vadd.f32 %v1469, %v1565
      %v1567 = vpop.f32.mrf.mxu0
      %1568 = vmatprep.mubr.bf16.mxu0 %v835
      %1569 = vmatmul.mubr.bf16.gmra.mxu0 %v834
      %v1570 = vpop.f32.mrf.mxu0
      %v1571 = vadd.f32 %v1474, %v1570
      %v1572 = vpop.f32.mrf.mxu0
      %v1573 = vpop.f32.mrf.mxu0
      %v1574 = vadd.f32 %v1477, %v1573
      %v1575 = vpop.f32.mrf.mxu0
      %1576 = vdwg.mxu0
      %1577 = vmatprep.subr.bf16.mxu0 0
      %1578 = vmatpush1.bf16.msra.mxu0 %v1213
      %1579 = vmatprep.subr.bf16.mxu0 0
      %1580 = vmatpush1.bf16.msra.mxu0 %v1212
      %1581 = vmatprep.subr.bf16.mxu0 0
      %1582 = vmatpush1.bf16.msra.mxu0 %v1211
      %1583 = vmatprep.subr.bf16.mxu0 0
      %1584 = vmatpush1.bf16.msra.mxu0 %v1210
      %1585 = vmatprep.subr.bf16.mxu0 0
      %1586 = vmatpush1.bf16.msra.mxu0 %v1209
      %1587 = vmatprep.subr.bf16.mxu0 0
      %1588 = vmatpush1.bf16.msra.mxu0 %v1208
      %1589 = vmatprep.subr.bf16.mxu0 0
      %1590 = vmatpush1.bf16.msra.mxu0 %v1207
      %1591 = vmatprep.subr.bf16.mxu0 0
      %1592 = vmatpush1.bf16.msra.mxu0 %v1206
      %1593 = vmatprep.subr.bf16.mxu0 0
      %1594 = vmatpush2.bf16.msra.mxu0 %v1221
      %1595 = vmatprep.subr.bf16.mxu0 0
      %1596 = vmatpush2.bf16.msra.mxu0 %v1220
      %1597 = vmatprep.subr.bf16.mxu0 0
      %1598 = vmatpush2.bf16.msra.mxu0 %v1219
      %1599 = vmatprep.subr.bf16.mxu0 0
      %1600 = vmatpush2.bf16.msra.mxu0 %v1218
      %1601 = vmatprep.subr.bf16.mxu0 0
      %1602 = vmatpush2.bf16.msra.mxu0 %v1217
      %1603 = vmatprep.subr.bf16.mxu0 0
      %1604 = vmatpush2.bf16.msra.mxu0 %v1216
      %1605 = vmatprep.subr.bf16.mxu0 0
      %1606 = vmatpush2.bf16.msra.mxu0 %v1215
      %1607 = vmatprep.subr.bf16.mxu0 0
      %1608 = vmatpush2.bf16.msra.mxu0 %v1214
      %1609 = vmatprep.mubr.bf16.mxu0 %v781
      %1610 = vmatmul.mubr.bf16.gmra.mxu0 %v780
      %v1611 = vpop.f32.mrf.mxu0
      %v1612 = vadd.f32 %v1515, %v1611
      %v1613 = vpop.f32.mrf.mxu0
      %v1614 = vpop.f32.mrf.mxu0
      %v1615 = vadd.f32 %v1518, %v1614
      %v1616 = vpop.f32.mrf.mxu0
      %1617 = vmatprep.mubr.bf16.mxu0 %v789
      %1618 = vmatmul.mubr.bf16.gmra.mxu0 %v788
      %v1619 = vpop.f32.mrf.mxu0
      %v1620 = vadd.f32 %v1523, %v1619
      %v1621 = vpop.f32.mrf.mxu0
      %v1622 = vpop.f32.mrf.mxu0
      %v1623 = vadd.f32 %v1526, %v1622
      %v1624 = vpop.f32.mrf.mxu0
      %1625 = vmatprep.mubr.bf16.mxu0 %v797
      %1626 = vmatmul.mubr.bf16.gmra.mxu0 %v796
      %v1627 = vpop.f32.mrf.mxu0
      %v1628 = vadd.f32 %v1531, %v1627
      %v1629 = vpop.f32.mrf.mxu0
      %v1630 = vpop.f32.mrf.mxu0
      %v1631 = vadd.f32 %v1534, %v1630
      %v1632 = vpop.f32.mrf.mxu0
      %1633 = vmatprep.mubr.bf16.mxu0 %v805
      %1634 = vmatmul.mubr.bf16.gmra.mxu0 %v804
      %v1635 = vpop.f32.mrf.mxu0
      %v1636 = vadd.f32 %v1539, %v1635
      %v1637 = vpop.f32.mrf.mxu0
      %v1638 = vpop.f32.mrf.mxu0
      %v1639 = vadd.f32 %v1542, %v1638
      %v1640 = vpop.f32.mrf.mxu0
      %1641 = vmatprep.mubr.bf16.mxu0 %v813
      %1642 = vmatmul.mubr.bf16.gmra.mxu0 %v812
      %v1643 = vpop.f32.mrf.mxu0
      %v1644 = vadd.f32 %v1547, %v1643
      %v1645 = vpop.f32.mrf.mxu0
      %v1646 = vpop.f32.mrf.mxu0
      %v1647 = vadd.f32 %v1550, %v1646
      %v1648 = vpop.f32.mrf.mxu0
      %1649 = vmatprep.mubr.bf16.mxu0 %v821
      %1650 = vmatmul.mubr.bf16.gmra.mxu0 %v820
      %v1651 = vpop.f32.mrf.mxu0
      %v1652 = vadd.f32 %v1555, %v1651
      %v1653 = vpop.f32.mrf.mxu0
      %v1654 = vpop.f32.mrf.mxu0
      %v1655 = vadd.f32 %v1558, %v1654
      %v1656 = vpop.f32.mrf.mxu0
      %1657 = vmatprep.mubr.bf16.mxu0 %v829
      %1658 = vmatmul.mubr.bf16.gmra.mxu0 %v828
      %v1659 = vpop.f32.mrf.mxu0
      %v1660 = vadd.f32 %v1563, %v1659
      %v1661 = vpop.f32.mrf.mxu0
      %v1662 = vpop.f32.mrf.mxu0
      %v1663 = vadd.f32 %v1566, %v1662
      %v1664 = vpop.f32.mrf.mxu0
      %1665 = vmatprep.mubr.bf16.mxu0 %v837
      %1666 = vmatmul.mubr.bf16.gmra.mxu0 %v836
      %v1667 = vpop.f32.mrf.mxu0
      %v1668 = vadd.f32 %v1571, %v1667
      %v1669 = vpop.f32.mrf.mxu0
      %v1670 = vpop.f32.mrf.mxu0
      %v1671 = vadd.f32 %v1574, %v1670
      %v1672 = vpop.f32.mrf.mxu0
      %1673 = vdwg.mxu0
      %v1674 = vmax.f32 %v1612, 0.0
      %v1675 = vmax.f32 %v1615, 0.0
      %v1676 = vmax.f32 %v1620, 0.0
      %v1677 = vmax.f32 %v1623, 0.0
      %v1678 = vmax.f32 %v1628, 0.0
      %v1679 = vmax.f32 %v1631, 0.0
      %v1680 = vmax.f32 %v1636, 0.0
      %v1681 = vmax.f32 %v1639, 0.0
      %v1682 = vmax.f32 %v1644, 0.0
      %v1683 = vmax.f32 %v1647, 0.0
      %v1684 = vmax.f32 %v1652, 0.0
      %v1685 = vmax.f32 %v1655, 0.0
      %v1686 = vmax.f32 %v1660, 0.0
      %v1687 = vmax.f32 %v1663, 0.0
      %v1688 = vmax.f32 %v1668, 0.0
      %v1689 = vmax.f32 %v1671, 0.0
      %v1690 = vpack.c.bf16 %v1675, %v1674
      %v1691 = vpack.c.bf16 %v1677, %v1676
      %v1692 = vpack.c.bf16 %v1679, %v1678
      %v1693 = vpack.c.bf16 %v1681, %v1680
      %v1694 = vpack.c.bf16 %v1683, %v1682
      %v1695 = vpack.c.bf16 %v1685, %v1684
      %v1696 = vpack.c.bf16 %v1687, %v1686
      %v1697 = vpack.c.bf16 %v1689, %v1688
      %v1698 = vld [vmem:[%s3] sm:$0xf]
      %v1699 = vld [vmem:[%s3 + $0x4] sm:$0xf]
      %v1700 = vld [vmem:[%s3 + $0x8] sm:$0xf]
      %v1701 = vld [vmem:[%s3 + $0xc] sm:$0xf]
      %v1702 = vld [vmem:[%s3 + $0x10] sm:$0xf]
      %v1703 = vld [vmem:[%s3 + $0x14] sm:$0xf]
      %v1704 = vld [vmem:[%s3 + $0x18] sm:$0xf]
      %v1705 = vld [vmem:[%s3 + $0x1c] sm:$0xf]
      %v1706 = vld [vmem:[%s3 + $0x20] sm:$0xf]
      %v1707 = vld [vmem:[%s3 + $0x24] sm:$0xf]
      %v1708 = vld [vmem:[%s3 + $0x28] sm:$0xf]
      %v1709 = vld [vmem:[%s3 + $0x2c] sm:$0xf]
      %v1710 = vld [vmem:[%s3 + $0x30] sm:$0xf]
      %v1711 = vld [vmem:[%s3 + $0x34] sm:$0xf]
      %v1712 = vld [vmem:[%s3 + $0x38] sm:$0xf]
      %v1713 = vld [vmem:[%s3 + $0x3c] sm:$0xf]
      %v1714 = vlaneseq
      %v1715 = vshrl.u32 %v1714, 7
      %v1716 = vsub.s32 1, %v1715
      %v1717 = vrot.slane %v442, %v1716
      %v1734 = vunpack.c.l.b16 %v1698
      %v1735 = vunpack.c.l.b16 %v1699
      %v1736 = vunpack.c.l.b16 %v1700
      %v1737 = vunpack.c.l.b16 %v1701
      %v1738 = vunpack.c.l.b16 %v1702
      %v1739 = vunpack.c.l.b16 %v1703
      %v1740 = vunpack.c.l.b16 %v1704
      %v1741 = vunpack.c.l.b16 %v1705
      %v1742 = vunpack.c.l.b16 %v1706
      %v1743 = vunpack.c.l.b16 %v1707
      %v1744 = vunpack.c.l.b16 %v1708
      %v1745 = vunpack.c.l.b16 %v1709
      %v1746 = vunpack.c.l.b16 %v1710
      %v1747 = vunpack.c.l.b16 %v1711
      %v1748 = vunpack.c.l.b16 %v1712
      %v1749 = vunpack.c.l.b16 %v1713
      %v1750 = vpack.c.b16 %v1735, %v1734
      %v1751 = vpack.c.b16 %v1737, %v1736
      %v1752 = vpack.c.b16 %v1739, %v1738
      %v1753 = vpack.c.b16 %v1741, %v1740
      %v1754 = vpack.c.b16 %v1743, %v1742
      %v1755 = vpack.c.b16 %v1745, %v1744
      %v1756 = vpack.c.b16 %v1747, %v1746
      %v1757 = vpack.c.b16 %v1749, %v1748
      %1766 = vmatprep.subr.bf16.mxu0 0
      %1767 = vmatpush1.bf16.msra.mxu0 %v1757
      %1768 = vmatprep.subr.bf16.mxu0 0
      %1769 = vmatpush1.bf16.msra.mxu0 %v1756
      %1770 = vmatprep.subr.bf16.mxu0 0
      %1771 = vmatpush1.bf16.msra.mxu0 %v1755
      %1772 = vmatprep.subr.bf16.mxu0 0
      %1773 = vmatpush1.bf16.msra.mxu0 %v1754
      %1774 = vmatprep.subr.bf16.mxu0 0
      %1775 = vmatpush1.bf16.msra.mxu0 %v1753
      %1776 = vmatprep.subr.bf16.mxu0 0
      %1777 = vmatpush1.bf16.msra.mxu0 %v1752
      %1778 = vmatprep.subr.bf16.mxu0 0
      %1779 = vmatpush1.bf16.msra.mxu0 %v1751
      %1780 = vmatprep.subr.bf16.mxu0 0
      %1781 = vmatpush1.bf16.msra.mxu0 %v1750
      %1782 = vmatprep.subr.bf16.mxu0 0
      %1783 = vmatpush2.bf16.msra.mxu0 0
      %1784 = vmatprep.subr.bf16.mxu0 0
      %1785 = vmatpush2.bf16.msra.mxu0 0
      %1786 = vmatprep.subr.bf16.mxu0 0
      %1787 = vmatpush2.bf16.msra.mxu0 0
      %1788 = vmatprep.subr.bf16.mxu0 0
      %1789 = vmatpush2.bf16.msra.mxu0 0
      %1790 = vmatprep.subr.bf16.mxu0 0
      %1791 = vmatpush2.bf16.msra.mxu0 0
      %1792 = vmatprep.subr.bf16.mxu0 0
      %1793 = vmatpush2.bf16.msra.mxu0 0
      %1794 = vmatprep.subr.bf16.mxu0 0
      %1795 = vmatpush2.bf16.msra.mxu0 0
      %1796 = vmatprep.subr.bf16.mxu0 0
      %1797 = vmatpush2.bf16.msra.mxu0 0
      %1798 = vmatprep.mubr.bf16.mxu0 0
      %1799 = vmatmul.mubr.bf16.gmra.mxu0 %v1690
      %v1800 = vpop.f32.mrf.mxu0
      %v1801 = vadd.f32 %v1717, %v1800
      %v1802 = vpop.f32.mrf.mxu0
      %v1803 = vpop.f32.mrf.mxu0
      %v1804 = vadd.f32 %v1717, %v1803
      %v1805 = vpop.f32.mrf.mxu0
      %1806 = vmatprep.mubr.bf16.mxu0 0
      %1807 = vmatmul.mubr.bf16.gmra.mxu0 %v1691
      %v1808 = vpop.f32.mrf.mxu0
      %v1809 = vadd.f32 %v1717, %v1808
      %v1810 = vpop.f32.mrf.mxu0
      %v1811 = vpop.f32.mrf.mxu0
      %v1812 = vadd.f32 %v1717, %v1811
      %v1813 = vpop.f32.mrf.mxu0
      %1814 = vmatprep.mubr.bf16.mxu0 0
      %1815 = vmatmul.mubr.bf16.gmra.mxu0 %v1692
      %v1816 = vpop.f32.mrf.mxu0
      %v1817 = vadd.f32 %v1717, %v1816
      %v1818 = vpop.f32.mrf.mxu0
      %v1819 = vpop.f32.mrf.mxu0
      %v1820 = vadd.f32 %v1717, %v1819
      %v1821 = vpop.f32.mrf.mxu0
      %1822 = vmatprep.mubr.bf16.mxu0 0
      %1823 = vmatmul.mubr.bf16.gmra.mxu0 %v1693
      %v1824 = vpop.f32.mrf.mxu0
      %v1825 = vadd.f32 %v1717, %v1824
      %v1826 = vpop.f32.mrf.mxu0
      %v1827 = vpop.f32.mrf.mxu0
      %v1828 = vadd.f32 %v1717, %v1827
      %v1829 = vpop.f32.mrf.mxu0
      %1830 = vmatprep.mubr.bf16.mxu0 0
      %1831 = vmatmul.mubr.bf16.gmra.mxu0 %v1694
      %v1832 = vpop.f32.mrf.mxu0
      %v1833 = vadd.f32 %v1717, %v1832
      %v1834 = vpop.f32.mrf.mxu0
      %v1835 = vpop.f32.mrf.mxu0
      %v1836 = vadd.f32 %v1717, %v1835
      %v1837 = vpop.f32.mrf.mxu0
      %1838 = vmatprep.mubr.bf16.mxu0 0
      %1839 = vmatmul.mubr.bf16.gmra.mxu0 %v1695
      %v1840 = vpop.f32.mrf.mxu0
      %v1841 = vadd.f32 %v1717, %v1840
      %v1842 = vpop.f32.mrf.mxu0
      %v1843 = vpop.f32.mrf.mxu0
      %v1844 = vadd.f32 %v1717, %v1843
      %v1845 = vpop.f32.mrf.mxu0
      %1846 = vmatprep.mubr.bf16.mxu0 0
      %1847 = vmatmul.mubr.bf16.gmra.mxu0 %v1696
      %v1848 = vpop.f32.mrf.mxu0
      %v1849 = vadd.f32 %v1717, %v1848
      %v1850 = vpop.f32.mrf.mxu0
      %v1851 = vpop.f32.mrf.mxu0
      %v1852 = vadd.f32 %v1717, %v1851
      %v1853 = vpop.f32.mrf.mxu0
      %1854 = vmatprep.mubr.bf16.mxu0 0
      %1855 = vmatmul.mubr.bf16.gmra.mxu0 %v1697
      %v1856 = vpop.f32.mrf.mxu0
      %v1857 = vadd.f32 %v1717, %v1856
      %v1858 = vpop.f32.mrf.mxu0
      %v1859 = vpop.f32.mrf.mxu0
      %v1860 = vadd.f32 %v1717, %v1859
      %v1861 = vpop.f32.mrf.mxu0
      %1862 = vdwg.mxu0
      %v1863 = vmul.f32 %v1801, 0.5
      %v1864 = vmul.f32 %v1804, 0.5
      %v1865 = vmul.f32 %v1809, 0.5
      %v1866 = vmul.f32 %v1812, 0.5
      %v1867 = vmul.f32 %v1817, 0.5
      %v1868 = vmul.f32 %v1820, 0.5
      %v1869 = vmul.f32 %v1825, 0.5
      %v1870 = vmul.f32 %v1828, 0.5
      %v1871 = vmul.f32 %v1833, 0.5
      %v1872 = vmul.f32 %v1836, 0.5
      %v1873 = vmul.f32 %v1841, 0.5
      %v1874 = vmul.f32 %v1844, 0.5
      %v1875 = vmul.f32 %v1849, 0.5
      %v1876 = vmul.f32 %v1852, 0.5
      %v1877 = vmul.f32 %v1857, 0.5
      %v1878 = vmul.f32 %v1860, 0.5
      %v1879 = vmul.f32 %v1863, 1.442695
      %v1880 = vpow.pop %v1879
      %v1881 = vmul.f32 %v1864, 1.442695
      %v1882 = vpow.pop %v1881
      %v1883 = vmul.f32 %v1865, 1.442695
      %v1884 = vpow.pop %v1883
      %v1885 = vmul.f32 %v1866, 1.442695
      %v1886 = vpow.pop %v1885
      %v1887 = vmul.f32 %v1867, 1.442695
      %v1888 = vpow.pop %v1887
      %v1889 = vmul.f32 %v1868, 1.442695
      %v1890 = vpow.pop %v1889
      %v1891 = vmul.f32 %v1869, 1.442695
      %v1892 = vpow.pop %v1891
      %v1893 = vmul.f32 %v1870, 1.442695
      %v1894 = vpow.pop %v1893
      %v1895 = vmul.f32 %v1871, 1.442695
      %v1896 = vpow.pop %v1895
      %v1897 = vmul.f32 %v1872, 1.442695
      %v1898 = vpow.pop %v1897
      %v1899 = vmul.f32 %v1873, 1.442695
      %v1900 = vpow.pop %v1899
      %v1901 = vmul.f32 %v1874, 1.442695
      %v1902 = vpow.pop %v1901
      %v1903 = vmul.f32 %v1875, 1.442695
      %v1904 = vpow.pop %v1903
      %v1905 = vmul.f32 %v1876, 1.442695
      %v1906 = vpow.pop %v1905
      %v1907 = vmul.f32 %v1877, 1.442695
      %v1908 = vpow.pop %v1907
      %v1909 = vmul.f32 %v1878, 1.442695
      %v1910 = vpow.pop %v1909
      %1927 = vrot.lane.b32.xlu0 %v1880, 96
      %v1928 = vpop.permute.xlu0 %1927
      %1929 = vrot.lane.b32.xlu0 %v1882, 96
      %v1930 = vpop.permute.xlu0 %1929
      %1931 = vrot.lane.b32.xlu0 %v1884, 96
      %v1932 = vpop.permute.xlu0 %1931
      %1933 = vrot.lane.b32.xlu0 %v1886, 96
      %v1934 = vpop.permute.xlu0 %1933
      %1935 = vrot.lane.b32.xlu0 %v1888, 96
      %v1936 = vpop.permute.xlu0 %1935
      %1937 = vrot.lane.b32.xlu0 %v1890, 96
      %v1938 = vpop.permute.xlu0 %1937
      %1939 = vrot.lane.b32.xlu0 %v1892, 96
      %v1940 = vpop.permute.xlu0 %1939
      %1941 = vrot.lane.b32.xlu0 %v1894, 96
      %v1942 = vpop.permute.xlu0 %1941
      %1943 = vrot.lane.b32.xlu0 %v1896, 96
      %v1944 = vpop.permute.xlu0 %1943
      %1945 = vrot.lane.b32.xlu0 %v1898, 96
      %v1946 = vpop.permute.xlu0 %1945
      %1947 = vrot.lane.b32.xlu0 %v1900, 96
      %v1948 = vpop.permute.xlu0 %1947
      %1949 = vrot.lane.b32.xlu0 %v1902, 96
      %v1950 = vpop.permute.xlu0 %1949
      %1951 = vrot.lane.b32.xlu0 %v1904, 96
      %v1952 = vpop.permute.xlu0 %1951
      %1953 = vrot.lane.b32.xlu0 %v1906, 96
      %v1954 = vpop.permute.xlu0 %1953
      %1955 = vrot.lane.b32.xlu0 %v1908, 96
      %v1956 = vpop.permute.xlu0 %1955
      %1957 = vrot.lane.b32.xlu0 %v1910, 96
      %v1958 = vpop.permute.xlu0 %1957
      %v1975 = vmul.f32 %v426, %v1928
      %v1976 = vmul.f32 %v427, %v1930
      %v1977 = vmul.f32 %v428, %v1932
      %v1978 = vmul.f32 %v429, %v1934
      %v1979 = vmul.f32 %v430, %v1936
      %v1980 = vmul.f32 %v431, %v1938
      %v1981 = vmul.f32 %v432, %v1940
      %v1982 = vmul.f32 %v433, %v1942
      %v1983 = vmul.f32 %v434, %v1944
      %v1984 = vmul.f32 %v435, %v1946
      %v1985 = vmul.f32 %v436, %v1948
      %v1986 = vmul.f32 %v437, %v1950
      %v1987 = vmul.f32 %v438, %v1952
      %v1988 = vmul.f32 %v439, %v1954
      %v1989 = vmul.f32 %v440, %v1956
      %v1990 = vmul.f32 %v441, %v1958
      %v1991 = vadd.f32 %v1801, %v1975
      %v1992 = vadd.f32 %v1804, %v1976
      %v1993 = vadd.f32 %v1809, %v1977
      %v1994 = vadd.f32 %v1812, %v1978
      %v1995 = vadd.f32 %v1817, %v1979
      %v1996 = vadd.f32 %v1820, %v1980
      %v1997 = vadd.f32 %v1825, %v1981
      %v1998 = vadd.f32 %v1828, %v1982
      %v1999 = vadd.f32 %v1833, %v1983
      %v2000 = vadd.f32 %v1836, %v1984
      %v2001 = vadd.f32 %v1841, %v1985
      %v2002 = vadd.f32 %v1844, %v1986
      %v2003 = vadd.f32 %v1849, %v1987
      %v2004 = vadd.f32 %v1852, %v1988
      %v2005 = vadd.f32 %v1857, %v1989
      %v2006 = vadd.f32 %v1860, %v1990
      %v2007 = vpack.c.bf16 %v1992, %v1991
      %v2008 = vpack.c.bf16 %v1994, %v1993
      %v2009 = vpack.c.bf16 %v1996, %v1995
      %v2010 = vpack.c.bf16 %v1998, %v1997
      %v2011 = vpack.c.bf16 %v2000, %v1999
      %v2012 = vpack.c.bf16 %v2002, %v2001
      %v2013 = vpack.c.bf16 %v2004, %v2003
      %v2014 = vpack.c.bf16 %v2006, %v2005
      %v2015 = vld [vmem:[%s4] sm:$0xf]
      %v2016 = vld [vmem:[%s4 + $0x4] sm:$0xf]
      %v2017 = vld [vmem:[%s4 + $0x8] sm:$0xf]
      %v2018 = vld [vmem:[%s4 + $0xc] sm:$0xf]
      %v2019 = vlaneseq
      %v2020 = vshrl.u32 %v2019, 7
      %v2021 = vsub.s32 2, %v2020
      %v2022 = vrot.slane %v442, %v2021
      %v2027 = vunpack.c.l.b16 %v2015
      %v2028 = vunpack.c.l.b16 %v2016
      %v2029 = vunpack.c.l.b16 %v2017
      %v2030 = vunpack.c.l.b16 %v2018
      %v2031 = vpack.c.b16 %v2028, %v2027
      %v2032 = vpack.c.b16 %v2030, %v2029
      %vm2035 = vcmask 261120
      %v2037 = vsel %vm2035, %v2007, 0
      %v2040 = vsel %vm2035, %v2008, 0
      %v2043 = vsel %vm2035, %v2009, 0
      %v2046 = vsel %vm2035, %v2010, 0
      %v2049 = vsel %vm2035, %v2011, 0
      %v2052 = vsel %vm2035, %v2012, 0
      %v2055 = vsel %vm2035, %v2013, 0
      %v2058 = vsel %vm2035, %v2014, 0
      %2060 = vmatprep.subr.bf16.mxu0 0
      %2061 = vmatpush1.bf16.msra.mxu0 0
      %2062 = vmatprep.subr.bf16.mxu0 0
      %2063 = vmatpush1.bf16.msra.mxu0 0
      %2064 = vmatprep.subr.bf16.mxu0 0
      %2065 = vmatpush1.bf16.msra.mxu0 0
      %2066 = vmatprep.subr.bf16.mxu0 0
      %2067 = vmatpush1.bf16.msra.mxu0 0
      %2068 = vmatprep.subr.bf16.mxu0 0
      %2069 = vmatpush1.bf16.msra.mxu0 0
      %2070 = vmatprep.subr.bf16.mxu0 0
      %2071 = vmatpush1.bf16.msra.mxu0 0
      %2072 = vmatprep.subr.bf16.mxu0 0
      %2073 = vmatpush1.bf16.msra.mxu0 %v2032
      %2074 = vmatprep.subr.bf16.mxu0 0
      %2075 = vmatpush1.bf16.msra.mxu0 %v2031
      %2076 = vmatprep.subr.bf16.mxu0 0
      %2077 = vmatpush2.bf16.msra.mxu0 0
      %2078 = vmatprep.subr.bf16.mxu0 0
      %2079 = vmatpush2.bf16.msra.mxu0 0
      %2080 = vmatprep.subr.bf16.mxu0 0
      %2081 = vmatpush2.bf16.msra.mxu0 0
      %2082 = vmatprep.subr.bf16.mxu0 0
      %2083 = vmatpush2.bf16.msra.mxu0 0
      %2084 = vmatprep.subr.bf16.mxu0 0
      %2085 = vmatpush2.bf16.msra.mxu0 0
      %2086 = vmatprep.subr.bf16.mxu0 0
      %2087 = vmatpush2.bf16.msra.mxu0 0
      %2088 = vmatprep.subr.bf16.mxu0 0
      %2089 = vmatpush2.bf16.msra.mxu0 0
      %2090 = vmatprep.subr.bf16.mxu0 0
      %2091 = vmatpush2.bf16.msra.mxu0 0
      %2092 = vmatprep.mubr.bf16.mxu0 0
      %2093 = vmatmul.mubr.bf16.gmra.mxu0 %v2037
      %v2094 = vpop.f32.mrf.mxu0
      %v2095 = vadd.f32 %v2022, %v2094
      %v2096 = vpop.f32.mrf.mxu0
      %v2097 = vpop.f32.mrf.mxu0
      %v2098 = vadd.f32 %v2022, %v2097
      %v2099 = vpop.f32.mrf.mxu0
      %2100 = vmatprep.mubr.bf16.mxu0 0
      %2101 = vmatmul.mubr.bf16.gmra.mxu0 %v2040
      %v2102 = vpop.f32.mrf.mxu0
      %v2103 = vadd.f32 %v2022, %v2102
      %v2104 = vpop.f32.mrf.mxu0
      %v2105 = vpop.f32.mrf.mxu0
      %v2106 = vadd.f32 %v2022, %v2105
      %v2107 = vpop.f32.mrf.mxu0
      %2108 = vmatprep.mubr.bf16.mxu0 0
      %2109 = vmatmul.mubr.bf16.gmra.mxu0 %v2043
      %v2110 = vpop.f32.mrf.mxu0
      %v2111 = vadd.f32 %v2022, %v2110
      %v2112 = vpop.f32.mrf.mxu0
      %v2113 = vpop.f32.mrf.mxu0
      %v2114 = vadd.f32 %v2022, %v2113
      %v2115 = vpop.f32.mrf.mxu0
      %2116 = vmatprep.mubr.bf16.mxu0 0
      %2117 = vmatmul.mubr.bf16.gmra.mxu0 %v2046
      %v2118 = vpop.f32.mrf.mxu0
      %v2119 = vadd.f32 %v2022, %v2118
      %v2120 = vpop.f32.mrf.mxu0
      %v2121 = vpop.f32.mrf.mxu0
      %v2122 = vadd.f32 %v2022, %v2121
      %v2123 = vpop.f32.mrf.mxu0
      %2124 = vmatprep.mubr.bf16.mxu0 0
      %2125 = vmatmul.mubr.bf16.gmra.mxu0 %v2049
      %v2126 = vpop.f32.mrf.mxu0
      %v2127 = vadd.f32 %v2022, %v2126
      %v2128 = vpop.f32.mrf.mxu0
      %v2129 = vpop.f32.mrf.mxu0
      %v2130 = vadd.f32 %v2022, %v2129
      %v2131 = vpop.f32.mrf.mxu0
      %2132 = vmatprep.mubr.bf16.mxu0 0
      %2133 = vmatmul.mubr.bf16.gmra.mxu0 %v2052
      %v2134 = vpop.f32.mrf.mxu0
      %v2135 = vadd.f32 %v2022, %v2134
      %v2136 = vpop.f32.mrf.mxu0
      %v2137 = vpop.f32.mrf.mxu0
      %v2138 = vadd.f32 %v2022, %v2137
      %v2139 = vpop.f32.mrf.mxu0
      %2140 = vmatprep.mubr.bf16.mxu0 0
      %2141 = vmatmul.mubr.bf16.gmra.mxu0 %v2055
      %v2142 = vpop.f32.mrf.mxu0
      %v2143 = vadd.f32 %v2022, %v2142
      %v2144 = vpop.f32.mrf.mxu0
      %v2145 = vpop.f32.mrf.mxu0
      %v2146 = vadd.f32 %v2022, %v2145
      %v2147 = vpop.f32.mrf.mxu0
      %2148 = vmatprep.mubr.bf16.mxu0 0
      %2149 = vmatmul.mubr.bf16.gmra.mxu0 %v2058
      %v2150 = vpop.f32.mrf.mxu0
      %v2151 = vadd.f32 %v2022, %v2150
      %v2152 = vpop.f32.mrf.mxu0
      %v2153 = vpop.f32.mrf.mxu0
      %v2154 = vadd.f32 %v2022, %v2153
      %v2155 = vpop.f32.mrf.mxu0
      %2156 = vdwg.mxu0
      %v2157 = vmax.f32 %v2095, 0.0
      %v2158 = vmax.f32 %v2098, 0.0
      %v2159 = vmax.f32 %v2103, 0.0
      %v2160 = vmax.f32 %v2106, 0.0
      %v2161 = vmax.f32 %v2111, 0.0
      %v2162 = vmax.f32 %v2114, 0.0
      %v2163 = vmax.f32 %v2119, 0.0
      %v2164 = vmax.f32 %v2122, 0.0
      %v2165 = vmax.f32 %v2127, 0.0
      %v2166 = vmax.f32 %v2130, 0.0
      %v2167 = vmax.f32 %v2135, 0.0
      %v2168 = vmax.f32 %v2138, 0.0
      %v2169 = vmax.f32 %v2143, 0.0
      %v2170 = vmax.f32 %v2146, 0.0
      %v2171 = vmax.f32 %v2151, 0.0
      %v2172 = vmax.f32 %v2154, 0.0
      %v2173 = vpack.c.bf16 %v2158, %v2157
      %v2174 = vpack.c.bf16 %v2160, %v2159
      %v2175 = vpack.c.bf16 %v2162, %v2161
      %v2176 = vpack.c.bf16 %v2164, %v2163
      %v2177 = vpack.c.bf16 %v2166, %v2165
      %v2178 = vpack.c.bf16 %v2168, %v2167
      %v2179 = vpack.c.bf16 %v2170, %v2169
      %v2180 = vpack.c.bf16 %v2172, %v2171
      %v2181 = vld [vmem:[%s5] sm:$0xff]
      %v2182 = vld [vmem:[%s5 + $0x8] sm:$0xff]
      %v2183 = vld [vmem:[%s5 + $0x10] sm:$0xff]
      %v2184 = vld [vmem:[%s5 + $0x18] sm:$0xff]
      %v2185 = vld [vmem:[%s5 + $0x20] sm:$0xff]
      %v2186 = vld [vmem:[%s5 + $0x28] sm:$0xff]
      %v2187 = vld [vmem:[%s5 + $0x30] sm:$0xff]
      %v2188 = vld [vmem:[%s5 + $0x38] sm:$0xff]
      %v2189 = vld [vmem:[%s5 + $0x40] sm:$0xff]
      %v2190 = vld [vmem:[%s5 + $0x48] sm:$0xff]
      %v2191 = vld [vmem:[%s5 + $0x50] sm:$0xff]
      %v2192 = vld [vmem:[%s5 + $0x58] sm:$0xff]
      %v2193 = vld [vmem:[%s5 + $0x60] sm:$0xff]
      %v2194 = vld [vmem:[%s5 + $0x68] sm:$0xff]
      %v2195 = vld [vmem:[%s5 + $0x70] sm:$0xff]
      %v2196 = vld [vmem:[%s5 + $0x78] sm:$0xff]
      %v2197 = vld [vmem:[%s5 + $0x80] sm:$0xff]
      %v2198 = vld [vmem:[%s5 + $0x88] sm:$0xff]
      %v2199 = vld [vmem:[%s5 + $0x90] sm:$0xff]
      %v2200 = vld [vmem:[%s5 + $0x98] sm:$0xff]
      %v2201 = vld [vmem:[%s5 + $0xa0] sm:$0xff]
      %v2202 = vld [vmem:[%s5 + $0xa8] sm:$0xff]
      %v2203 = vld [vmem:[%s5 + $0xb0] sm:$0xff]
      %v2204 = vld [vmem:[%s5 + $0xb8] sm:$0xff]
      %v2205 = vld [vmem:[%s5 + $0xc0] sm:$0xff]
      %v2206 = vld [vmem:[%s5 + $0xc8] sm:$0xff]
      %v2207 = vld [vmem:[%s5 + $0xd0] sm:$0xff]
      %v2208 = vld [vmem:[%s5 + $0xd8] sm:$0xff]
      %v2209 = vld [vmem:[%s5 + $0xe0] sm:$0xff]
      %v2210 = vld [vmem:[%s5 + $0xe8] sm:$0xff]
      %v2211 = vld [vmem:[%s5 + $0xf0] sm:$0xff]
      %v2212 = vld [vmem:[%s5 + $0xf8] sm:$0xff]
      %v2213 = vld [vmem:[%s5 + $0x100] sm:$0xff]
      %v2214 = vld [vmem:[%s5 + $0x108] sm:$0xff]
      %v2215 = vld [vmem:[%s5 + $0x110] sm:$0xff]
      %v2216 = vld [vmem:[%s5 + $0x118] sm:$0xff]
      %v2217 = vld [vmem:[%s5 + $0x120] sm:$0xff]
      %v2218 = vld [vmem:[%s5 + $0x128] sm:$0xff]
      %v2219 = vld [vmem:[%s5 + $0x130] sm:$0xff]
      %v2220 = vld [vmem:[%s5 + $0x138] sm:$0xff]
      %v2221 = vld [vmem:[%s5 + $0x140] sm:$0xff]
      %v2222 = vld [vmem:[%s5 + $0x148] sm:$0xff]
      %v2223 = vld [vmem:[%s5 + $0x150] sm:$0xff]
      %v2224 = vld [vmem:[%s5 + $0x158] sm:$0xff]
      %v2225 = vld [vmem:[%s5 + $0x160] sm:$0xff]
      %v2226 = vld [vmem:[%s5 + $0x168] sm:$0xff]
      %v2227 = vld [vmem:[%s5 + $0x170] sm:$0xff]
      %v2228 = vld [vmem:[%s5 + $0x178] sm:$0xff]
      %v2229 = vld [vmem:[%s5 + $0x180] sm:$0xff]
      %v2230 = vld [vmem:[%s5 + $0x188] sm:$0xff]
      %v2231 = vld [vmem:[%s5 + $0x190] sm:$0xff]
      %v2232 = vld [vmem:[%s5 + $0x198] sm:$0xff]
      %v2233 = vld [vmem:[%s5 + $0x1a0] sm:$0xff]
      %v2234 = vld [vmem:[%s5 + $0x1a8] sm:$0xff]
      %v2235 = vld [vmem:[%s5 + $0x1b0] sm:$0xff]
      %v2236 = vld [vmem:[%s5 + $0x1b8] sm:$0xff]
      %v2237 = vld [vmem:[%s5 + $0x1c0] sm:$0xff]
      %v2238 = vld [vmem:[%s5 + $0x1c8] sm:$0xff]
      %v2239 = vld [vmem:[%s5 + $0x1d0] sm:$0xff]
      %v2240 = vld [vmem:[%s5 + $0x1d8] sm:$0xff]
      %v2241 = vld [vmem:[%s5 + $0x1e0] sm:$0xff]
      %v2242 = vld [vmem:[%s5 + $0x1e8] sm:$0xff]
      %v2243 = vld [vmem:[%s5 + $0x1f0] sm:$0xff]
      %v2244 = vld [vmem:[%s5 + $0x1f8] sm:$0xff]
      %v2245 = vlaneseq
      %v2246 = vshrl.u32 %v2245, 7
      %v2247 = vsub.s32 3, %v2246
      %v2248 = vrot.slane %v442, %v2247
      %v2249 = vlaneseq
      %v2250 = vshrl.u32 %v2249, 7
      %v2251 = vsub.s32 3, %v2250
      %v2252 = vrot.slane %v443, %v2251
      %v2253 = vlaneseq
      %v2254 = vshrl.u32 %v2253, 7
      %v2255 = vsub.s32 3, %v2254
      %v2256 = vrot.slane %v444, %v2255
      %v2257 = vlaneseq
      %v2258 = vshrl.u32 %v2257, 7
      %v2259 = vsub.s32 3, %v2258
      %v2260 = vrot.slane %v445, %v2259
      %v2261 = vlaneseq
      %v2262 = vshrl.u32 %v2261, 7
      %v2263 = vsub.s32 3, %v2262
      %v2264 = vrot.slane %v446, %v2263
      %v2265 = vlaneseq
      %v2266 = vshrl.u32 %v2265, 7
      %v2267 = vsub.s32 3, %v2266
      %v2268 = vrot.slane %v447, %v2267
      %v2269 = vlaneseq
      %v2270 = vshrl.u32 %v2269, 7
      %v2271 = vsub.s32 3, %v2270
      %v2272 = vrot.slane %v448, %v2271
      %v2273 = vlaneseq
      %v2274 = vshrl.u32 %v2273, 7
      %v2275 = vsub.s32 3, %v2274
      %v2276 = vrot.slane %v449, %v2275
      %v2341 = vunpack.c.l.b16 %v2181
      %v2342 = vunpack.c.h.b16 %v2181
      %v2343 = vunpack.c.l.b16 %v2182
      %v2344 = vunpack.c.h.b16 %v2182
      %v2345 = vunpack.c.l.b16 %v2183
      %v2346 = vunpack.c.h.b16 %v2183
      %v2347 = vunpack.c.l.b16 %v2184
      %v2348 = vunpack.c.h.b16 %v2184
      %v2349 = vunpack.c.l.b16 %v2185
      %v2350 = vunpack.c.h.b16 %v2185
      %v2351 = vunpack.c.l.b16 %v2186
      %v2352 = vunpack.c.h.b16 %v2186
      %v2353 = vunpack.c.l.b16 %v2187
      %v2354 = vunpack.c.h.b16 %v2187
      %v2355 = vunpack.c.l.b16 %v2188
      %v2356 = vunpack.c.h.b16 %v2188
      %v2357 = vunpack.c.l.b16 %v2189
      %v2358 = vunpack.c.h.b16 %v2189
      %v2359 = vunpack.c.l.b16 %v2190
      %v2360 = vunpack.c.h.b16 %v2190
      %v2361 = vunpack.c.l.b16 %v2191
      %v2362 = vunpack.c.h.b16 %v2191
      %v2363 = vunpack.c.l.b16 %v2192
      %v2364 = vunpack.c.h.b16 %v2192
      %v2365 = vunpack.c.l.b16 %v2193
      %v2366 = vunpack.c.h.b16 %v2193
      %v2367 = vunpack.c.l.b16 %v2194
      %v2368 = vunpack.c.h.b16 %v2194
      %v2369 = vunpack.c.l.b16 %v2195
      %v2370 = vunpack.c.h.b16 %v2195
      %v2371 = vunpack.c.l.b16 %v2196
      %v2372 = vunpack.c.h.b16 %v2196
      %v2373 = vunpack.c.l.b16 %v2197
      %v2374 = vunpack.c.h.b16 %v2197
      %v2375 = vunpack.c.l.b16 %v2198
      %v2376 = vunpack.c.h.b16 %v2198
      %v2377 = vunpack.c.l.b16 %v2199
      %v2378 = vunpack.c.h.b16 %v2199
      %v2379 = vunpack.c.l.b16 %v2200
      %v2380 = vunpack.c.h.b16 %v2200
      %v2381 = vunpack.c.l.b16 %v2201
      %v2382 = vunpack.c.h.b16 %v2201
      %v2383 = vunpack.c.l.b16 %v2202
      %v2384 = vunpack.c.h.b16 %v2202
      %v2385 = vunpack.c.l.b16 %v2203
      %v2386 = vunpack.c.h.b16 %v2203
      %v2387 = vunpack.c.l.b16 %v2204
      %v2388 = vunpack.c.h.b16 %v2204
      %v2389 = vunpack.c.l.b16 %v2205
      %v2390 = vunpack.c.h.b16 %v2205
      %v2391 = vunpack.c.l.b16 %v2206
      %v2392 = vunpack.c.h.b16 %v2206
      %v2393 = vunpack.c.l.b16 %v2207
      %v2394 = vunpack.c.h.b16 %v2207
      %v2395 = vunpack.c.l.b16 %v2208
      %v2396 = vunpack.c.h.b16 %v2208
      %v2397 = vunpack.c.l.b16 %v2209
      %v2398 = vunpack.c.h.b16 %v2209
      %v2399 = vunpack.c.l.b16 %v2210
      %v2400 = vunpack.c.h.b16 %v2210
      %v2401 = vunpack.c.l.b16 %v2211
      %v2402 = vunpack.c.h.b16 %v2211
      %v2403 = vunpack.c.l.b16 %v2212
      %v2404 = vunpack.c.h.b16 %v2212
      %v2405 = vunpack.c.l.b16 %v2213
      %v2406 = vunpack.c.h.b16 %v2213
      %v2407 = vunpack.c.l.b16 %v2214
      %v2408 = vunpack.c.h.b16 %v2214
      %v2409 = vunpack.c.l.b16 %v2215
      %v2410 = vunpack.c.h.b16 %v2215
      %v2411 = vunpack.c.l.b16 %v2216
      %v2412 = vunpack.c.h.b16 %v2216
      %v2413 = vunpack.c.l.b16 %v2217
      %v2414 = vunpack.c.h.b16 %v2217
      %v2415 = vunpack.c.l.b16 %v2218
      %v2416 = vunpack.c.h.b16 %v2218
      %v2417 = vunpack.c.l.b16 %v2219
      %v2418 = vunpack.c.h.b16 %v2219
      %v2419 = vunpack.c.l.b16 %v2220
      %v2420 = vunpack.c.h.b16 %v2220
      %v2421 = vunpack.c.l.b16 %v2221
      %v2422 = vunpack.c.h.b16 %v2221
      %v2423 = vunpack.c.l.b16 %v2222
      %v2424 = vunpack.c.h.b16 %v2222
      %v2425 = vunpack.c.l.b16 %v2223
      %v2426 = vunpack.c.h.b16 %v2223
      %v2427 = vunpack.c.l.b16 %v2224
      %v2428 = vunpack.c.h.b16 %v2224
      %v2429 = vunpack.c.l.b16 %v2225
      %v2430 = vunpack.c.h.b16 %v2225
      %v2431 = vunpack.c.l.b16 %v2226
      %v2432 = vunpack.c.h.b16 %v2226
      %v2433 = vunpack.c.l.b16 %v2227
      %v2434 = vunpack.c.h.b16 %v2227
      %v2435 = vunpack.c.l.b16 %v2228
      %v2436 = vunpack.c.h.b16 %v2228
      %v2437 = vunpack.c.l.b16 %v2229
      %v2438 = vunpack.c.h.b16 %v2229
      %v2439 = vunpack.c.l.b16 %v2230
      %v2440 = vunpack.c.h.b16 %v2230
      %v2441 = vunpack.c.l.b16 %v2231
      %v2442 = vunpack.c.h.b16 %v2231
      %v2443 = vunpack.c.l.b16 %v2232
      %v2444 = vunpack.c.h.b16 %v2232
      %v2445 = vunpack.c.l.b16 %v2233
      %v2446 = vunpack.c.h.b16 %v2233
      %v2447 = vunpack.c.l.b16 %v2234
      %v2448 = vunpack.c.h.b16 %v2234
      %v2449 = vunpack.c.l.b16 %v2235
      %v2450 = vunpack.c.h.b16 %v2235
      %v2451 = vunpack.c.l.b16 %v2236
      %v2452 = vunpack.c.h.b16 %v2236
      %v2453 = vunpack.c.l.b16 %v2237
      %v2454 = vunpack.c.h.b16 %v2237
      %v2455 = vunpack.c.l.b16 %v2238
      %v2456 = vunpack.c.h.b16 %v2238
      %v2457 = vunpack.c.l.b16 %v2239
      %v2458 = vunpack.c.h.b16 %v2239
      %v2459 = vunpack.c.l.b16 %v2240
      %v2460 = vunpack.c.h.b16 %v2240
      %v2461 = vunpack.c.l.b16 %v2241
      %v2462 = vunpack.c.h.b16 %v2241
      %v2463 = vunpack.c.l.b16 %v2242
      %v2464 = vunpack.c.h.b16 %v2242
      %v2465 = vunpack.c.l.b16 %v2243
      %v2466 = vunpack.c.h.b16 %v2243
      %v2467 = vunpack.c.l.b16 %v2244
      %v2468 = vunpack.c.h.b16 %v2244
      %v2469 = vpack.c.b16 %v2349, %v2341
      %v2470 = vpack.c.b16 %v2350, %v2342
      %v2471 = vpack.c.b16 %v2351, %v2343
      %v2472 = vpack.c.b16 %v2352, %v2344
      %v2473 = vpack.c.b16 %v2353, %v2345
      %v2474 = vpack.c.b16 %v2354, %v2346
      %v2475 = vpack.c.b16 %v2355, %v2347
      %v2476 = vpack.c.b16 %v2356, %v2348
      %v2477 = vpack.c.b16 %v2365, %v2357
      %v2478 = vpack.c.b16 %v2366, %v2358
      %v2479 = vpack.c.b16 %v2367, %v2359
      %v2480 = vpack.c.b16 %v2368, %v2360
      %v2481 = vpack.c.b16 %v2369, %v2361
      %v2482 = vpack.c.b16 %v2370, %v2362
      %v2483 = vpack.c.b16 %v2371, %v2363
      %v2484 = vpack.c.b16 %v2372, %v2364
      %v2485 = vpack.c.b16 %v2381, %v2373
      %v2486 = vpack.c.b16 %v2382, %v2374
      %v2487 = vpack.c.b16 %v2383, %v2375
      %v2488 = vpack.c.b16 %v2384, %v2376
      %v2489 = vpack.c.b16 %v2385, %v2377
      %v2490 = vpack.c.b16 %v2386, %v2378
      %v2491 = vpack.c.b16 %v2387, %v2379
      %v2492 = vpack.c.b16 %v2388, %v2380
      %v2493 = vpack.c.b16 %v2397, %v2389
      %v2494 = vpack.c.b16 %v2398, %v2390
      %v2495 = vpack.c.b16 %v2399, %v2391
      %v2496 = vpack.c.b16 %v2400, %v2392
      %v2497 = vpack.c.b16 %v2401, %v2393
      %v2498 = vpack.c.b16 %v2402, %v2394
      %v2499 = vpack.c.b16 %v2403, %v2395
      %v2500 = vpack.c.b16 %v2404, %v2396
      %v2501 = vpack.c.b16 %v2413, %v2405
      %v2502 = vpack.c.b16 %v2414, %v2406
      %v2503 = vpack.c.b16 %v2415, %v2407
      %v2504 = vpack.c.b16 %v2416, %v2408
      %v2505 = vpack.c.b16 %v2417, %v2409
      %v2506 = vpack.c.b16 %v2418, %v2410
      %v2507 = vpack.c.b16 %v2419, %v2411
      %v2508 = vpack.c.b16 %v2420, %v2412
      %v2509 = vpack.c.b16 %v2429, %v2421
      %v2510 = vpack.c.b16 %v2430, %v2422
      %v2511 = vpack.c.b16 %v2431, %v2423
      %v2512 = vpack.c.b16 %v2432, %v2424
      %v2513 = vpack.c.b16 %v2433, %v2425
      %v2514 = vpack.c.b16 %v2434, %v2426
      %v2515 = vpack.c.b16 %v2435, %v2427
      %v2516 = vpack.c.b16 %v2436, %v2428
      %v2517 = vpack.c.b16 %v2445, %v2437
      %v2518 = vpack.c.b16 %v2446, %v2438
      %v2519 = vpack.c.b16 %v2447, %v2439
      %v2520 = vpack.c.b16 %v2448, %v2440
      %v2521 = vpack.c.b16 %v2449, %v2441
      %v2522 = vpack.c.b16 %v2450, %v2442
      %v2523 = vpack.c.b16 %v2451, %v2443
      %v2524 = vpack.c.b16 %v2452, %v2444
      %v2525 = vpack.c.b16 %v2461, %v2453
      %v2526 = vpack.c.b16 %v2462, %v2454
      %v2527 = vpack.c.b16 %v2463, %v2455
      %v2528 = vpack.c.b16 %v2464, %v2456
      %v2529 = vpack.c.b16 %v2465, %v2457
      %v2530 = vpack.c.b16 %v2466, %v2458
      %v2531 = vpack.c.b16 %v2467, %v2459
      %v2532 = vpack.c.b16 %v2468, %v2460
      %2597 = vmatprep.subr.bf16.mxu0 %v2526
      %2598 = vmatpush1.bf16.msra.mxu0 %v2525
      %2599 = vmatprep.subr.bf16.mxu0 %v2518
      %2600 = vmatpush1.bf16.msra.mxu0 %v2517
      %2601 = vmatprep.subr.bf16.mxu0 %v2510
      %2602 = vmatpush1.bf16.msra.mxu0 %v2509
      %2603 = vmatprep.subr.bf16.mxu0 %v2502
      %2604 = vmatpush1.bf16.msra.mxu0 %v2501
      %2605 = vmatprep.subr.bf16.mxu0 %v2494
      %2606 = vmatpush1.bf16.msra.mxu0 %v2493
      %2607 = vmatprep.subr.bf16.mxu0 %v2486
      %2608 = vmatpush1.bf16.msra.mxu0 %v2485
      %2609 = vmatprep.subr.bf16.mxu0 %v2478
      %2610 = vmatpush1.bf16.msra.mxu0 %v2477
      %2611 = vmatprep.subr.bf16.mxu0 %v2470
      %2612 = vmatpush1.bf16.msra.mxu0 %v2469
      %2613 = vmatprep.subr.bf16.mxu0 0
      %2614 = vmatpush2.bf16.msra.mxu0 0
      %2615 = vmatprep.subr.bf16.mxu0 0
      %2616 = vmatpush2.bf16.msra.mxu0 0
      %2617 = vmatprep.subr.bf16.mxu0 0
      %2618 = vmatpush2.bf16.msra.mxu0 0
      %2619 = vmatprep.subr.bf16.mxu0 0
      %2620 = vmatpush2.bf16.msra.mxu0 0
      %2621 = vmatprep.subr.bf16.mxu0 0
      %2622 = vmatpush2.bf16.msra.mxu0 0
      %2623 = vmatprep.subr.bf16.mxu0 0
      %2624 = vmatpush2.bf16.msra.mxu0 0
      %2625 = vmatprep.subr.bf16.mxu0 0
      %2626 = vmatpush2.bf16.msra.mxu0 0
      %2627 = vmatprep.subr.bf16.mxu0 0
      %2628 = vmatpush2.bf16.msra.mxu0 0
      %2629 = vmatprep.mubr.bf16.mxu0 0
      %2630 = vmatmul.mubr.bf16.gmra.mxu0 %v2173
      %v2631 = vpop.f32.mrf.mxu0
      %v2632 = vadd.f32 %v2248, %v2631
      %v2633 = vpop.f32.mrf.mxu0
      %v2634 = vadd.f32 %v2252, %v2633
      %v2635 = vpop.f32.mrf.mxu0
      %v2636 = vadd.f32 %v2248, %v2635
      %v2637 = vpop.f32.mrf.mxu0
      %v2638 = vadd.f32 %v2252, %v2637
      %2639 = vmatprep.mubr.bf16.mxu0 0
      %2640 = vmatmul.mubr.bf16.gmra.mxu0 %v2174
      %v2641 = vpop.f32.mrf.mxu0
      %v2642 = vadd.f32 %v2248, %v2641
      %v2643 = vpop.f32.mrf.mxu0
      %v2644 = vadd.f32 %v2252, %v2643
      %v2645 = vpop.f32.mrf.mxu0
      %v2646 = vadd.f32 %v2248, %v2645
      %v2647 = vpop.f32.mrf.mxu0
      %v2648 = vadd.f32 %v2252, %v2647
      %2649 = vmatprep.mubr.bf16.mxu0 0
      %2650 = vmatmul.mubr.bf16.gmra.mxu0 %v2175
      %v2651 = vpop.f32.mrf.mxu0
      %v2652 = vadd.f32 %v2248, %v2651
      %v2653 = vpop.f32.mrf.mxu0
      %v2654 = vadd.f32 %v2252, %v2653
      %v2655 = vpop.f32.mrf.mxu0
      %v2656 = vadd.f32 %v2248, %v2655
      %v2657 = vpop.f32.mrf.mxu0
      %v2658 = vadd.f32 %v2252, %v2657
      %2659 = vmatprep.mubr.bf16.mxu0 0
      %2660 = vmatmul.mubr.bf16.gmra.mxu0 %v2176
      %v2661 = vpop.f32.mrf.mxu0
      %v2662 = vadd.f32 %v2248, %v2661
      %v2663 = vpop.f32.mrf.mxu0
      %v2664 = vadd.f32 %v2252, %v2663
      %v2665 = vpop.f32.mrf.mxu0
      %v2666 = vadd.f32 %v2248, %v2665
      %v2667 = vpop.f32.mrf.mxu0
      %v2668 = vadd.f32 %v2252, %v2667
      %2669 = vmatprep.mubr.bf16.mxu0 0
      %2670 = vmatmul.mubr.bf16.gmra.mxu0 %v2177
      %v2671 = vpop.f32.mrf.mxu0
      %v2672 = vadd.f32 %v2248, %v2671
      %v2673 = vpop.f32.mrf.mxu0
      %v2674 = vadd.f32 %v2252, %v2673
      %v2675 = vpop.f32.mrf.mxu0
      %v2676 = vadd.f32 %v2248, %v2675
      %v2677 = vpop.f32.mrf.mxu0
      %v2678 = vadd.f32 %v2252, %v2677
      %2679 = vmatprep.mubr.bf16.mxu0 0
      %2680 = vmatmul.mubr.bf16.gmra.mxu0 %v2178
      %v2681 = vpop.f32.mrf.mxu0
      %v2682 = vadd.f32 %v2248, %v2681
      %v2683 = vpop.f32.mrf.mxu0
      %v2684 = vadd.f32 %v2252, %v2683
      %v2685 = vpop.f32.mrf.mxu0
      %v2686 = vadd.f32 %v2248, %v2685
      %v2687 = vpop.f32.mrf.mxu0
      %v2688 = vadd.f32 %v2252, %v2687
      %2689 = vmatprep.mubr.bf16.mxu0 0
      %2690 = vmatmul.mubr.bf16.gmra.mxu0 %v2179
      %v2691 = vpop.f32.mrf.mxu0
      %v2692 = vadd.f32 %v2248, %v2691
      %v2693 = vpop.f32.mrf.mxu0
      %v2694 = vadd.f32 %v2252, %v2693
      %v2695 = vpop.f32.mrf.mxu0
      %v2696 = vadd.f32 %v2248, %v2695
      %v2697 = vpop.f32.mrf.mxu0
      %v2698 = vadd.f32 %v2252, %v2697
      %2699 = vmatprep.mubr.bf16.mxu0 0
      %2700 = vmatmul.mubr.bf16.gmra.mxu0 %v2180
      %v2701 = vpop.f32.mrf.mxu0
      %v2702 = vadd.f32 %v2248, %v2701
      %v2703 = vpop.f32.mrf.mxu0
      %v2704 = vadd.f32 %v2252, %v2703
      %v2705 = vpop.f32.mrf.mxu0
      %v2706 = vadd.f32 %v2248, %v2705
      %v2707 = vpop.f32.mrf.mxu0
      %v2708 = vadd.f32 %v2252, %v2707
      %2709 = vdwg.mxu0
      %2710 = vmatprep.subr.bf16.mxu0 %v2528
      %2711 = vmatpush1.bf16.msra.mxu0 %v2527
      %2712 = vmatprep.subr.bf16.mxu0 %v2520
      %2713 = vmatpush1.bf16.msra.mxu0 %v2519
      %2714 = vmatprep.subr.bf16.mxu0 %v2512
      %2715 = vmatpush1.bf16.msra.mxu0 %v2511
      %2716 = vmatprep.subr.bf16.mxu0 %v2504
      %2717 = vmatpush1.bf16.msra.mxu0 %v2503
      %2718 = vmatprep.subr.bf16.mxu0 %v2496
      %2719 = vmatpush1.bf16.msra.mxu0 %v2495
      %2720 = vmatprep.subr.bf16.mxu0 %v2488
      %2721 = vmatpush1.bf16.msra.mxu0 %v2487
      %2722 = vmatprep.subr.bf16.mxu0 %v2480
      %2723 = vmatpush1.bf16.msra.mxu0 %v2479
      %2724 = vmatprep.subr.bf16.mxu0 %v2472
      %2725 = vmatpush1.bf16.msra.mxu0 %v2471
      %2726 = vmatprep.subr.bf16.mxu0 0
      %2727 = vmatpush2.bf16.msra.mxu0 0
      %2728 = vmatprep.subr.bf16.mxu0 0
      %2729 = vmatpush2.bf16.msra.mxu0 0
      %2730 = vmatprep.subr.bf16.mxu0 0
      %2731 = vmatpush2.bf16.msra.mxu0 0
      %2732 = vmatprep.subr.bf16.mxu0 0
      %2733 = vmatpush2.bf16.msra.mxu0 0
      %2734 = vmatprep.subr.bf16.mxu0 0
      %2735 = vmatpush2.bf16.msra.mxu0 0
      %2736 = vmatprep.subr.bf16.mxu0 0
      %2737 = vmatpush2.bf16.msra.mxu0 0
      %2738 = vmatprep.subr.bf16.mxu0 0
      %2739 = vmatpush2.bf16.msra.mxu0 0
      %2740 = vmatprep.subr.bf16.mxu0 0
      %2741 = vmatpush2.bf16.msra.mxu0 0
      %2742 = vmatprep.mubr.bf16.mxu0 0
      %2743 = vmatmul.mubr.bf16.gmra.mxu0 %v2173
      %v2744 = vpop.f32.mrf.mxu0
      %v2745 = vadd.f32 %v2256, %v2744
      %v2746 = vpop.f32.mrf.mxu0
      %v2747 = vadd.f32 %v2260, %v2746
      %v2748 = vpop.f32.mrf.mxu0
      %v2749 = vadd.f32 %v2256, %v2748
      %v2750 = vpop.f32.mrf.mxu0
      %v2751 = vadd.f32 %v2260, %v2750
      %2752 = vmatprep.mubr.bf16.mxu0 0
      %2753 = vmatmul.mubr.bf16.gmra.mxu0 %v2174
      %v2754 = vpop.f32.mrf.mxu0
      %v2755 = vadd.f32 %v2256, %v2754
      %v2756 = vpop.f32.mrf.mxu0
      %v2757 = vadd.f32 %v2260, %v2756
      %v2758 = vpop.f32.mrf.mxu0
      %v2759 = vadd.f32 %v2256, %v2758
      %v2760 = vpop.f32.mrf.mxu0
      %v2761 = vadd.f32 %v2260, %v2760
      %2762 = vmatprep.mubr.bf16.mxu0 0
      %2763 = vmatmul.mubr.bf16.gmra.mxu0 %v2175
      %v2764 = vpop.f32.mrf.mxu0
      %v2765 = vadd.f32 %v2256, %v2764
      %v2766 = vpop.f32.mrf.mxu0
      %v2767 = vadd.f32 %v2260, %v2766
      %v2768 = vpop.f32.mrf.mxu0
      %v2769 = vadd.f32 %v2256, %v2768
      %v2770 = vpop.f32.mrf.mxu0
      %v2771 = vadd.f32 %v2260, %v2770
      %2772 = vmatprep.mubr.bf16.mxu0 0
      %2773 = vmatmul.mubr.bf16.gmra.mxu0 %v2176
      %v2774 = vpop.f32.mrf.mxu0
      %v2775 = vadd.f32 %v2256, %v2774
      %v2776 = vpop.f32.mrf.mxu0
      %v2777 = vadd.f32 %v2260, %v2776
      %v2778 = vpop.f32.mrf.mxu0
      %v2779 = vadd.f32 %v2256, %v2778
      %v2780 = vpop.f32.mrf.mxu0
      %v2781 = vadd.f32 %v2260, %v2780
      %2782 = vmatprep.mubr.bf16.mxu0 0
      %2783 = vmatmul.mubr.bf16.gmra.mxu0 %v2177
      %v2784 = vpop.f32.mrf.mxu0
      %v2785 = vadd.f32 %v2256, %v2784
      %v2786 = vpop.f32.mrf.mxu0
      %v2787 = vadd.f32 %v2260, %v2786
      %v2788 = vpop.f32.mrf.mxu0
      %v2789 = vadd.f32 %v2256, %v2788
      %v2790 = vpop.f32.mrf.mxu0
      %v2791 = vadd.f32 %v2260, %v2790
      %2792 = vmatprep.mubr.bf16.mxu0 0
      %2793 = vmatmul.mubr.bf16.gmra.mxu0 %v2178
      %v2794 = vpop.f32.mrf.mxu0
      %v2795 = vadd.f32 %v2256, %v2794
      %v2796 = vpop.f32.mrf.mxu0
      %v2797 = vadd.f32 %v2260, %v2796
      %v2798 = vpop.f32.mrf.mxu0
      %v2799 = vadd.f32 %v2256, %v2798
      %v2800 = vpop.f32.mrf.mxu0
      %v2801 = vadd.f32 %v2260, %v2800
      %2802 = vmatprep.mubr.bf16.mxu0 0
      %2803 = vmatmul.mubr.bf16.gmra.mxu0 %v2179
      %v2804 = vpop.f32.mrf.mxu0
      %v2805 = vadd.f32 %v2256, %v2804
      %v2806 = vpop.f32.mrf.mxu0
      %v2807 = vadd.f32 %v2260, %v2806
      %v2808 = vpop.f32.mrf.mxu0
      %v2809 = vadd.f32 %v2256, %v2808
      %v2810 = vpop.f32.mrf.mxu0
      %v2811 = vadd.f32 %v2260, %v2810
      %2812 = vmatprep.mubr.bf16.mxu0 0
      %2813 = vmatmul.mubr.bf16.gmra.mxu0 %v2180
      %v2814 = vpop.f32.mrf.mxu0
      %v2815 = vadd.f32 %v2256, %v2814
      %v2816 = vpop.f32.mrf.mxu0
      %v2817 = vadd.f32 %v2260, %v2816
      %v2818 = vpop.f32.mrf.mxu0
      %v2819 = vadd.f32 %v2256, %v2818
      %v2820 = vpop.f32.mrf.mxu0
      %v2821 = vadd.f32 %v2260, %v2820
      %2822 = vdwg.mxu0
      %2823 = vmatprep.subr.bf16.mxu0 %v2530
      %2824 = vmatpush1.bf16.msra.mxu0 %v2529
      %2825 = vmatprep.subr.bf16.mxu0 %v2522
      %2826 = vmatpush1.bf16.msra.mxu0 %v2521
      %2827 = vmatprep.subr.bf16.mxu0 %v2514
      %2828 = vmatpush1.bf16.msra.mxu0 %v2513
      %2829 = vmatprep.subr.bf16.mxu0 %v2506
      %2830 = vmatpush1.bf16.msra.mxu0 %v2505
      %2831 = vmatprep.subr.bf16.mxu0 %v2498
      %2832 = vmatpush1.bf16.msra.mxu0 %v2497
      %2833 = vmatprep.subr.bf16.mxu0 %v2490
      %2834 = vmatpush1.bf16.msra.mxu0 %v2489
      %2835 = vmatprep.subr.bf16.mxu0 %v2482
      %2836 = vmatpush1.bf16.msra.mxu0 %v2481
      %2837 = vmatprep.subr.bf16.mxu0 %v2474
      %2838 = vmatpush1.bf16.msra.mxu0 %v2473
      %2839 = vmatprep.subr.bf16.mxu0 0
      %2840 = vmatpush2.bf16.msra.mxu0 0
      %2841 = vmatprep.subr.bf16.mxu0 0
      %2842 = vmatpush2.bf16.msra.mxu0 0
      %2843 = vmatprep.subr.bf16.mxu0 0
      %2844 = vmatpush2.bf16.msra.mxu0 0
      %2845 = vmatprep.subr.bf16.mxu0 0
      %2846 = vmatpush2.bf16.msra.mxu0 0
      %2847 = vmatprep.subr.bf16.mxu0 0
      %2848 = vmatpush2.bf16.msra.mxu0 0
      %2849 = vmatprep.subr.bf16.mxu0 0
      %2850 = vmatpush2.bf16.msra.mxu0 0
      %2851 = vmatprep.subr.bf16.mxu0 0
      %2852 = vmatpush2.bf16.msra.mxu0 0
      %2853 = vmatprep.subr.bf16.mxu0 0
      %2854 = vmatpush2.bf16.msra.mxu0 0
      %2855 = vmatprep.mubr.bf16.mxu0 0
      %2856 = vmatmul.mubr.bf16.gmra.mxu0 %v2173
      %v2857 = vpop.f32.mrf.mxu0
      %v2858 = vadd.f32 %v2264, %v2857
      %v2859 = vpop.f32.mrf.mxu0
      %v2860 = vadd.f32 %v2268, %v2859
      %v2861 = vpop.f32.mrf.mxu0
      %v2862 = vadd.f32 %v2264, %v2861
      %v2863 = vpop.f32.mrf.mxu0
      %v2864 = vadd.f32 %v2268, %v2863
      %2865 = vmatprep.mubr.bf16.mxu0 0
      %2866 = vmatmul.mubr.bf16.gmra.mxu0 %v2174
      %v2867 = vpop.f32.mrf.mxu0
      %v2868 = vadd.f32 %v2264, %v2867
      %v2869 = vpop.f32.mrf.mxu0
      %v2870 = vadd.f32 %v2268, %v2869
      %v2871 = vpop.f32.mrf.mxu0
      %v2872 = vadd.f32 %v2264, %v2871
      %v2873 = vpop.f32.mrf.mxu0
      %v2874 = vadd.f32 %v2268, %v2873
      %2875 = vmatprep.mubr.bf16.mxu0 0
      %2876 = vmatmul.mubr.bf16.gmra.mxu0 %v2175
      %v2877 = vpop.f32.mrf.mxu0
      %v2878 = vadd.f32 %v2264, %v2877
      %v2879 = vpop.f32.mrf.mxu0
      %v2880 = vadd.f32 %v2268, %v2879
      %v2881 = vpop.f32.mrf.mxu0
      %v2882 = vadd.f32 %v2264, %v2881
      %v2883 = vpop.f32.mrf.mxu0
      %v2884 = vadd.f32 %v2268, %v2883
      %2885 = vmatprep.mubr.bf16.mxu0 0
      %2886 = vmatmul.mubr.bf16.gmra.mxu0 %v2176
      %v2887 = vpop.f32.mrf.mxu0
      %v2888 = vadd.f32 %v2264, %v2887
      %v2889 = vpop.f32.mrf.mxu0
      %v2890 = vadd.f32 %v2268, %v2889
      %v2891 = vpop.f32.mrf.mxu0
      %v2892 = vadd.f32 %v2264, %v2891
      %v2893 = vpop.f32.mrf.mxu0
      %v2894 = vadd.f32 %v2268, %v2893
      %2895 = vmatprep.mubr.bf16.mxu0 0
      %2896 = vmatmul.mubr.bf16.gmra.mxu0 %v2177
      %v2897 = vpop.f32.mrf.mxu0
      %v2898 = vadd.f32 %v2264, %v2897
      %v2899 = vpop.f32.mrf.mxu0
      %v2900 = vadd.f32 %v2268, %v2899
      %v2901 = vpop.f32.mrf.mxu0
      %v2902 = vadd.f32 %v2264, %v2901
      %v2903 = vpop.f32.mrf.mxu0
      %v2904 = vadd.f32 %v2268, %v2903
      %2905 = vmatprep.mubr.bf16.mxu0 0
      %2906 = vmatmul.mubr.bf16.gmra.mxu0 %v2178
      %v2907 = vpop.f32.mrf.mxu0
      %v2908 = vadd.f32 %v2264, %v2907
      %v2909 = vpop.f32.mrf.mxu0
      %v2910 = vadd.f32 %v2268, %v2909
      %v2911 = vpop.f32.mrf.mxu0
      %v2912 = vadd.f32 %v2264, %v2911
      %v2913 = vpop.f32.mrf.mxu0
      %v2914 = vadd.f32 %v2268, %v2913
      %2915 = vmatprep.mubr.bf16.mxu0 0
      %2916 = vmatmul.mubr.bf16.gmra.mxu0 %v2179
      %v2917 = vpop.f32.mrf.mxu0
      %v2918 = vadd.f32 %v2264, %v2917
      %v2919 = vpop.f32.mrf.mxu0
      %v2920 = vadd.f32 %v2268, %v2919
      %v2921 = vpop.f32.mrf.mxu0
      %v2922 = vadd.f32 %v2264, %v2921
      %v2923 = vpop.f32.mrf.mxu0
      %v2924 = vadd.f32 %v2268, %v2923
      %2925 = vmatprep.mubr.bf16.mxu0 0
      %2926 = vmatmul.mubr.bf16.gmra.mxu0 %v2180
      %v2927 = vpop.f32.mrf.mxu0
      %v2928 = vadd.f32 %v2264, %v2927
      %v2929 = vpop.f32.mrf.mxu0
      %v2930 = vadd.f32 %v2268, %v2929
      %v2931 = vpop.f32.mrf.mxu0
      %v2932 = vadd.f32 %v2264, %v2931
      %v2933 = vpop.f32.mrf.mxu0
      %v2934 = vadd.f32 %v2268, %v2933
      %2935 = vdwg.mxu0
      %2936 = vmatprep.subr.bf16.mxu0 %v2532
      %2937 = vmatpush1.bf16.msra.mxu0 %v2531
      %2938 = vmatprep.subr.bf16.mxu0 %v2524
      %2939 = vmatpush1.bf16.msra.mxu0 %v2523
      %2940 = vmatprep.subr.bf16.mxu0 %v2516
      %2941 = vmatpush1.bf16.msra.mxu0 %v2515
      %2942 = vmatprep.subr.bf16.mxu0 %v2508
      %2943 = vmatpush1.bf16.msra.mxu0 %v2507
      %2944 = vmatprep.subr.bf16.mxu0 %v2500
      %2945 = vmatpush1.bf16.msra.mxu0 %v2499
      %2946 = vmatprep.subr.bf16.mxu0 %v2492
      %2947 = vmatpush1.bf16.msra.mxu0 %v2491
      %2948 = vmatprep.subr.bf16.mxu0 %v2484
      %2949 = vmatpush1.bf16.msra.mxu0 %v2483
      %2950 = vmatprep.subr.bf16.mxu0 %v2476
      %2951 = vmatpush1.bf16.msra.mxu0 %v2475
      %2952 = vmatprep.subr.bf16.mxu0 0
      %2953 = vmatpush2.bf16.msra.mxu0 0
      %2954 = vmatprep.subr.bf16.mxu0 0
      %2955 = vmatpush2.bf16.msra.mxu0 0
      %2956 = vmatprep.subr.bf16.mxu0 0
      %2957 = vmatpush2.bf16.msra.mxu0 0
      %2958 = vmatprep.subr.bf16.mxu0 0
      %2959 = vmatpush2.bf16.msra.mxu0 0
      %2960 = vmatprep.subr.bf16.mxu0 0
      %2961 = vmatpush2.bf16.msra.mxu0 0
      %2962 = vmatprep.subr.bf16.mxu0 0
      %2963 = vmatpush2.bf16.msra.mxu0 0
      %2964 = vmatprep.subr.bf16.mxu0 0
      %2965 = vmatpush2.bf16.msra.mxu0 0
      %2966 = vmatprep.subr.bf16.mxu0 0
      %2967 = vmatpush2.bf16.msra.mxu0 0
      %2968 = vmatprep.mubr.bf16.mxu0 0
      %2969 = vmatmul.mubr.bf16.gmra.mxu0 %v2173
      %v2970 = vpop.f32.mrf.mxu0
      %v2971 = vadd.f32 %v2272, %v2970
      %v2972 = vpop.f32.mrf.mxu0
      %v2973 = vadd.f32 %v2276, %v2972
      %v2974 = vpop.f32.mrf.mxu0
      %v2975 = vadd.f32 %v2272, %v2974
      %v2976 = vpop.f32.mrf.mxu0
      %v2977 = vadd.f32 %v2276, %v2976
      %2978 = vmatprep.mubr.bf16.mxu0 0
      %2979 = vmatmul.mubr.bf16.gmra.mxu0 %v2174
      %v2980 = vpop.f32.mrf.mxu0
      %v2981 = vadd.f32 %v2272, %v2980
      %v2982 = vpop.f32.mrf.mxu0
      %v2983 = vadd.f32 %v2276, %v2982
      %v2984 = vpop.f32.mrf.mxu0
      %v2985 = vadd.f32 %v2272, %v2984
      %v2986 = vpop.f32.mrf.mxu0
      %v2987 = vadd.f32 %v2276, %v2986
      %2988 = vmatprep.mubr.bf16.mxu0 0
      %2989 = vmatmul.mubr.bf16.gmra.mxu0 %v2175
      %v2990 = vpop.f32.mrf.mxu0
      %v2991 = vadd.f32 %v2272, %v2990
      %v2992 = vpop.f32.mrf.mxu0
      %v2993 = vadd.f32 %v2276, %v2992
      %v2994 = vpop.f32.mrf.mxu0
      %v2995 = vadd.f32 %v2272, %v2994
      %v2996 = vpop.f32.mrf.mxu0
      %v2997 = vadd.f32 %v2276, %v2996
      %2998 = vmatprep.mubr.bf16.mxu0 0
      %2999 = vmatmul.mubr.bf16.gmra.mxu0 %v2176
      %v3000 = vpop.f32.mrf.mxu0
      %v3001 = vadd.f32 %v2272, %v3000
      %v3002 = vpop.f32.mrf.mxu0
      %v3003 = vadd.f32 %v2276, %v3002
      %v3004 = vpop.f32.mrf.mxu0
      %v3005 = vadd.f32 %v2272, %v3004
      %v3006 = vpop.f32.mrf.mxu0
      %v3007 = vadd.f32 %v2276, %v3006
      %3008 = vmatprep.mubr.bf16.mxu0 0
      %3009 = vmatmul.mubr.bf16.gmra.mxu0 %v2177
      %v3010 = vpop.f32.mrf.mxu0
      %v3011 = vadd.f32 %v2272, %v3010
      %v3012 = vpop.f32.mrf.mxu0
      %v3013 = vadd.f32 %v2276, %v3012
      %v3014 = vpop.f32.mrf.mxu0
      %v3015 = vadd.f32 %v2272, %v3014
      %v3016 = vpop.f32.mrf.mxu0
      %v3017 = vadd.f32 %v2276, %v3016
      %3018 = vmatprep.mubr.bf16.mxu0 0
      %3019 = vmatmul.mubr.bf16.gmra.mxu0 %v2178
      %v3020 = vpop.f32.mrf.mxu0
      %v3021 = vadd.f32 %v2272, %v3020
      %v3022 = vpop.f32.mrf.mxu0
      %v3023 = vadd.f32 %v2276, %v3022
      %v3024 = vpop.f32.mrf.mxu0
      %v3025 = vadd.f32 %v2272, %v3024
      %v3026 = vpop.f32.mrf.mxu0
      %v3027 = vadd.f32 %v2276, %v3026
      %3028 = vmatprep.mubr.bf16.mxu0 0
      %3029 = vmatmul.mubr.bf16.gmra.mxu0 %v2179
      %v3030 = vpop.f32.mrf.mxu0
      %v3031 = vadd.f32 %v2272, %v3030
      %v3032 = vpop.f32.mrf.mxu0
      %v3033 = vadd.f32 %v2276, %v3032
      %v3034 = vpop.f32.mrf.mxu0
      %v3035 = vadd.f32 %v2272, %v3034
      %v3036 = vpop.f32.mrf.mxu0
      %v3037 = vadd.f32 %v2276, %v3036
      %3038 = vmatprep.mubr.bf16.mxu0 0
      %3039 = vmatmul.mubr.bf16.gmra.mxu0 %v2180
      %v3040 = vpop.f32.mrf.mxu0
      %v3041 = vadd.f32 %v2272, %v3040
      %v3042 = vpop.f32.mrf.mxu0
      %v3043 = vadd.f32 %v2276, %v3042
      %v3044 = vpop.f32.mrf.mxu0
      %v3045 = vadd.f32 %v2272, %v3044
      %v3046 = vpop.f32.mrf.mxu0
      %v3047 = vadd.f32 %v2276, %v3046
      %3048 = vdwg.mxu0
      %v3049 = vxor.u32 %v2632, 2147483648
      %v3050 = vxor.u32 %v2634, 2147483648
      %v3051 = vxor.u32 %v2745, 2147483648
      %v3052 = vxor.u32 %v2747, 2147483648
      %v3053 = vxor.u32 %v2858, 2147483648
      %v3054 = vxor.u32 %v2860, 2147483648
      %v3055 = vxor.u32 %v2971, 2147483648
      %v3056 = vxor.u32 %v2973, 2147483648
      %v3057 = vxor.u32 %v2636, 2147483648
      %v3058 = vxor.u32 %v2638, 2147483648
      %v3059 = vxor.u32 %v2749, 2147483648
      %v3060 = vxor.u32 %v2751, 2147483648
      %v3061 = vxor.u32 %v2862, 2147483648
      %v3062 = vxor.u32 %v2864, 2147483648
      %v3063 = vxor.u32 %v2975, 2147483648
      %v3064 = vxor.u32 %v2977, 2147483648
      %v3065 = vxor.u32 %v2642, 2147483648
      %v3066 = vxor.u32 %v2644, 2147483648
      %v3067 = vxor.u32 %v2755, 2147483648
      %v3068 = vxor.u32 %v2757, 2147483648
      %v3069 = vxor.u32 %v2868, 2147483648
      %v3070 = vxor.u32 %v2870, 2147483648
      %v3071 = vxor.u32 %v2981, 2147483648
      %v3072 = vxor.u32 %v2983, 2147483648
      %v3073 = vxor.u32 %v2646, 2147483648
      %v3074 = vxor.u32 %v2648, 2147483648
      %v3075 = vxor.u32 %v2759, 2147483648
      %v3076 = vxor.u32 %v2761, 2147483648
      %v3077 = vxor.u32 %v2872, 2147483648
      %v3078 = vxor.u32 %v2874, 2147483648
      %v3079 = vxor.u32 %v2985, 2147483648
      %v3080 = vxor.u32 %v2987, 2147483648
      %v3081 = vxor.u32 %v2652, 2147483648
      %v3082 = vxor.u32 %v2654, 2147483648
      %v3083 = vxor.u32 %v2765, 2147483648
      %v3084 = vxor.u32 %v2767, 2147483648
      %v3085 = vxor.u32 %v2878, 2147483648
      %v3086 = vxor.u32 %v2880, 2147483648
      %v3087 = vxor.u32 %v2991, 2147483648
      %v3088 = vxor.u32 %v2993, 2147483648
      %v3089 = vxor.u32 %v2656, 2147483648
      %v3090 = vxor.u32 %v2658, 2147483648
      %v3091 = vxor.u32 %v2769, 2147483648
      %v3092 = vxor.u32 %v2771, 2147483648
      %v3093 = vxor.u32 %v2882, 2147483648
      %v3094 = vxor.u32 %v2884, 2147483648
      %v3095 = vxor.u32 %v2995, 2147483648
      %v3096 = vxor.u32 %v2997, 2147483648
      %v3097 = vxor.u32 %v2662, 2147483648
      %v3098 = vxor.u32 %v2664, 2147483648
      %v3099 = vxor.u32 %v2775, 2147483648
      %v3100 = vxor.u32 %v2777, 2147483648
      %v3101 = vxor.u32 %v2888, 2147483648
      %v3102 = vxor.u32 %v2890, 2147483648
      %v3103 = vxor.u32 %v3001, 2147483648
      %v3104 = vxor.u32 %v3003, 2147483648
      %v3105 = vxor.u32 %v2666, 2147483648
      %v3106 = vxor.u32 %v2668, 2147483648
      %v3107 = vxor.u32 %v2779, 2147483648
      %v3108 = vxor.u32 %v2781, 2147483648
      %v3109 = vxor.u32 %v2892, 2147483648
      %v3110 = vxor.u32 %v2894, 2147483648
      %v3111 = vxor.u32 %v3005, 2147483648
      %v3112 = vxor.u32 %v3007, 2147483648
      %v3113 = vxor.u32 %v2672, 2147483648
      %v3114 = vxor.u32 %v2674, 2147483648
      %v3115 = vxor.u32 %v2785, 2147483648
      %v3116 = vxor.u32 %v2787, 2147483648
      %v3117 = vxor.u32 %v2898, 2147483648
      %v3118 = vxor.u32 %v2900, 2147483648
      %v3119 = vxor.u32 %v3011, 2147483648
      %v3120 = vxor.u32 %v3013, 2147483648
      %v3121 = vxor.u32 %v2676, 2147483648
      %v3122 = vxor.u32 %v2678, 2147483648
      %v3123 = vxor.u32 %v2789, 2147483648
      %v3124 = vxor.u32 %v2791, 2147483648
      %v3125 = vxor.u32 %v2902, 2147483648
      %v3126 = vxor.u32 %v2904, 2147483648
      %v3127 = vxor.u32 %v3015, 2147483648
      %v3128 = vxor.u32 %v3017, 2147483648
      %v3129 = vxor.u32 %v2682, 2147483648
      %v3130 = vxor.u32 %v2684, 2147483648
      %v3131 = vxor.u32 %v2795, 2147483648
      %v3132 = vxor.u32 %v2797, 2147483648
      %v3133 = vxor.u32 %v2908, 2147483648
      %v3134 = vxor.u32 %v2910, 2147483648
      %v3135 = vxor.u32 %v3021, 2147483648
      %v3136 = vxor.u32 %v3023, 2147483648
      %v3137 = vxor.u32 %v2686, 2147483648
      %v3138 = vxor.u32 %v2688, 2147483648
      %v3139 = vxor.u32 %v2799, 2147483648
      %v3140 = vxor.u32 %v2801, 2147483648
      %v3141 = vxor.u32 %v2912, 2147483648
      %v3142 = vxor.u32 %v2914, 2147483648
      %v3143 = vxor.u32 %v3025, 2147483648
      %v3144 = vxor.u32 %v3027, 2147483648
      %v3145 = vxor.u32 %v2692, 2147483648
      %v3146 = vxor.u32 %v2694, 2147483648
      %v3147 = vxor.u32 %v2805, 2147483648
      %v3148 = vxor.u32 %v2807, 2147483648
      %v3149 = vxor.u32 %v2918, 2147483648
      %v3150 = vxor.u32 %v2920, 2147483648
      %v3151 = vxor.u32 %v3031, 2147483648
      %v3152 = vxor.u32 %v3033, 2147483648
      %v3153 = vxor.u32 %v2696, 2147483648
      %v3154 = vxor.u32 %v2698, 2147483648
      %v3155 = vxor.u32 %v2809, 2147483648
      %v3156 = vxor.u32 %v2811, 2147483648
      %v3157 = vxor.u32 %v2922, 2147483648
      %v3158 = vxor.u32 %v2924, 2147483648
      %v3159 = vxor.u32 %v3035, 2147483648
      %v3160 = vxor.u32 %v3037, 2147483648
      %v3161 = vxor.u32 %v2702, 2147483648
      %v3162 = vxor.u32 %v2704, 2147483648
      %v3163 = vxor.u32 %v2815, 2147483648
      %v3164 = vxor.u32 %v2817, 2147483648
      %v3165 = vxor.u32 %v2928, 2147483648
      %v3166 = vxor.u32 %v2930, 2147483648
      %v3167 = vxor.u32 %v3041, 2147483648
      %v3168 = vxor.u32 %v3043, 2147483648
      %v3169 = vxor.u32 %v2706, 2147483648
      %v3170 = vxor.u32 %v2708, 2147483648
      %v3171 = vxor.u32 %v2819, 2147483648
      %v3172 = vxor.u32 %v2821, 2147483648
      %v3173 = vxor.u32 %v2932, 2147483648
      %v3174 = vxor.u32 %v2934, 2147483648
      %v3175 = vxor.u32 %v3045, 2147483648
      %v3176 = vxor.u32 %v3047, 2147483648
      %v3177 = vmul.f32 %v3049, 1.442695
      %v3178 = vpow.pop %v3177
      %v3179 = vmul.f32 %v3050, 1.442695
      %v3180 = vpow.pop %v3179
      %v3181 = vmul.f32 %v3051, 1.442695
      %v3182 = vpow.pop %v3181
      %v3183 = vmul.f32 %v3052, 1.442695
      %v3184 = vpow.pop %v3183
      %v3185 = vmul.f32 %v3053, 1.442695
      %v3186 = vpow.pop %v3185
      %v3187 = vmul.f32 %v3054, 1.442695
      %v3188 = vpow.pop %v3187
      %v3189 = vmul.f32 %v3055, 1.442695
      %v3190 = vpow.pop %v3189
      %v3191 = vmul.f32 %v3056, 1.442695
      %v3192 = vpow.pop %v3191
      %v3193 = vmul.f32 %v3057, 1.442695
      %v3194 = vpow.pop %v3193
      %v3195 = vmul.f32 %v3058, 1.442695
      %v3196 = vpow.pop %v3195
      %v3197 = vmul.f32 %v3059, 1.442695
      %v3198 = vpow.pop %v3197
      %v3199 = vmul.f32 %v3060, 1.442695
      %v3200 = vpow.pop %v3199
      %v3201 = vmul.f32 %v3061, 1.442695
      %v3202 = vpow.pop %v3201
      %v3203 = vmul.f32 %v3062, 1.442695
      %v3204 = vpow.pop %v3203
      %v3205 = vmul.f32 %v3063, 1.442695
      %v3206 = vpow.pop %v3205
      %v3207 = vmul.f32 %v3064, 1.442695
      %v3208 = vpow.pop %v3207
      %v3209 = vmul.f32 %v3065, 1.442695
      %v3210 = vpow.pop %v3209
      %v3211 = vmul.f32 %v3066, 1.442695
      %v3212 = vpow.pop %v3211
      %v3213 = vmul.f32 %v3067, 1.442695
      %v3214 = vpow.pop %v3213
      %v3215 = vmul.f32 %v3068, 1.442695
      %v3216 = vpow.pop %v3215
      %v3217 = vmul.f32 %v3069, 1.442695
      %v3218 = vpow.pop %v3217
      %v3219 = vmul.f32 %v3070, 1.442695
      %v3220 = vpow.pop %v3219
      %v3221 = vmul.f32 %v3071, 1.442695
      %v3222 = vpow.pop %v3221
      %v3223 = vmul.f32 %v3072, 1.442695
      %v3224 = vpow.pop %v3223
      %v3225 = vmul.f32 %v3073, 1.442695
      %v3226 = vpow.pop %v3225
      %v3227 = vmul.f32 %v3074, 1.442695
      %v3228 = vpow.pop %v3227
      %v3229 = vmul.f32 %v3075, 1.442695
      %v3230 = vpow.pop %v3229
      %v3231 = vmul.f32 %v3076, 1.442695
      %v3232 = vpow.pop %v3231
      %v3233 = vmul.f32 %v3077, 1.442695
      %v3234 = vpow.pop %v3233
      %v3235 = vmul.f32 %v3078, 1.442695
      %v3236 = vpow.pop %v3235
      %v3237 = vmul.f32 %v3079, 1.442695
      %v3238 = vpow.pop %v3237
      %v3239 = vmul.f32 %v3080, 1.442695
      %v3240 = vpow.pop %v3239
      %v3241 = vmul.f32 %v3081, 1.442695
      %v3242 = vpow.pop %v3241
      %v3243 = vmul.f32 %v3082, 1.442695
      %v3244 = vpow.pop %v3243
      %v3245 = vmul.f32 %v3083, 1.442695
      %v3246 = vpow.pop %v3245
      %v3247 = vmul.f32 %v3084, 1.442695
      %v3248 = vpow.pop %v3247
      %v3249 = vmul.f32 %v3085, 1.442695
      %v3250 = vpow.pop %v3249
      %v3251 = vmul.f32 %v3086, 1.442695
      %v3252 = vpow.pop %v3251
      %v3253 = vmul.f32 %v3087, 1.442695
      %v3254 = vpow.pop %v3253
      %v3255 = vmul.f32 %v3088, 1.442695
      %v3256 = vpow.pop %v3255
      %v3257 = vmul.f32 %v3089, 1.442695
      %v3258 = vpow.pop %v3257
      %v3259 = vmul.f32 %v3090, 1.442695
      %v3260 = vpow.pop %v3259
      %v3261 = vmul.f32 %v3091, 1.442695
      %v3262 = vpow.pop %v3261
      %v3263 = vmul.f32 %v3092, 1.442695
      %v3264 = vpow.pop %v3263
      %v3265 = vmul.f32 %v3093, 1.442695
      %v3266 = vpow.pop %v3265
      %v3267 = vmul.f32 %v3094, 1.442695
      %v3268 = vpow.pop %v3267
      %v3269 = vmul.f32 %v3095, 1.442695
      %v3270 = vpow.pop %v3269
      %v3271 = vmul.f32 %v3096, 1.442695
      %v3272 = vpow.pop %v3271
      %v3273 = vmul.f32 %v3097, 1.442695
      %v3274 = vpow.pop %v3273
      %v3275 = vmul.f32 %v3098, 1.442695
      %v3276 = vpow.pop %v3275
      %v3277 = vmul.f32 %v3099, 1.442695
      %v3278 = vpow.pop %v3277
      %v3279 = vmul.f32 %v3100, 1.442695
      %v3280 = vpow.pop %v3279
      %v3281 = vmul.f32 %v3101, 1.442695
      %v3282 = vpow.pop %v3281
      %v3283 = vmul.f32 %v3102, 1.442695
      %v3284 = vpow.pop %v3283
      %v3285 = vmul.f32 %v3103, 1.442695
      %v3286 = vpow.pop %v3285
      %v3287 = vmul.f32 %v3104, 1.442695
      %v3288 = vpow.pop %v3287
      %v3289 = vmul.f32 %v3105, 1.442695
      %v3290 = vpow.pop %v3289
      %v3291 = vmul.f32 %v3106, 1.442695
      %v3292 = vpow.pop %v3291
      %v3293 = vmul.f32 %v3107, 1.442695
      %v3294 = vpow.pop %v3293
      %v3295 = vmul.f32 %v3108, 1.442695
      %v3296 = vpow.pop %v3295
      %v3297 = vmul.f32 %v3109, 1.442695
      %v3298 = vpow.pop %v3297
      %v3299 = vmul.f32 %v3110, 1.442695
      %v3300 = vpow.pop %v3299
      %v3301 = vmul.f32 %v3111, 1.442695
      %v3302 = vpow.pop %v3301
      %v3303 = vmul.f32 %v3112, 1.442695
      %v3304 = vpow.pop %v3303
      %v3305 = vmul.f32 %v3113, 1.442695
      %v3306 = vpow.pop %v3305
      %v3307 = vmul.f32 %v3114, 1.442695
      %v3308 = vpow.pop %v3307
      %v3309 = vmul.f32 %v3115, 1.442695
      %v3310 = vpow.pop %v3309
      %v3311 = vmul.f32 %v3116, 1.442695
      %v3312 = vpow.pop %v3311
      %v3313 = vmul.f32 %v3117, 1.442695
      %v3314 = vpow.pop %v3313
      %v3315 = vmul.f32 %v3118, 1.442695
      %v3316 = vpow.pop %v3315
      %v3317 = vmul.f32 %v3119, 1.442695
      %v3318 = vpow.pop %v3317
      %v3319 = vmul.f32 %v3120, 1.442695
      %v3320 = vpow.pop %v3319
      %v3321 = vmul.f32 %v3121, 1.442695
      %v3322 = vpow.pop %v3321
      %v3323 = vmul.f32 %v3122, 1.442695
      %v3324 = vpow.pop %v3323
      %v3325 = vmul.f32 %v3123, 1.442695
      %v3326 = vpow.pop %v3325
      %v3327 = vmul.f32 %v3124, 1.442695
      %v3328 = vpow.pop %v3327
      %v3329 = vmul.f32 %v3125, 1.442695
      %v3330 = vpow.pop %v3329
      %v3331 = vmul.f32 %v3126, 1.442695
      %v3332 = vpow.pop %v3331
      %v3333 = vmul.f32 %v3127, 1.442695
      %v3334 = vpow.pop %v3333
      %v3335 = vmul.f32 %v3128, 1.442695
      %v3336 = vpow.pop %v3335
      %v3337 = vmul.f32 %v3129, 1.442695
      %v3338 = vpow.pop %v3337
      %v3339 = vmul.f32 %v3130, 1.442695
      %v3340 = vpow.pop %v3339
      %v3341 = vmul.f32 %v3131, 1.442695
      %v3342 = vpow.pop %v3341
      %v3343 = vmul.f32 %v3132, 1.442695
      %v3344 = vpow.pop %v3343
      %v3345 = vmul.f32 %v3133, 1.442695
      %v3346 = vpow.pop %v3345
      %v3347 = vmul.f32 %v3134, 1.442695
      %v3348 = vpow.pop %v3347
      %v3349 = vmul.f32 %v3135, 1.442695
      %v3350 = vpow.pop %v3349
      %v3351 = vmul.f32 %v3136, 1.442695
      %v3352 = vpow.pop %v3351
      %v3353 = vmul.f32 %v3137, 1.442695
      %v3354 = vpow.pop %v3353
      %v3355 = vmul.f32 %v3138, 1.442695
      %v3356 = vpow.pop %v3355
      %v3357 = vmul.f32 %v3139, 1.442695
      %v3358 = vpow.pop %v3357
      %v3359 = vmul.f32 %v3140, 1.442695
      %v3360 = vpow.pop %v3359
      %v3361 = vmul.f32 %v3141, 1.442695
      %v3362 = vpow.pop %v3361
      %v3363 = vmul.f32 %v3142, 1.442695
      %v3364 = vpow.pop %v3363
      %v3365 = vmul.f32 %v3143, 1.442695
      %v3366 = vpow.pop %v3365
      %v3367 = vmul.f32 %v3144, 1.442695
      %v3368 = vpow.pop %v3367
      %v3369 = vmul.f32 %v3145, 1.442695
      %v3370 = vpow.pop %v3369
      %v3371 = vmul.f32 %v3146, 1.442695
      %v3372 = vpow.pop %v3371
      %v3373 = vmul.f32 %v3147, 1.442695
      %v3374 = vpow.pop %v3373
      %v3375 = vmul.f32 %v3148, 1.442695
      %v3376 = vpow.pop %v3375
      %v3377 = vmul.f32 %v3149, 1.442695
      %v3378 = vpow.pop %v3377
      %v3379 = vmul.f32 %v3150, 1.442695
      %v3380 = vpow.pop %v3379
      %v3381 = vmul.f32 %v3151, 1.442695
      %v3382 = vpow.pop %v3381
      %v3383 = vmul.f32 %v3152, 1.442695
      %v3384 = vpow.pop %v3383
      %v3385 = vmul.f32 %v3153, 1.442695
      %v3386 = vpow.pop %v3385
      %v3387 = vmul.f32 %v3154, 1.442695
      %v3388 = vpow.pop %v3387
      %v3389 = vmul.f32 %v3155, 1.442695
      %v3390 = vpow.pop %v3389
      %v3391 = vmul.f32 %v3156, 1.442695
      %v3392 = vpow.pop %v3391
      %v3393 = vmul.f32 %v3157, 1.442695
      %v3394 = vpow.pop %v3393
      %v3395 = vmul.f32 %v3158, 1.442695
      %v3396 = vpow.pop %v3395
      %v3397 = vmul.f32 %v3159, 1.442695
      %v3398 = vpow.pop %v3397
      %v3399 = vmul.f32 %v3160, 1.442695
      %v3400 = vpow.pop %v3399
      %v3401 = vmul.f32 %v3161, 1.442695
      %v3402 = vpow.pop %v3401
      %v3403 = vmul.f32 %v3162, 1.442695
      %v3404 = vpow.pop %v3403
      %v3405 = vmul.f32 %v3163, 1.442695
      %v3406 = vpow.pop %v3405
      %v3407 = vmul.f32 %v3164, 1.442695
      %v3408 = vpow.pop %v3407
      %v3409 = vmul.f32 %v3165, 1.442695
      %v3410 = vpow.pop %v3409
      %v3411 = vmul.f32 %v3166, 1.442695
      %v3412 = vpow.pop %v3411
      %v3413 = vmul.f32 %v3167, 1.442695
      %v3414 = vpow.pop %v3413
      %v3415 = vmul.f32 %v3168, 1.442695
      %v3416 = vpow.pop %v3415
      %v3417 = vmul.f32 %v3169, 1.442695
      %v3418 = vpow.pop %v3417
      %v3419 = vmul.f32 %v3170, 1.442695
      %v3420 = vpow.pop %v3419
      %v3421 = vmul.f32 %v3171, 1.442695
      %v3422 = vpow.pop %v3421
      %v3423 = vmul.f32 %v3172, 1.442695
      %v3424 = vpow.pop %v3423
      %v3425 = vmul.f32 %v3173, 1.442695
      %v3426 = vpow.pop %v3425
      %v3427 = vmul.f32 %v3174, 1.442695
      %v3428 = vpow.pop %v3427
      %v3429 = vmul.f32 %v3175, 1.442695
      %v3430 = vpow.pop %v3429
      %v3431 = vmul.f32 %v3176, 1.442695
      %v3432 = vpow.pop %v3431
      %v3433 = vadd.f32 %v3178, 1.0
      %v3434 = vadd.f32 %v3180, 1.0
      %v3435 = vadd.f32 %v3182, 1.0
      %v3436 = vadd.f32 %v3184, 1.0
      %v3437 = vadd.f32 %v3186, 1.0
      %v3438 = vadd.f32 %v3188, 1.0
      %v3439 = vadd.f32 %v3190, 1.0
      %v3440 = vadd.f32 %v3192, 1.0
      %v3441 = vadd.f32 %v3194, 1.0
      %v3442 = vadd.f32 %v3196, 1.0
      %v3443 = vadd.f32 %v3198, 1.0
      %v3444 = vadd.f32 %v3200, 1.0
      %v3445 = vadd.f32 %v3202, 1.0
      %v3446 = vadd.f32 %v3204, 1.0
      %v3447 = vadd.f32 %v3206, 1.0
      %v3448 = vadd.f32 %v3208, 1.0
      %v3449 = vadd.f32 %v3210, 1.0
      %v3450 = vadd.f32 %v3212, 1.0
      %v3451 = vadd.f32 %v3214, 1.0
      %v3452 = vadd.f32 %v3216, 1.0
      %v3453 = vadd.f32 %v3218, 1.0
      %v3454 = vadd.f32 %v3220, 1.0
      %v3455 = vadd.f32 %v3222, 1.0
      %v3456 = vadd.f32 %v3224, 1.0
      %v3457 = vadd.f32 %v3226, 1.0
      %v3458 = vadd.f32 %v3228, 1.0
      %v3459 = vadd.f32 %v3230, 1.0
      %v3460 = vadd.f32 %v3232, 1.0
      %v3461 = vadd.f32 %v3234, 1.0
      %v3462 = vadd.f32 %v3236, 1.0
      %v3463 = vadd.f32 %v3238, 1.0
      %v3464 = vadd.f32 %v3240, 1.0
      %v3465 = vadd.f32 %v3242, 1.0
      %v3466 = vadd.f32 %v3244, 1.0
      %v3467 = vadd.f32 %v3246, 1.0
      %v3468 = vadd.f32 %v3248, 1.0
      %v3469 = vadd.f32 %v3250, 1.0
      %v3470 = vadd.f32 %v3252, 1.0
      %v3471 = vadd.f32 %v3254, 1.0
      %v3472 = vadd.f32 %v3256, 1.0
      %v3473 = vadd.f32 %v3258, 1.0
      %v3474 = vadd.f32 %v3260, 1.0
      %v3475 = vadd.f32 %v3262, 1.0
      %v3476 = vadd.f32 %v3264, 1.0
      %v3477 = vadd.f32 %v3266, 1.0
      %v3478 = vadd.f32 %v3268, 1.0
      %v3479 = vadd.f32 %v3270, 1.0
      %v3480 = vadd.f32 %v3272, 1.0
      %v3481 = vadd.f32 %v3274, 1.0
      %v3482 = vadd.f32 %v3276, 1.0
      %v3483 = vadd.f32 %v3278, 1.0
      %v3484 = vadd.f32 %v3280, 1.0
      %v3485 = vadd.f32 %v3282, 1.0
      %v3486 = vadd.f32 %v3284, 1.0
      %v3487 = vadd.f32 %v3286, 1.0
      %v3488 = vadd.f32 %v3288, 1.0
      %v3489 = vadd.f32 %v3290, 1.0
      %v3490 = vadd.f32 %v3292, 1.0
      %v3491 = vadd.f32 %v3294, 1.0
      %v3492 = vadd.f32 %v3296, 1.0
      %v3493 = vadd.f32 %v3298, 1.0
      %v3494 = vadd.f32 %v3300, 1.0
      %v3495 = vadd.f32 %v3302, 1.0
      %v3496 = vadd.f32 %v3304, 1.0
      %v3497 = vadd.f32 %v3306, 1.0
      %v3498 = vadd.f32 %v3308, 1.0
      %v3499 = vadd.f32 %v3310, 1.0
      %v3500 = vadd.f32 %v3312, 1.0
      %v3501 = vadd.f32 %v3314, 1.0
      %v3502 = vadd.f32 %v3316, 1.0
      %v3503 = vadd.f32 %v3318, 1.0
      %v3504 = vadd.f32 %v3320, 1.0
      %v3505 = vadd.f32 %v3322, 1.0
      %v3506 = vadd.f32 %v3324, 1.0
      %v3507 = vadd.f32 %v3326, 1.0
      %v3508 = vadd.f32 %v3328, 1.0
      %v3509 = vadd.f32 %v3330, 1.0
      %v3510 = vadd.f32 %v3332, 1.0
      %v3511 = vadd.f32 %v3334, 1.0
      %v3512 = vadd.f32 %v3336, 1.0
      %v3513 = vadd.f32 %v3338, 1.0
      %v3514 = vadd.f32 %v3340, 1.0
      %v3515 = vadd.f32 %v3342, 1.0
      %v3516 = vadd.f32 %v3344, 1.0
      %v3517 = vadd.f32 %v3346, 1.0
      %v3518 = vadd.f32 %v3348, 1.0
      %v3519 = vadd.f32 %v3350, 1.0
      %v3520 = vadd.f32 %v3352, 1.0
      %v3521 = vadd.f32 %v3354, 1.0
      %v3522 = vadd.f32 %v3356, 1.0
      %v3523 = vadd.f32 %v3358, 1.0
      %v3524 = vadd.f32 %v3360, 1.0
      %v3525 = vadd.f32 %v3362, 1.0
      %v3526 = vadd.f32 %v3364, 1.0
      %v3527 = vadd.f32 %v3366, 1.0
      %v3528 = vadd.f32 %v3368, 1.0
      %v3529 = vadd.f32 %v3370, 1.0
      %v3530 = vadd.f32 %v3372, 1.0
      %v3531 = vadd.f32 %v3374, 1.0
      %v3532 = vadd.f32 %v3376, 1.0
      %v3533 = vadd.f32 %v3378, 1.0
      %v3534 = vadd.f32 %v3380, 1.0
      %v3535 = vadd.f32 %v3382, 1.0
      %v3536 = vadd.f32 %v3384, 1.0
      %v3537 = vadd.f32 %v3386, 1.0
      %v3538 = vadd.f32 %v3388, 1.0
      %v3539 = vadd.f32 %v3390, 1.0
      %v3540 = vadd.f32 %v3392, 1.0
      %v3541 = vadd.f32 %v3394, 1.0
      %v3542 = vadd.f32 %v3396, 1.0
      %v3543 = vadd.f32 %v3398, 1.0
      %v3544 = vadd.f32 %v3400, 1.0
      %v3545 = vadd.f32 %v3402, 1.0
      %v3546 = vadd.f32 %v3404, 1.0
      %v3547 = vadd.f32 %v3406, 1.0
      %v3548 = vadd.f32 %v3408, 1.0
      %v3549 = vadd.f32 %v3410, 1.0
      %v3550 = vadd.f32 %v3412, 1.0
      %v3551 = vadd.f32 %v3414, 1.0
      %v3552 = vadd.f32 %v3416, 1.0
      %v3553 = vadd.f32 %v3418, 1.0
      %v3554 = vadd.f32 %v3420, 1.0
      %v3555 = vadd.f32 %v3422, 1.0
      %v3556 = vadd.f32 %v3424, 1.0
      %v3557 = vadd.f32 %v3426, 1.0
      %v3558 = vadd.f32 %v3428, 1.0
      %v3559 = vadd.f32 %v3430, 1.0
      %v3560 = vadd.f32 %v3432, 1.0
      %v3561 = vrcp.pop %v3433
      %v3562 = vmul.f32 1.0, %v3561
      %v3563 = vrcp.pop %v3434
      %v3564 = vmul.f32 1.0, %v3563
      %v3565 = vrcp.pop %v3435
      %v3566 = vmul.f32 1.0, %v3565
      %v3567 = vrcp.pop %v3436
      %v3568 = vmul.f32 1.0, %v3567
      %v3569 = vrcp.pop %v3437
      %v3570 = vmul.f32 1.0, %v3569
      %v3571 = vrcp.pop %v3438
      %v3572 = vmul.f32 1.0, %v3571
      %v3573 = vrcp.pop %v3439
      %v3574 = vmul.f32 1.0, %v3573
      %v3575 = vrcp.pop %v3440
      %v3576 = vmul.f32 1.0, %v3575
      %v3577 = vrcp.pop %v3441
      %v3578 = vmul.f32 1.0, %v3577
      %v3579 = vrcp.pop %v3442
      %v3580 = vmul.f32 1.0, %v3579
      %v3581 = vrcp.pop %v3443
      %v3582 = vmul.f32 1.0, %v3581
      %v3583 = vrcp.pop %v3444
      %v3584 = vmul.f32 1.0, %v3583
      %v3585 = vrcp.pop %v3445
      %v3586 = vmul.f32 1.0, %v3585
      %v3587 = vrcp.pop %v3446
      %v3588 = vmul.f32 1.0, %v3587
      %v3589 = vrcp.pop %v3447
      %v3590 = vmul.f32 1.0, %v3589
      %v3591 = vrcp.pop %v3448
      %v3592 = vmul.f32 1.0, %v3591
      %v3593 = vrcp.pop %v3449
      %v3594 = vmul.f32 1.0, %v3593
      %v3595 = vrcp.pop %v3450
      %v3596 = vmul.f32 1.0, %v3595
      %v3597 = vrcp.pop %v3451
      %v3598 = vmul.f32 1.0, %v3597
      %v3599 = vrcp.pop %v3452
      %v3600 = vmul.f32 1.0, %v3599
      %v3601 = vrcp.pop %v3453
      %v3602 = vmul.f32 1.0, %v3601
      %v3603 = vrcp.pop %v3454
      %v3604 = vmul.f32 1.0, %v3603
      %v3605 = vrcp.pop %v3455
      %v3606 = vmul.f32 1.0, %v3605
      %v3607 = vrcp.pop %v3456
      %v3608 = vmul.f32 1.0, %v3607
      %v3609 = vrcp.pop %v3457
      %v3610 = vmul.f32 1.0, %v3609
      %v3611 = vrcp.pop %v3458
      %v3612 = vmul.f32 1.0, %v3611
      %v3613 = vrcp.pop %v3459
      %v3614 = vmul.f32 1.0, %v3613
      %v3615 = vrcp.pop %v3460
      %v3616 = vmul.f32 1.0, %v3615
      %v3617 = vrcp.pop %v3461
      %v3618 = vmul.f32 1.0, %v3617
      %v3619 = vrcp.pop %v3462
      %v3620 = vmul.f32 1.0, %v3619
      %v3621 = vrcp.pop %v3463
      %v3622 = vmul.f32 1.0, %v3621
      %v3623 = vrcp.pop %v3464
      %v3624 = vmul.f32 1.0, %v3623
      %v3625 = vrcp.pop %v3465
      %v3626 = vmul.f32 1.0, %v3625
      %v3627 = vrcp.pop %v3466
      %v3628 = vmul.f32 1.0, %v3627
      %v3629 = vrcp.pop %v3467
      %v3630 = vmul.f32 1.0, %v3629
      %v3631 = vrcp.pop %v3468
      %v3632 = vmul.f32 1.0, %v3631
      %v3633 = vrcp.pop %v3469
      %v3634 = vmul.f32 1.0, %v3633
      %v3635 = vrcp.pop %v3470
      %v3636 = vmul.f32 1.0, %v3635
      %v3637 = vrcp.pop %v3471
      %v3638 = vmul.f32 1.0, %v3637
      %v3639 = vrcp.pop %v3472
      %v3640 = vmul.f32 1.0, %v3639
      %v3641 = vrcp.pop %v3473
      %v3642 = vmul.f32 1.0, %v3641
      %v3643 = vrcp.pop %v3474
      %v3644 = vmul.f32 1.0, %v3643
      %v3645 = vrcp.pop %v3475
      %v3646 = vmul.f32 1.0, %v3645
      %v3647 = vrcp.pop %v3476
      %v3648 = vmul.f32 1.0, %v3647
      %v3649 = vrcp.pop %v3477
      %v3650 = vmul.f32 1.0, %v3649
      %v3651 = vrcp.pop %v3478
      %v3652 = vmul.f32 1.0, %v3651
      %v3653 = vrcp.pop %v3479
      %v3654 = vmul.f32 1.0, %v3653
      %v3655 = vrcp.pop %v3480
      %v3656 = vmul.f32 1.0, %v3655
      %v3657 = vrcp.pop %v3481
      %v3658 = vmul.f32 1.0, %v3657
      %v3659 = vrcp.pop %v3482
      %v3660 = vmul.f32 1.0, %v3659
      %v3661 = vrcp.pop %v3483
      %v3662 = vmul.f32 1.0, %v3661
      %v3663 = vrcp.pop %v3484
      %v3664 = vmul.f32 1.0, %v3663
      %v3665 = vrcp.pop %v3485
      %v3666 = vmul.f32 1.0, %v3665
      %v3667 = vrcp.pop %v3486
      %v3668 = vmul.f32 1.0, %v3667
      %v3669 = vrcp.pop %v3487
      %v3670 = vmul.f32 1.0, %v3669
      %v3671 = vrcp.pop %v3488
      %v3672 = vmul.f32 1.0, %v3671
      %v3673 = vrcp.pop %v3489
      %v3674 = vmul.f32 1.0, %v3673
      %v3675 = vrcp.pop %v3490
      %v3676 = vmul.f32 1.0, %v3675
      %v3677 = vrcp.pop %v3491
      %v3678 = vmul.f32 1.0, %v3677
      %v3679 = vrcp.pop %v3492
      %v3680 = vmul.f32 1.0, %v3679
      %v3681 = vrcp.pop %v3493
      %v3682 = vmul.f32 1.0, %v3681
      %v3683 = vrcp.pop %v3494
      %v3684 = vmul.f32 1.0, %v3683
      %v3685 = vrcp.pop %v3495
      %v3686 = vmul.f32 1.0, %v3685
      %v3687 = vrcp.pop %v3496
      %v3688 = vmul.f32 1.0, %v3687
      %v3689 = vrcp.pop %v3497
      %v3690 = vmul.f32 1.0, %v3689
      %v3691 = vrcp.pop %v3498
      %v3692 = vmul.f32 1.0, %v3691
      %v3693 = vrcp.pop %v3499
      %v3694 = vmul.f32 1.0, %v3693
      %v3695 = vrcp.pop %v3500
      %v3696 = vmul.f32 1.0, %v3695
      %v3697 = vrcp.pop %v3501
      %v3698 = vmul.f32 1.0, %v3697
      %v3699 = vrcp.pop %v3502
      %v3700 = vmul.f32 1.0, %v3699
      %v3701 = vrcp.pop %v3503
      %v3702 = vmul.f32 1.0, %v3701
      %v3703 = vrcp.pop %v3504
      %v3704 = vmul.f32 1.0, %v3703
      %v3705 = vrcp.pop %v3505
      %v3706 = vmul.f32 1.0, %v3705
      %v3707 = vrcp.pop %v3506
      %v3708 = vmul.f32 1.0, %v3707
      %v3709 = vrcp.pop %v3507
      %v3710 = vmul.f32 1.0, %v3709
      %v3711 = vrcp.pop %v3508
      %v3712 = vmul.f32 1.0, %v3711
      %v3713 = vrcp.pop %v3509
      %v3714 = vmul.f32 1.0, %v3713
      %v3715 = vrcp.pop %v3510
      %v3716 = vmul.f32 1.0, %v3715
      %v3717 = vrcp.pop %v3511
      %v3718 = vmul.f32 1.0, %v3717
      %v3719 = vrcp.pop %v3512
      %v3720 = vmul.f32 1.0, %v3719
      %v3721 = vrcp.pop %v3513
      %v3722 = vmul.f32 1.0, %v3721
      %v3723 = vrcp.pop %v3514
      %v3724 = vmul.f32 1.0, %v3723
      %v3725 = vrcp.pop %v3515
      %v3726 = vmul.f32 1.0, %v3725
      %v3727 = vrcp.pop %v3516
      %v3728 = vmul.f32 1.0, %v3727
      %v3729 = vrcp.pop %v3517
      %v3730 = vmul.f32 1.0, %v3729
      %v3731 = vrcp.pop %v3518
      %v3732 = vmul.f32 1.0, %v3731
      %v3733 = vrcp.pop %v3519
      %v3734 = vmul.f32 1.0, %v3733
      %v3735 = vrcp.pop %v3520
      %v3736 = vmul.f32 1.0, %v3735
      %v3737 = vrcp.pop %v3521
      %v3738 = vmul.f32 1.0, %v3737
      %v3739 = vrcp.pop %v3522
      %v3740 = vmul.f32 1.0, %v3739
      %v3741 = vrcp.pop %v3523
      %v3742 = vmul.f32 1.0, %v3741
      %v3743 = vrcp.pop %v3524
      %v3744 = vmul.f32 1.0, %v3743
      %v3745 = vrcp.pop %v3525
      %v3746 = vmul.f32 1.0, %v3745
      %v3747 = vrcp.pop %v3526
      %v3748 = vmul.f32 1.0, %v3747
      %v3749 = vrcp.pop %v3527
      %v3750 = vmul.f32 1.0, %v3749
      %v3751 = vrcp.pop %v3528
      %v3752 = vmul.f32 1.0, %v3751
      %v3753 = vrcp.pop %v3529
      %v3754 = vmul.f32 1.0, %v3753
      %v3755 = vrcp.pop %v3530
      %v3756 = vmul.f32 1.0, %v3755
      %v3757 = vrcp.pop %v3531
      %v3758 = vmul.f32 1.0, %v3757
      %v3759 = vrcp.pop %v3532
      %v3760 = vmul.f32 1.0, %v3759
      %v3761 = vrcp.pop %v3533
      %v3762 = vmul.f32 1.0, %v3761
      %v3763 = vrcp.pop %v3534
      %v3764 = vmul.f32 1.0, %v3763
      %v3765 = vrcp.pop %v3535
      %v3766 = vmul.f32 1.0, %v3765
      %v3767 = vrcp.pop %v3536
      %v3768 = vmul.f32 1.0, %v3767
      %v3769 = vrcp.pop %v3537
      %v3770 = vmul.f32 1.0, %v3769
      %v3771 = vrcp.pop %v3538
      %v3772 = vmul.f32 1.0, %v3771
      %v3773 = vrcp.pop %v3539
      %v3774 = vmul.f32 1.0, %v3773
      %v3775 = vrcp.pop %v3540
      %v3776 = vmul.f32 1.0, %v3775
      %v3777 = vrcp.pop %v3541
      %v3778 = vmul.f32 1.0, %v3777
      %v3779 = vrcp.pop %v3542
      %v3780 = vmul.f32 1.0, %v3779
      %v3781 = vrcp.pop %v3543
      %v3782 = vmul.f32 1.0, %v3781
      %v3783 = vrcp.pop %v3544
      %v3784 = vmul.f32 1.0, %v3783
      %v3785 = vrcp.pop %v3545
      %v3786 = vmul.f32 1.0, %v3785
      %v3787 = vrcp.pop %v3546
      %v3788 = vmul.f32 1.0, %v3787
      %v3789 = vrcp.pop %v3547
      %v3790 = vmul.f32 1.0, %v3789
      %v3791 = vrcp.pop %v3548
      %v3792 = vmul.f32 1.0, %v3791
      %v3793 = vrcp.pop %v3549
      %v3794 = vmul.f32 1.0, %v3793
      %v3795 = vrcp.pop %v3550
      %v3796 = vmul.f32 1.0, %v3795
      %v3797 = vrcp.pop %v3551
      %v3798 = vmul.f32 1.0, %v3797
      %v3799 = vrcp.pop %v3552
      %v3800 = vmul.f32 1.0, %v3799
      %v3801 = vrcp.pop %v3553
      %v3802 = vmul.f32 1.0, %v3801
      %v3803 = vrcp.pop %v3554
      %v3804 = vmul.f32 1.0, %v3803
      %v3805 = vrcp.pop %v3555
      %v3806 = vmul.f32 1.0, %v3805
      %v3807 = vrcp.pop %v3556
      %v3808 = vmul.f32 1.0, %v3807
      %v3809 = vrcp.pop %v3557
      %v3810 = vmul.f32 1.0, %v3809
      %v3811 = vrcp.pop %v3558
      %v3812 = vmul.f32 1.0, %v3811
      %v3813 = vrcp.pop %v3559
      %v3814 = vmul.f32 1.0, %v3813
      %v3815 = vrcp.pop %v3560
      %v3816 = vmul.f32 1.0, %v3815
      %v3817 = vpack.c.bf16 %v3578, %v3562
      %v3818 = vpack.c.bf16 %v3580, %v3564
      %v3819 = vpack.c.bf16 %v3582, %v3566
      %v3820 = vpack.c.bf16 %v3584, %v3568
      %v3821 = vpack.c.bf16 %v3586, %v3570
      %v3822 = vpack.c.bf16 %v3588, %v3572
      %v3823 = vpack.c.bf16 %v3590, %v3574
      %v3824 = vpack.c.bf16 %v3592, %v3576
      %v3825 = vpack.c.bf16 %v3610, %v3594
      %v3826 = vpack.c.bf16 %v3612, %v3596
      %v3827 = vpack.c.bf16 %v3614, %v3598
      %v3828 = vpack.c.bf16 %v3616, %v3600
      %v3829 = vpack.c.bf16 %v3618, %v3602
      %v3830 = vpack.c.bf16 %v3620, %v3604
      %v3831 = vpack.c.bf16 %v3622, %v3606
      %v3832 = vpack.c.bf16 %v3624, %v3608
      %v3833 = vpack.c.bf16 %v3642, %v3626
      %v3834 = vpack.c.bf16 %v3644, %v3628
      %v3835 = vpack.c.bf16 %v3646, %v3630
      %v3836 = vpack.c.bf16 %v3648, %v3632
      %v3837 = vpack.c.bf16 %v3650, %v3634
      %v3838 = vpack.c.bf16 %v3652, %v3636
      %v3839 = vpack.c.bf16 %v3654, %v3638
      %v3840 = vpack.c.bf16 %v3656, %v3640
      %v3841 = vpack.c.bf16 %v3674, %v3658
      %v3842 = vpack.c.bf16 %v3676, %v3660
      %v3843 = vpack.c.bf16 %v3678, %v3662
      %v3844 = vpack.c.bf16 %v3680, %v3664
      %v3845 = vpack.c.bf16 %v3682, %v3666
      %v3846 = vpack.c.bf16 %v3684, %v3668
      %v3847 = vpack.c.bf16 %v3686, %v3670
      %v3848 = vpack.c.bf16 %v3688, %v3672
      %v3849 = vpack.c.bf16 %v3706, %v3690
      %v3850 = vpack.c.bf16 %v3708, %v3692
      %v3851 = vpack.c.bf16 %v3710, %v3694
      %v3852 = vpack.c.bf16 %v3712, %v3696
      %v3853 = vpack.c.bf16 %v3714, %v3698
      %v3854 = vpack.c.bf16 %v3716, %v3700
      %v3855 = vpack.c.bf16 %v3718, %v3702
      %v3856 = vpack.c.bf16 %v3720, %v3704
      %v3857 = vpack.c.bf16 %v3738, %v3722
      %v3858 = vpack.c.bf16 %v3740, %v3724
      %v3859 = vpack.c.bf16 %v3742, %v3726
      %v3860 = vpack.c.bf16 %v3744, %v3728
      %v3861 = vpack.c.bf16 %v3746, %v3730
      %v3862 = vpack.c.bf16 %v3748, %v3732
      %v3863 = vpack.c.bf16 %v3750, %v3734
      %v3864 = vpack.c.bf16 %v3752, %v3736
      %v3865 = vpack.c.bf16 %v3770, %v3754
      %v3866 = vpack.c.bf16 %v3772, %v3756
      %v3867 = vpack.c.bf16 %v3774, %v3758
      %v3868 = vpack.c.bf16 %v3776, %v3760
      %v3869 = vpack.c.bf16 %v3778, %v3762
      %v3870 = vpack.c.bf16 %v3780, %v3764
      %v3871 = vpack.c.bf16 %v3782, %v3766
      %v3872 = vpack.c.bf16 %v3784, %v3768
      %v3873 = vpack.c.bf16 %v3802, %v3786
      %v3874 = vpack.c.bf16 %v3804, %v3788
      %v3875 = vpack.c.bf16 %v3806, %v3790
      %v3876 = vpack.c.bf16 %v3808, %v3792
      %v3877 = vpack.c.bf16 %v3810, %v3794
      %v3878 = vpack.c.bf16 %v3812, %v3796
      %v3879 = vpack.c.bf16 %v3814, %v3798
      %v3880 = vpack.c.bf16 %v3816, %v3800
      %v3881 = vld [vmem:[%s6] sm:$0xf]
      %v3882 = vld [vmem:[%s6 + $0x4] sm:$0xf]
      %v3883 = vld [vmem:[%s6 + $0x8] sm:$0xf]
      %v3884 = vld [vmem:[%s6 + $0xc] sm:$0xf]
      %v3885 = vld [vmem:[%s6 + $0x10] sm:$0xf]
      %v3886 = vld [vmem:[%s6 + $0x14] sm:$0xf]
      %v3887 = vld [vmem:[%s6 + $0x18] sm:$0xf]
      %v3888 = vld [vmem:[%s6 + $0x1c] sm:$0xf]
      %v3889 = vld [vmem:[%s6 + $0x20] sm:$0xf]
      %v3890 = vld [vmem:[%s6 + $0x24] sm:$0xf]
      %v3891 = vld [vmem:[%s6 + $0x28] sm:$0xf]
      %v3892 = vld [vmem:[%s6 + $0x2c] sm:$0xf]
      %v3893 = vld [vmem:[%s6 + $0x30] sm:$0xf]
      %v3894 = vld [vmem:[%s6 + $0x34] sm:$0xf]
      %v3895 = vld [vmem:[%s6 + $0x38] sm:$0xf]
      %v3896 = vld [vmem:[%s6 + $0x3c] sm:$0xf]
      %v3897 = vld [vmem:[%s6 + $0x40] sm:$0xf]
      %v3898 = vld [vmem:[%s6 + $0x44] sm:$0xf]
      %v3899 = vld [vmem:[%s6 + $0x48] sm:$0xf]
      %v3900 = vld [vmem:[%s6 + $0x4c] sm:$0xf]
      %v3901 = vld [vmem:[%s6 + $0x50] sm:$0xf]
      %v3902 = vld [vmem:[%s6 + $0x54] sm:$0xf]
      %v3903 = vld [vmem:[%s6 + $0x58] sm:$0xf]
      %v3904 = vld [vmem:[%s6 + $0x5c] sm:$0xf]
      %v3905 = vld [vmem:[%s6 + $0x60] sm:$0xf]
      %v3906 = vld [vmem:[%s6 + $0x64] sm:$0xf]
      %v3907 = vld [vmem:[%s6 + $0x68] sm:$0xf]
      %v3908 = vld [vmem:[%s6 + $0x6c] sm:$0xf]
      %v3909 = vld [vmem:[%s6 + $0x70] sm:$0xf]
      %v3910 = vld [vmem:[%s6 + $0x74] sm:$0xf]
      %v3911 = vld [vmem:[%s6 + $0x78] sm:$0xf]
      %v3912 = vld [vmem:[%s6 + $0x7c] sm:$0xf]
      %v3913 = vld [vmem:[%s6 + $0x80] sm:$0xf]
      %v3914 = vld [vmem:[%s6 + $0x84] sm:$0xf]
      %v3915 = vld [vmem:[%s6 + $0x88] sm:$0xf]
      %v3916 = vld [vmem:[%s6 + $0x8c] sm:$0xf]
      %v3917 = vld [vmem:[%s6 + $0x90] sm:$0xf]
      %v3918 = vld [vmem:[%s6 + $0x94] sm:$0xf]
      %v3919 = vld [vmem:[%s6 + $0x98] sm:$0xf]
      %v3920 = vld [vmem:[%s6 + $0x9c] sm:$0xf]
      %v3921 = vld [vmem:[%s6 + $0xa0] sm:$0xf]
      %v3922 = vld [vmem:[%s6 + $0xa4] sm:$0xf]
      %v3923 = vld [vmem:[%s6 + $0xa8] sm:$0xf]
      %v3924 = vld [vmem:[%s6 + $0xac] sm:$0xf]
      %v3925 = vld [vmem:[%s6 + $0xb0] sm:$0xf]
      %v3926 = vld [vmem:[%s6 + $0xb4] sm:$0xf]
      %v3927 = vld [vmem:[%s6 + $0xb8] sm:$0xf]
      %v3928 = vld [vmem:[%s6 + $0xbc] sm:$0xf]
      %v3929 = vld [vmem:[%s6 + $0xc0] sm:$0xf]
      %v3930 = vld [vmem:[%s6 + $0xc4] sm:$0xf]
      %v3931 = vld [vmem:[%s6 + $0xc8] sm:$0xf]
      %v3932 = vld [vmem:[%s6 + $0xcc] sm:$0xf]
      %v3933 = vld [vmem:[%s6 + $0xd0] sm:$0xf]
      %v3934 = vld [vmem:[%s6 + $0xd4] sm:$0xf]
      %v3935 = vld [vmem:[%s6 + $0xd8] sm:$0xf]
      %v3936 = vld [vmem:[%s6 + $0xdc] sm:$0xf]
      %v3937 = vld [vmem:[%s6 + $0xe0] sm:$0xf]
      %v3938 = vld [vmem:[%s6 + $0xe4] sm:$0xf]
      %v3939 = vld [vmem:[%s6 + $0xe8] sm:$0xf]
      %v3940 = vld [vmem:[%s6 + $0xec] sm:$0xf]
      %v3941 = vld [vmem:[%s6 + $0xf0] sm:$0xf]
      %v3942 = vld [vmem:[%s6 + $0xf4] sm:$0xf]
      %v3943 = vld [vmem:[%s6 + $0xf8] sm:$0xf]
      %v3944 = vld [vmem:[%s6 + $0xfc] sm:$0xf]
      %v3945 = vld [vmem:[%s6 + $0x100] sm:$0xf]
      %v3946 = vld [vmem:[%s6 + $0x104] sm:$0xf]
      %v3947 = vld [vmem:[%s6 + $0x108] sm:$0xf]
      %v3948 = vld [vmem:[%s6 + $0x10c] sm:$0xf]
      %v3949 = vld [vmem:[%s6 + $0x110] sm:$0xf]
      %v3950 = vld [vmem:[%s6 + $0x114] sm:$0xf]
      %v3951 = vld [vmem:[%s6 + $0x118] sm:$0xf]
      %v3952 = vld [vmem:[%s6 + $0x11c] sm:$0xf]
      %v3953 = vld [vmem:[%s6 + $0x120] sm:$0xf]
      %v3954 = vld [vmem:[%s6 + $0x124] sm:$0xf]
      %v3955 = vld [vmem:[%s6 + $0x128] sm:$0xf]
      %v3956 = vld [vmem:[%s6 + $0x12c] sm:$0xf]
      %v3957 = vld [vmem:[%s6 + $0x130] sm:$0xf]
      %v3958 = vld [vmem:[%s6 + $0x134] sm:$0xf]
      %v3959 = vld [vmem:[%s6 + $0x138] sm:$0xf]
      %v3960 = vld [vmem:[%s6 + $0x13c] sm:$0xf]
      %v3961 = vld [vmem:[%s6 + $0x140] sm:$0xf]
      %v3962 = vld [vmem:[%s6 + $0x144] sm:$0xf]
      %v3963 = vld [vmem:[%s6 + $0x148] sm:$0xf]
      %v3964 = vld [vmem:[%s6 + $0x14c] sm:$0xf]
      %v3965 = vld [vmem:[%s6 + $0x150] sm:$0xf]
      %v3966 = vld [vmem:[%s6 + $0x154] sm:$0xf]
      %v3967 = vld [vmem:[%s6 + $0x158] sm:$0xf]
      %v3968 = vld [vmem:[%s6 + $0x15c] sm:$0xf]
      %v3969 = vld [vmem:[%s6 + $0x160] sm:$0xf]
      %v3970 = vld [vmem:[%s6 + $0x164] sm:$0xf]
      %v3971 = vld [vmem:[%s6 + $0x168] sm:$0xf]
      %v3972 = vld [vmem:[%s6 + $0x16c] sm:$0xf]
      %v3973 = vld [vmem:[%s6 + $0x170] sm:$0xf]
      %v3974 = vld [vmem:[%s6 + $0x174] sm:$0xf]
      %v3975 = vld [vmem:[%s6 + $0x178] sm:$0xf]
      %v3976 = vld [vmem:[%s6 + $0x17c] sm:$0xf]
      %v3977 = vld [vmem:[%s6 + $0x180] sm:$0xf]
      %v3978 = vld [vmem:[%s6 + $0x184] sm:$0xf]
      %v3979 = vld [vmem:[%s6 + $0x188] sm:$0xf]
      %v3980 = vld [vmem:[%s6 + $0x18c] sm:$0xf]
      %v3981 = vld [vmem:[%s6 + $0x190] sm:$0xf]
      %v3982 = vld [vmem:[%s6 + $0x194] sm:$0xf]
      %v3983 = vld [vmem:[%s6 + $0x198] sm:$0xf]
      %v3984 = vld [vmem:[%s6 + $0x19c] sm:$0xf]
      %v3985 = vld [vmem:[%s6 + $0x1a0] sm:$0xf]
      %v3986 = vld [vmem:[%s6 + $0x1a4] sm:$0xf]
      %v3987 = vld [vmem:[%s6 + $0x1a8] sm:$0xf]
      %v3988 = vld [vmem:[%s6 + $0x1ac] sm:$0xf]
      %v3989 = vld [vmem:[%s6 + $0x1b0] sm:$0xf]
      %v3990 = vld [vmem:[%s6 + $0x1b4] sm:$0xf]
      %v3991 = vld [vmem:[%s6 + $0x1b8] sm:$0xf]
      %v3992 = vld [vmem:[%s6 + $0x1bc] sm:$0xf]
      %v3993 = vld [vmem:[%s6 + $0x1c0] sm:$0xf]
      %v3994 = vld [vmem:[%s6 + $0x1c4] sm:$0xf]
      %v3995 = vld [vmem:[%s6 + $0x1c8] sm:$0xf]
      %v3996 = vld [vmem:[%s6 + $0x1cc] sm:$0xf]
      %v3997 = vld [vmem:[%s6 + $0x1d0] sm:$0xf]
      %v3998 = vld [vmem:[%s6 + $0x1d4] sm:$0xf]
      %v3999 = vld [vmem:[%s6 + $0x1d8] sm:$0xf]
      %v4000 = vld [vmem:[%s6 + $0x1dc] sm:$0xf]
      %v4001 = vld [vmem:[%s6 + $0x1e0] sm:$0xf]
      %v4002 = vld [vmem:[%s6 + $0x1e4] sm:$0xf]
      %v4003 = vld [vmem:[%s6 + $0x1e8] sm:$0xf]
      %v4004 = vld [vmem:[%s6 + $0x1ec] sm:$0xf]
      %v4005 = vld [vmem:[%s6 + $0x1f0] sm:$0xf]
      %v4006 = vld [vmem:[%s6 + $0x1f4] sm:$0xf]
      %v4007 = vld [vmem:[%s6 + $0x1f8] sm:$0xf]
      %v4008 = vld [vmem:[%s6 + $0x1fc] sm:$0xf]
      %v4009 = vlaneseq
      %v4010 = vshrl.u32 %v4009, 7
      %v4011 = vsub.s32 4, %v4010
      %v4012 = vrot.slane %v442, %v4011
      %v4141 = vunpack.c.l.b16 %v3881
      %v4142 = vunpack.c.l.b16 %v3882
      %v4143 = vunpack.c.l.b16 %v3883
      %v4144 = vunpack.c.l.b16 %v3884
      %v4145 = vunpack.c.l.b16 %v3885
      %v4146 = vunpack.c.l.b16 %v3886
      %v4147 = vunpack.c.l.b16 %v3887
      %v4148 = vunpack.c.l.b16 %v3888
      %v4149 = vunpack.c.l.b16 %v3889
      %v4150 = vunpack.c.l.b16 %v3890
      %v4151 = vunpack.c.l.b16 %v3891
      %v4152 = vunpack.c.l.b16 %v3892
      %v4153 = vunpack.c.l.b16 %v3893
      %v4154 = vunpack.c.l.b16 %v3894
      %v4155 = vunpack.c.l.b16 %v3895
      %v4156 = vunpack.c.l.b16 %v3896
      %v4157 = vunpack.c.l.b16 %v3897
      %v4158 = vunpack.c.l.b16 %v3898
      %v4159 = vunpack.c.l.b16 %v3899
      %v4160 = vunpack.c.l.b16 %v3900
      %v4161 = vunpack.c.l.b16 %v3901
      %v4162 = vunpack.c.l.b16 %v3902
      %v4163 = vunpack.c.l.b16 %v3903
      %v4164 = vunpack.c.l.b16 %v3904
      %v4165 = vunpack.c.l.b16 %v3905
      %v4166 = vunpack.c.l.b16 %v3906
      %v4167 = vunpack.c.l.b16 %v3907
      %v4168 = vunpack.c.l.b16 %v3908
      %v4169 = vunpack.c.l.b16 %v3909
      %v4170 = vunpack.c.l.b16 %v3910
      %v4171 = vunpack.c.l.b16 %v3911
      %v4172 = vunpack.c.l.b16 %v3912
      %v4173 = vunpack.c.l.b16 %v3913
      %v4174 = vunpack.c.l.b16 %v3914
      %v4175 = vunpack.c.l.b16 %v3915
      %v4176 = vunpack.c.l.b16 %v3916
      %v4177 = vunpack.c.l.b16 %v3917
      %v4178 = vunpack.c.l.b16 %v3918
      %v4179 = vunpack.c.l.b16 %v3919
      %v4180 = vunpack.c.l.b16 %v3920
      %v4181 = vunpack.c.l.b16 %v3921
      %v4182 = vunpack.c.l.b16 %v3922
      %v4183 = vunpack.c.l.b16 %v3923
      %v4184 = vunpack.c.l.b16 %v3924
      %v4185 = vunpack.c.l.b16 %v3925
      %v4186 = vunpack.c.l.b16 %v3926
      %v4187 = vunpack.c.l.b16 %v3927
      %v4188 = vunpack.c.l.b16 %v3928
      %v4189 = vunpack.c.l.b16 %v3929
      %v4190 = vunpack.c.l.b16 %v3930
      %v4191 = vunpack.c.l.b16 %v3931
      %v4192 = vunpack.c.l.b16 %v3932
      %v4193 = vunpack.c.l.b16 %v3933
      %v4194 = vunpack.c.l.b16 %v3934
      %v4195 = vunpack.c.l.b16 %v3935
      %v4196 = vunpack.c.l.b16 %v3936
      %v4197 = vunpack.c.l.b16 %v3937
      %v4198 = vunpack.c.l.b16 %v3938
      %v4199 = vunpack.c.l.b16 %v3939
      %v4200 = vunpack.c.l.b16 %v3940
      %v4201 = vunpack.c.l.b16 %v3941
      %v4202 = vunpack.c.l.b16 %v3942
      %v4203 = vunpack.c.l.b16 %v3943
      %v4204 = vunpack.c.l.b16 %v3944
      %v4205 = vunpack.c.l.b16 %v3945
      %v4206 = vunpack.c.l.b16 %v3946
      %v4207 = vunpack.c.l.b16 %v3947
      %v4208 = vunpack.c.l.b16 %v3948
      %v4209 = vunpack.c.l.b16 %v3949
      %v4210 = vunpack.c.l.b16 %v3950
      %v4211 = vunpack.c.l.b16 %v3951
      %v4212 = vunpack.c.l.b16 %v3952
      %v4213 = vunpack.c.l.b16 %v3953
      %v4214 = vunpack.c.l.b16 %v3954
      %v4215 = vunpack.c.l.b16 %v3955
      %v4216 = vunpack.c.l.b16 %v3956
      %v4217 = vunpack.c.l.b16 %v3957
      %v4218 = vunpack.c.l.b16 %v3958
      %v4219 = vunpack.c.l.b16 %v3959
      %v4220 = vunpack.c.l.b16 %v3960
      %v4221 = vunpack.c.l.b16 %v3961
      %v4222 = vunpack.c.l.b16 %v3962
      %v4223 = vunpack.c.l.b16 %v3963
      %v4224 = vunpack.c.l.b16 %v3964
      %v4225 = vunpack.c.l.b16 %v3965
      %v4226 = vunpack.c.l.b16 %v3966
      %v4227 = vunpack.c.l.b16 %v3967
      %v4228 = vunpack.c.l.b16 %v3968
      %v4229 = vunpack.c.l.b16 %v3969
      %v4230 = vunpack.c.l.b16 %v3970
      %v4231 = vunpack.c.l.b16 %v3971
      %v4232 = vunpack.c.l.b16 %v3972
      %v4233 = vunpack.c.l.b16 %v3973
      %v4234 = vunpack.c.l.b16 %v3974
      %v4235 = vunpack.c.l.b16 %v3975
      %v4236 = vunpack.c.l.b16 %v3976
      %v4237 = vunpack.c.l.b16 %v3977
      %v4238 = vunpack.c.l.b16 %v3978
      %v4239 = vunpack.c.l.b16 %v3979
      %v4240 = vunpack.c.l.b16 %v3980
      %v4241 = vunpack.c.l.b16 %v3981
      %v4242 = vunpack.c.l.b16 %v3982
      %v4243 = vunpack.c.l.b16 %v3983
      %v4244 = vunpack.c.l.b16 %v3984
      %v4245 = vunpack.c.l.b16 %v3985
      %v4246 = vunpack.c.l.b16 %v3986
      %v4247 = vunpack.c.l.b16 %v3987
      %v4248 = vunpack.c.l.b16 %v3988
      %v4249 = vunpack.c.l.b16 %v3989
      %v4250 = vunpack.c.l.b16 %v3990
      %v4251 = vunpack.c.l.b16 %v3991
      %v4252 = vunpack.c.l.b16 %v3992
      %v4253 = vunpack.c.l.b16 %v3993
      %v4254 = vunpack.c.l.b16 %v3994
      %v4255 = vunpack.c.l.b16 %v3995
      %v4256 = vunpack.c.l.b16 %v3996
      %v4257 = vunpack.c.l.b16 %v3997
      %v4258 = vunpack.c.l.b16 %v3998
      %v4259 = vunpack.c.l.b16 %v3999
      %v4260 = vunpack.c.l.b16 %v4000
      %v4261 = vunpack.c.l.b16 %v4001
      %v4262 = vunpack.c.l.b16 %v4002
      %v4263 = vunpack.c.l.b16 %v4003
      %v4264 = vunpack.c.l.b16 %v4004
      %v4265 = vunpack.c.l.b16 %v4005
      %v4266 = vunpack.c.l.b16 %v4006
      %v4267 = vunpack.c.l.b16 %v4007
      %v4268 = vunpack.c.l.b16 %v4008
      %v4269 = vpack.c.b16 %v4142, %v4141
      %v4270 = vpack.c.b16 %v4144, %v4143
      %v4271 = vpack.c.b16 %v4146, %v4145
      %v4272 = vpack.c.b16 %v4148, %v4147
      %v4273 = vpack.c.b16 %v4150, %v4149
      %v4274 = vpack.c.b16 %v4152, %v4151
      %v4275 = vpack.c.b16 %v4154, %v4153
      %v4276 = vpack.c.b16 %v4156, %v4155
      %v4277 = vpack.c.b16 %v4158, %v4157
      %v4278 = vpack.c.b16 %v4160, %v4159
      %v4279 = vpack.c.b16 %v4162, %v4161
      %v4280 = vpack.c.b16 %v4164, %v4163
      %v4281 = vpack.c.b16 %v4166, %v4165
      %v4282 = vpack.c.b16 %v4168, %v4167
      %v4283 = vpack.c.b16 %v4170, %v4169
      %v4284 = vpack.c.b16 %v4172, %v4171
      %v4285 = vpack.c.b16 %v4174, %v4173
      %v4286 = vpack.c.b16 %v4176, %v4175
      %v4287 = vpack.c.b16 %v4178, %v4177
      %v4288 = vpack.c.b16 %v4180, %v4179
      %v4289 = vpack.c.b16 %v4182, %v4181
      %v4290 = vpack.c.b16 %v4184, %v4183
      %v4291 = vpack.c.b16 %v4186, %v4185
      %v4292 = vpack.c.b16 %v4188, %v4187
      %v4293 = vpack.c.b16 %v4190, %v4189
      %v4294 = vpack.c.b16 %v4192, %v4191
      %v4295 = vpack.c.b16 %v4194, %v4193
      %v4296 = vpack.c.b16 %v4196, %v4195
      %v4297 = vpack.c.b16 %v4198, %v4197
      %v4298 = vpack.c.b16 %v4200, %v4199
      %v4299 = vpack.c.b16 %v4202, %v4201
      %v4300 = vpack.c.b16 %v4204, %v4203
      %v4301 = vpack.c.b16 %v4206, %v4205
      %v4302 = vpack.c.b16 %v4208, %v4207
      %v4303 = vpack.c.b16 %v4210, %v4209
      %v4304 = vpack.c.b16 %v4212, %v4211
      %v4305 = vpack.c.b16 %v4214, %v4213
      %v4306 = vpack.c.b16 %v4216, %v4215
      %v4307 = vpack.c.b16 %v4218, %v4217
      %v4308 = vpack.c.b16 %v4220, %v4219
      %v4309 = vpack.c.b16 %v4222, %v4221
      %v4310 = vpack.c.b16 %v4224, %v4223
      %v4311 = vpack.c.b16 %v4226, %v4225
      %v4312 = vpack.c.b16 %v4228, %v4227
      %v4313 = vpack.c.b16 %v4230, %v4229
      %v4314 = vpack.c.b16 %v4232, %v4231
      %v4315 = vpack.c.b16 %v4234, %v4233
      %v4316 = vpack.c.b16 %v4236, %v4235
      %v4317 = vpack.c.b16 %v4238, %v4237
      %v4318 = vpack.c.b16 %v4240, %v4239
      %v4319 = vpack.c.b16 %v4242, %v4241
      %v4320 = vpack.c.b16 %v4244, %v4243
      %v4321 = vpack.c.b16 %v4246, %v4245
      %v4322 = vpack.c.b16 %v4248, %v4247
      %v4323 = vpack.c.b16 %v4250, %v4249
      %v4324 = vpack.c.b16 %v4252, %v4251
      %v4325 = vpack.c.b16 %v4254, %v4253
      %v4326 = vpack.c.b16 %v4256, %v4255
      %v4327 = vpack.c.b16 %v4258, %v4257
      %v4328 = vpack.c.b16 %v4260, %v4259
      %v4329 = vpack.c.b16 %v4262, %v4261
      %v4330 = vpack.c.b16 %v4264, %v4263
      %v4331 = vpack.c.b16 %v4266, %v4265
      %v4332 = vpack.c.b16 %v4268, %v4267
      %4397 = vmatprep.subr.bf16.mxu0 0
      %4398 = vmatpush1.bf16.msra.mxu0 %v4276
      %4399 = vmatprep.subr.bf16.mxu0 0
      %4400 = vmatpush1.bf16.msra.mxu0 %v4275
      %4401 = vmatprep.subr.bf16.mxu0 0
      %4402 = vmatpush1.bf16.msra.mxu0 %v4274
      %4403 = vmatprep.subr.bf16.mxu0 0
      %4404 = vmatpush1.bf16.msra.mxu0 %v4273
      %4405 = vmatprep.subr.bf16.mxu0 0
      %4406 = vmatpush1.bf16.msra.mxu0 %v4272
      %4407 = vmatprep.subr.bf16.mxu0 0
      %4408 = vmatpush1.bf16.msra.mxu0 %v4271
      %4409 = vmatprep.subr.bf16.mxu0 0
      %4410 = vmatpush1.bf16.msra.mxu0 %v4270
      %4411 = vmatprep.subr.bf16.mxu0 0
      %4412 = vmatpush1.bf16.msra.mxu0 %v4269
      %4413 = vmatprep.subr.bf16.mxu0 0
      %4414 = vmatpush2.bf16.msra.mxu0 %v4284
      %4415 = vmatprep.subr.bf16.mxu0 0
      %4416 = vmatpush2.bf16.msra.mxu0 %v4283
      %4417 = vmatprep.subr.bf16.mxu0 0
      %4418 = vmatpush2.bf16.msra.mxu0 %v4282
      %4419 = vmatprep.subr.bf16.mxu0 0
      %4420 = vmatpush2.bf16.msra.mxu0 %v4281
      %4421 = vmatprep.subr.bf16.mxu0 0
      %4422 = vmatpush2.bf16.msra.mxu0 %v4280
      %4423 = vmatprep.subr.bf16.mxu0 0
      %4424 = vmatpush2.bf16.msra.mxu0 %v4279
      %4425 = vmatprep.subr.bf16.mxu0 0
      %4426 = vmatpush2.bf16.msra.mxu0 %v4278
      %4427 = vmatprep.subr.bf16.mxu0 0
      %4428 = vmatpush2.bf16.msra.mxu0 %v4277
      %4429 = vmatprep.mubr.bf16.mxu0 %v3818
      %4430 = vmatmul.mubr.bf16.gmra.mxu0 %v3817
      %v4431 = vpop.f32.mrf.mxu0
      %v4432 = vadd.f32 %v4012, %v4431
      %v4433 = vpop.f32.mrf.mxu0
      %v4434 = vpop.f32.mrf.mxu0
      %v4435 = vadd.f32 %v4012, %v4434
      %v4436 = vpop.f32.mrf.mxu0
      %4437 = vmatprep.mubr.bf16.mxu0 %v3826
      %4438 = vmatmul.mubr.bf16.gmra.mxu0 %v3825
      %v4439 = vpop.f32.mrf.mxu0
      %v4440 = vadd.f32 %v4012, %v4439
      %v4441 = vpop.f32.mrf.mxu0
      %v4442 = vpop.f32.mrf.mxu0
      %v4443 = vadd.f32 %v4012, %v4442
      %v4444 = vpop.f32.mrf.mxu0
      %4445 = vmatprep.mubr.bf16.mxu0 %v3834
      %4446 = vmatmul.mubr.bf16.gmra.mxu0 %v3833
      %v4447 = vpop.f32.mrf.mxu0
      %v4448 = vadd.f32 %v4012, %v4447
      %v4449 = vpop.f32.mrf.mxu0
      %v4450 = vpop.f32.mrf.mxu0
      %v4451 = vadd.f32 %v4012, %v4450
      %v4452 = vpop.f32.mrf.mxu0
      %4453 = vmatprep.mubr.bf16.mxu0 %v3842
      %4454 = vmatmul.mubr.bf16.gmra.mxu0 %v3841
      %v4455 = vpop.f32.mrf.mxu0
      %v4456 = vadd.f32 %v4012, %v4455
      %v4457 = vpop.f32.mrf.mxu0
      %v4458 = vpop.f32.mrf.mxu0
      %v4459 = vadd.f32 %v4012, %v4458
      %v4460 = vpop.f32.mrf.mxu0
      %4461 = vmatprep.mubr.bf16.mxu0 %v3850
      %4462 = vmatmul.mubr.bf16.gmra.mxu0 %v3849
      %v4463 = vpop.f32.mrf.mxu0
      %v4464 = vadd.f32 %v4012, %v4463
      %v4465 = vpop.f32.mrf.mxu0
      %v4466 = vpop.f32.mrf.mxu0
      %v4467 = vadd.f32 %v4012, %v4466
      %v4468 = vpop.f32.mrf.mxu0
      %4469 = vmatprep.mubr.bf16.mxu0 %v3858
      %4470 = vmatmul.mubr.bf16.gmra.mxu0 %v3857
      %v4471 = vpop.f32.mrf.mxu0
      %v4472 = vadd.f32 %v4012, %v4471
      %v4473 = vpop.f32.mrf.mxu0
      %v4474 = vpop.f32.mrf.mxu0
      %v4475 = vadd.f32 %v4012, %v4474
      %v4476 = vpop.f32.mrf.mxu0
      %4477 = vmatprep.mubr.bf16.mxu0 %v3866
      %4478 = vmatmul.mubr.bf16.gmra.mxu0 %v3865
      %v4479 = vpop.f32.mrf.mxu0
      %v4480 = vadd.f32 %v4012, %v4479
      %v4481 = vpop.f32.mrf.mxu0
      %v4482 = vpop.f32.mrf.mxu0
      %v4483 = vadd.f32 %v4012, %v4482
      %v4484 = vpop.f32.mrf.mxu0
      %4485 = vmatprep.mubr.bf16.mxu0 %v3874
      %4486 = vmatmul.mubr.bf16.gmra.mxu0 %v3873
      %v4487 = vpop.f32.mrf.mxu0
      %v4488 = vadd.f32 %v4012, %v4487
      %v4489 = vpop.f32.mrf.mxu0
      %v4490 = vpop.f32.mrf.mxu0
      %v4491 = vadd.f32 %v4012, %v4490
      %v4492 = vpop.f32.mrf.mxu0
      %4493 = vdwg.mxu0
      %4494 = vmatprep.subr.bf16.mxu0 0
      %4495 = vmatpush1.bf16.msra.mxu0 %v4292
      %4496 = vmatprep.subr.bf16.mxu0 0
      %4497 = vmatpush1.bf16.msra.mxu0 %v4291
      %4498 = vmatprep.subr.bf16.mxu0 0
      %4499 = vmatpush1.bf16.msra.mxu0 %v4290
      %4500 = vmatprep.subr.bf16.mxu0 0
      %4501 = vmatpush1.bf16.msra.mxu0 %v4289
      %4502 = vmatprep.subr.bf16.mxu0 0
      %4503 = vmatpush1.bf16.msra.mxu0 %v4288
      %4504 = vmatprep.subr.bf16.mxu0 0
      %4505 = vmatpush1.bf16.msra.mxu0 %v4287
      %4506 = vmatprep.subr.bf16.mxu0 0
      %4507 = vmatpush1.bf16.msra.mxu0 %v4286
      %4508 = vmatprep.subr.bf16.mxu0 0
      %4509 = vmatpush1.bf16.msra.mxu0 %v4285
      %4510 = vmatprep.subr.bf16.mxu0 0
      %4511 = vmatpush2.bf16.msra.mxu0 %v4300
      %4512 = vmatprep.subr.bf16.mxu0 0
      %4513 = vmatpush2.bf16.msra.mxu0 %v4299
      %4514 = vmatprep.subr.bf16.mxu0 0
      %4515 = vmatpush2.bf16.msra.mxu0 %v4298
      %4516 = vmatprep.subr.bf16.mxu0 0
      %4517 = vmatpush2.bf16.msra.mxu0 %v4297
      %4518 = vmatprep.subr.bf16.mxu0 0
      %4519 = vmatpush2.bf16.msra.mxu0 %v4296
      %4520 = vmatprep.subr.bf16.mxu0 0
      %4521 = vmatpush2.bf16.msra.mxu0 %v4295
      %4522 = vmatprep.subr.bf16.mxu0 0
      %4523 = vmatpush2.bf16.msra.mxu0 %v4294
      %4524 = vmatprep.subr.bf16.mxu0 0
      %4525 = vmatpush2.bf16.msra.mxu0 %v4293
      %4526 = vmatprep.mubr.bf16.mxu0 %v3820
      %4527 = vmatmul.mubr.bf16.gmra.mxu0 %v3819
      %v4528 = vpop.f32.mrf.mxu0
      %v4529 = vadd.f32 %v4432, %v4528
      %v4530 = vpop.f32.mrf.mxu0
      %v4531 = vpop.f32.mrf.mxu0
      %v4532 = vadd.f32 %v4435, %v4531
      %v4533 = vpop.f32.mrf.mxu0
      %4534 = vmatprep.mubr.bf16.mxu0 %v3828
      %4535 = vmatmul.mubr.bf16.gmra.mxu0 %v3827
      %v4536 = vpop.f32.mrf.mxu0
      %v4537 = vadd.f32 %v4440, %v4536
      %v4538 = vpop.f32.mrf.mxu0
      %v4539 = vpop.f32.mrf.mxu0
      %v4540 = vadd.f32 %v4443, %v4539
      %v4541 = vpop.f32.mrf.mxu0
      %4542 = vmatprep.mubr.bf16.mxu0 %v3836
      %4543 = vmatmul.mubr.bf16.gmra.mxu0 %v3835
      %v4544 = vpop.f32.mrf.mxu0
      %v4545 = vadd.f32 %v4448, %v4544
      %v4546 = vpop.f32.mrf.mxu0
      %v4547 = vpop.f32.mrf.mxu0
      %v4548 = vadd.f32 %v4451, %v4547
      %v4549 = vpop.f32.mrf.mxu0
      %4550 = vmatprep.mubr.bf16.mxu0 %v3844
      %4551 = vmatmul.mubr.bf16.gmra.mxu0 %v3843
      %v4552 = vpop.f32.mrf.mxu0
      %v4553 = vadd.f32 %v4456, %v4552
      %v4554 = vpop.f32.mrf.mxu0
      %v4555 = vpop.f32.mrf.mxu0
      %v4556 = vadd.f32 %v4459, %v4555
      %v4557 = vpop.f32.mrf.mxu0
      %4558 = vmatprep.mubr.bf16.mxu0 %v3852
      %4559 = vmatmul.mubr.bf16.gmra.mxu0 %v3851
      %v4560 = vpop.f32.mrf.mxu0
      %v4561 = vadd.f32 %v4464, %v4560
      %v4562 = vpop.f32.mrf.mxu0
      %v4563 = vpop.f32.mrf.mxu0
      %v4564 = vadd.f32 %v4467, %v4563
      %v4565 = vpop.f32.mrf.mxu0
      %4566 = vmatprep.mubr.bf16.mxu0 %v3860
      %4567 = vmatmul.mubr.bf16.gmra.mxu0 %v3859
      %v4568 = vpop.f32.mrf.mxu0
      %v4569 = vadd.f32 %v4472, %v4568
      %v4570 = vpop.f32.mrf.mxu0
      %v4571 = vpop.f32.mrf.mxu0
      %v4572 = vadd.f32 %v4475, %v4571
      %v4573 = vpop.f32.mrf.mxu0
      %4574 = vmatprep.mubr.bf16.mxu0 %v3868
      %4575 = vmatmul.mubr.bf16.gmra.mxu0 %v3867
      %v4576 = vpop.f32.mrf.mxu0
      %v4577 = vadd.f32 %v4480, %v4576
      %v4578 = vpop.f32.mrf.mxu0
      %v4579 = vpop.f32.mrf.mxu0
      %v4580 = vadd.f32 %v4483, %v4579
      %v4581 = vpop.f32.mrf.mxu0
      %4582 = vmatprep.mubr.bf16.mxu0 %v3876
      %4583 = vmatmul.mubr.bf16.gmra.mxu0 %v3875
      %v4584 = vpop.f32.mrf.mxu0
      %v4585 = vadd.f32 %v4488, %v4584
      %v4586 = vpop.f32.mrf.mxu0
      %v4587 = vpop.f32.mrf.mxu0
      %v4588 = vadd.f32 %v4491, %v4587
      %v4589 = vpop.f32.mrf.mxu0
      %4590 = vdwg.mxu0
      %4591 = vmatprep.subr.bf16.mxu0 0
      %4592 = vmatpush1.bf16.msra.mxu0 %v4308
      %4593 = vmatprep.subr.bf16.mxu0 0
      %4594 = vmatpush1.bf16.msra.mxu0 %v4307
      %4595 = vmatprep.subr.bf16.mxu0 0
      %4596 = vmatpush1.bf16.msra.mxu0 %v4306
      %4597 = vmatprep.subr.bf16.mxu0 0
      %4598 = vmatpush1.bf16.msra.mxu0 %v4305
      %4599 = vmatprep.subr.bf16.mxu0 0
      %4600 = vmatpush1.bf16.msra.mxu0 %v4304
      %4601 = vmatprep.subr.bf16.mxu0 0
      %4602 = vmatpush1.bf16.msra.mxu0 %v4303
      %4603 = vmatprep.subr.bf16.mxu0 0
      %4604 = vmatpush1.bf16.msra.mxu0 %v4302
      %4605 = vmatprep.subr.bf16.mxu0 0
      %4606 = vmatpush1.bf16.msra.mxu0 %v4301
      %4607 = vmatprep.subr.bf16.mxu0 0
      %4608 = vmatpush2.bf16.msra.mxu0 %v4316
      %4609 = vmatprep.subr.bf16.mxu0 0
      %4610 = vmatpush2.bf16.msra.mxu0 %v4315
      %4611 = vmatprep.subr.bf16.mxu0 0
      %4612 = vmatpush2.bf16.msra.mxu0 %v4314
      %4613 = vmatprep.subr.bf16.mxu0 0
      %4614 = vmatpush2.bf16.msra.mxu0 %v4313
      %4615 = vmatprep.subr.bf16.mxu0 0
      %4616 = vmatpush2.bf16.msra.mxu0 %v4312
      %4617 = vmatprep.subr.bf16.mxu0 0
      %4618 = vmatpush2.bf16.msra.mxu0 %v4311
      %4619 = vmatprep.subr.bf16.mxu0 0
      %4620 = vmatpush2.bf16.msra.mxu0 %v4310
      %4621 = vmatprep.subr.bf16.mxu0 0
      %4622 = vmatpush2.bf16.msra.mxu0 %v4309
      %4623 = vmatprep.mubr.bf16.mxu0 %v3822
      %4624 = vmatmul.mubr.bf16.gmra.mxu0 %v3821
      %v4625 = vpop.f32.mrf.mxu0
      %v4626 = vadd.f32 %v4529, %v4625
      %v4627 = vpop.f32.mrf.mxu0
      %v4628 = vpop.f32.mrf.mxu0
      %v4629 = vadd.f32 %v4532, %v4628
      %v4630 = vpop.f32.mrf.mxu0
      %4631 = vmatprep.mubr.bf16.mxu0 %v3830
      %4632 = vmatmul.mubr.bf16.gmra.mxu0 %v3829
      %v4633 = vpop.f32.mrf.mxu0
      %v4634 = vadd.f32 %v4537, %v4633
      %v4635 = vpop.f32.mrf.mxu0
      %v4636 = vpop.f32.mrf.mxu0
      %v4637 = vadd.f32 %v4540, %v4636
      %v4638 = vpop.f32.mrf.mxu0
      %4639 = vmatprep.mubr.bf16.mxu0 %v3838
      %4640 = vmatmul.mubr.bf16.gmra.mxu0 %v3837
      %v4641 = vpop.f32.mrf.mxu0
      %v4642 = vadd.f32 %v4545, %v4641
      %v4643 = vpop.f32.mrf.mxu0
      %v4644 = vpop.f32.mrf.mxu0
      %v4645 = vadd.f32 %v4548, %v4644
      %v4646 = vpop.f32.mrf.mxu0
      %4647 = vmatprep.mubr.bf16.mxu0 %v3846
      %4648 = vmatmul.mubr.bf16.gmra.mxu0 %v3845
      %v4649 = vpop.f32.mrf.mxu0
      %v4650 = vadd.f32 %v4553, %v4649
      %v4651 = vpop.f32.mrf.mxu0
      %v4652 = vpop.f32.mrf.mxu0
      %v4653 = vadd.f32 %v4556, %v4652
      %v4654 = vpop.f32.mrf.mxu0
      %4655 = vmatprep.mubr.bf16.mxu0 %v3854
      %4656 = vmatmul.mubr.bf16.gmra.mxu0 %v3853
      %v4657 = vpop.f32.mrf.mxu0
      %v4658 = vadd.f32 %v4561, %v4657
      %v4659 = vpop.f32.mrf.mxu0
      %v4660 = vpop.f32.mrf.mxu0
      %v4661 = vadd.f32 %v4564, %v4660
      %v4662 = vpop.f32.mrf.mxu0
      %4663 = vmatprep.mubr.bf16.mxu0 %v3862
      %4664 = vmatmul.mubr.bf16.gmra.mxu0 %v3861
      %v4665 = vpop.f32.mrf.mxu0
      %v4666 = vadd.f32 %v4569, %v4665
      %v4667 = vpop.f32.mrf.mxu0
      %v4668 = vpop.f32.mrf.mxu0
      %v4669 = vadd.f32 %v4572, %v4668
      %v4670 = vpop.f32.mrf.mxu0
      %4671 = vmatprep.mubr.bf16.mxu0 %v3870
      %4672 = vmatmul.mubr.bf16.gmra.mxu0 %v3869
      %v4673 = vpop.f32.mrf.mxu0
      %v4674 = vadd.f32 %v4577, %v4673
      %v4675 = vpop.f32.mrf.mxu0
      %v4676 = vpop.f32.mrf.mxu0
      %v4677 = vadd.f32 %v4580, %v4676
      %v4678 = vpop.f32.mrf.mxu0
      %4679 = vmatprep.mubr.bf16.mxu0 %v3878
      %4680 = vmatmul.mubr.bf16.gmra.mxu0 %v3877
      %v4681 = vpop.f32.mrf.mxu0
      %v4682 = vadd.f32 %v4585, %v4681
      %v4683 = vpop.f32.mrf.mxu0
      %v4684 = vpop.f32.mrf.mxu0
      %v4685 = vadd.f32 %v4588, %v4684
      %v4686 = vpop.f32.mrf.mxu0
      %4687 = vdwg.mxu0
      %4688 = vmatprep.subr.bf16.mxu0 0
      %4689 = vmatpush1.bf16.msra.mxu0 %v4324
      %4690 = vmatprep.subr.bf16.mxu0 0
      %4691 = vmatpush1.bf16.msra.mxu0 %v4323
      %4692 = vmatprep.subr.bf16.mxu0 0
      %4693 = vmatpush1.bf16.msra.mxu0 %v4322
      %4694 = vmatprep.subr.bf16.mxu0 0
      %4695 = vmatpush1.bf16.msra.mxu0 %v4321
      %4696 = vmatprep.subr.bf16.mxu0 0
      %4697 = vmatpush1.bf16.msra.mxu0 %v4320
      %4698 = vmatprep.subr.bf16.mxu0 0
      %4699 = vmatpush1.bf16.msra.mxu0 %v4319
      %4700 = vmatprep.subr.bf16.mxu0 0
      %4701 = vmatpush1.bf16.msra.mxu0 %v4318
      %4702 = vmatprep.subr.bf16.mxu0 0
      %4703 = vmatpush1.bf16.msra.mxu0 %v4317
      %4704 = vmatprep.subr.bf16.mxu0 0
      %4705 = vmatpush2.bf16.msra.mxu0 %v4332
      %4706 = vmatprep.subr.bf16.mxu0 0
      %4707 = vmatpush2.bf16.msra.mxu0 %v4331
      %4708 = vmatprep.subr.bf16.mxu0 0
      %4709 = vmatpush2.bf16.msra.mxu0 %v4330
      %4710 = vmatprep.subr.bf16.mxu0 0
      %4711 = vmatpush2.bf16.msra.mxu0 %v4329
      %4712 = vmatprep.subr.bf16.mxu0 0
      %4713 = vmatpush2.bf16.msra.mxu0 %v4328
      %4714 = vmatprep.subr.bf16.mxu0 0
      %4715 = vmatpush2.bf16.msra.mxu0 %v4327
      %4716 = vmatprep.subr.bf16.mxu0 0
      %4717 = vmatpush2.bf16.msra.mxu0 %v4326
      %4718 = vmatprep.subr.bf16.mxu0 0
      %4719 = vmatpush2.bf16.msra.mxu0 %v4325
      %4720 = vmatprep.mubr.bf16.mxu0 %v3824
      %4721 = vmatmul.mubr.bf16.gmra.mxu0 %v3823
      %v4722 = vpop.f32.mrf.mxu0
      %v4723 = vadd.f32 %v4626, %v4722
      %v4724 = vpop.f32.mrf.mxu0
      %v4725 = vpop.f32.mrf.mxu0
      %v4726 = vadd.f32 %v4629, %v4725
      %v4727 = vpop.f32.mrf.mxu0
      %4728 = vmatprep.mubr.bf16.mxu0 %v3832
      %4729 = vmatmul.mubr.bf16.gmra.mxu0 %v3831
      %v4730 = vpop.f32.mrf.mxu0
      %v4731 = vadd.f32 %v4634, %v4730
      %v4732 = vpop.f32.mrf.mxu0
      %v4733 = vpop.f32.mrf.mxu0
      %v4734 = vadd.f32 %v4637, %v4733
      %v4735 = vpop.f32.mrf.mxu0
      %4736 = vmatprep.mubr.bf16.mxu0 %v3840
      %4737 = vmatmul.mubr.bf16.gmra.mxu0 %v3839
      %v4738 = vpop.f32.mrf.mxu0
      %v4739 = vadd.f32 %v4642, %v4738
      %v4740 = vpop.f32.mrf.mxu0
      %v4741 = vpop.f32.mrf.mxu0
      %v4742 = vadd.f32 %v4645, %v4741
      %v4743 = vpop.f32.mrf.mxu0
      %4744 = vmatprep.mubr.bf16.mxu0 %v3848
      %4745 = vmatmul.mubr.bf16.gmra.mxu0 %v3847
      %v4746 = vpop.f32.mrf.mxu0
      %v4747 = vadd.f32 %v4650, %v4746
      %v4748 = vpop.f32.mrf.mxu0
      %v4749 = vpop.f32.mrf.mxu0
      %v4750 = vadd.f32 %v4653, %v4749
      %v4751 = vpop.f32.mrf.mxu0
      %4752 = vmatprep.mubr.bf16.mxu0 %v3856
      %4753 = vmatmul.mubr.bf16.gmra.mxu0 %v3855
      %v4754 = vpop.f32.mrf.mxu0
      %v4755 = vadd.f32 %v4658, %v4754
      %v4756 = vpop.f32.mrf.mxu0
      %v4757 = vpop.f32.mrf.mxu0
      %v4758 = vadd.f32 %v4661, %v4757
      %v4759 = vpop.f32.mrf.mxu0
      %4760 = vmatprep.mubr.bf16.mxu0 %v3864
      %4761 = vmatmul.mubr.bf16.gmra.mxu0 %v3863
      %v4762 = vpop.f32.mrf.mxu0
      %v4763 = vadd.f32 %v4666, %v4762
      %v4764 = vpop.f32.mrf.mxu0
      %v4765 = vpop.f32.mrf.mxu0
      %v4766 = vadd.f32 %v4669, %v4765
      %v4767 = vpop.f32.mrf.mxu0
      %4768 = vmatprep.mubr.bf16.mxu0 %v3872
      %4769 = vmatmul.mubr.bf16.gmra.mxu0 %v3871
      %v4770 = vpop.f32.mrf.mxu0
      %v4771 = vadd.f32 %v4674, %v4770
      %v4772 = vpop.f32.mrf.mxu0
      %v4773 = vpop.f32.mrf.mxu0
      %v4774 = vadd.f32 %v4677, %v4773
      %v4775 = vpop.f32.mrf.mxu0
      %4776 = vmatprep.mubr.bf16.mxu0 %v3880
      %4777 = vmatmul.mubr.bf16.gmra.mxu0 %v3879
      %v4778 = vpop.f32.mrf.mxu0
      %v4779 = vadd.f32 %v4682, %v4778
      %v4780 = vpop.f32.mrf.mxu0
      %v4781 = vpop.f32.mrf.mxu0
      %v4782 = vadd.f32 %v4685, %v4781
      %v4783 = vpop.f32.mrf.mxu0
      %4784 = vdwg.mxu0
      %v4785 = vmax.f32 %v4723, 0.0
      %v4786 = vmax.f32 %v4726, 0.0
      %v4787 = vmax.f32 %v4731, 0.0
      %v4788 = vmax.f32 %v4734, 0.0
      %v4789 = vmax.f32 %v4739, 0.0
      %v4790 = vmax.f32 %v4742, 0.0
      %v4791 = vmax.f32 %v4747, 0.0
      %v4792 = vmax.f32 %v4750, 0.0
      %v4793 = vmax.f32 %v4755, 0.0
      %v4794 = vmax.f32 %v4758, 0.0
      %v4795 = vmax.f32 %v4763, 0.0
      %v4796 = vmax.f32 %v4766, 0.0
      %v4797 = vmax.f32 %v4771, 0.0
      %v4798 = vmax.f32 %v4774, 0.0
      %v4799 = vmax.f32 %v4779, 0.0
      %v4800 = vmax.f32 %v4782, 0.0
      %v4801 = vpack.c.bf16 %v4786, %v4785
      %v4802 = vpack.c.bf16 %v4788, %v4787
      %v4803 = vpack.c.bf16 %v4790, %v4789
      %v4804 = vpack.c.bf16 %v4792, %v4791
      %v4805 = vpack.c.bf16 %v4794, %v4793
      %v4806 = vpack.c.bf16 %v4796, %v4795
      %v4807 = vpack.c.bf16 %v4798, %v4797
      %v4808 = vpack.c.bf16 %v4800, %v4799
      %v4809 = vld [vmem:[%s7] sm:$0xf]
      %v4810 = vld [vmem:[%s7 + $0x4] sm:$0xf]
      %v4811 = vld [vmem:[%s7 + $0x8] sm:$0xf]
      %v4812 = vld [vmem:[%s7 + $0xc] sm:$0xf]
      %v4813 = vld [vmem:[%s7 + $0x10] sm:$0xf]
      %v4814 = vld [vmem:[%s7 + $0x14] sm:$0xf]
      %v4815 = vld [vmem:[%s7 + $0x18] sm:$0xf]
      %v4816 = vld [vmem:[%s7 + $0x1c] sm:$0xf]
      %v4817 = vld [vmem:[%s7 + $0x20] sm:$0xf]
      %v4818 = vld [vmem:[%s7 + $0x24] sm:$0xf]
      %v4819 = vld [vmem:[%s7 + $0x28] sm:$0xf]
      %v4820 = vld [vmem:[%s7 + $0x2c] sm:$0xf]
      %v4821 = vld [vmem:[%s7 + $0x30] sm:$0xf]
      %v4822 = vld [vmem:[%s7 + $0x34] sm:$0xf]
      %v4823 = vld [vmem:[%s7 + $0x38] sm:$0xf]
      %v4824 = vld [vmem:[%s7 + $0x3c] sm:$0xf]
      %v4825 = vlaneseq
      %v4826 = vshrl.u32 %v4825, 7
      %v4827 = vsub.s32 5, %v4826
      %v4828 = vrot.slane %v442, %v4827
      %v4845 = vunpack.c.l.b16 %v4809
      %v4846 = vunpack.c.l.b16 %v4810
      %v4847 = vunpack.c.l.b16 %v4811
      %v4848 = vunpack.c.l.b16 %v4812
      %v4849 = vunpack.c.l.b16 %v4813
      %v4850 = vunpack.c.l.b16 %v4814
      %v4851 = vunpack.c.l.b16 %v4815
      %v4852 = vunpack.c.l.b16 %v4816
      %v4853 = vunpack.c.l.b16 %v4817
      %v4854 = vunpack.c.l.b16 %v4818
      %v4855 = vunpack.c.l.b16 %v4819
      %v4856 = vunpack.c.l.b16 %v4820
      %v4857 = vunpack.c.l.b16 %v4821
      %v4858 = vunpack.c.l.b16 %v4822
      %v4859 = vunpack.c.l.b16 %v4823
      %v4860 = vunpack.c.l.b16 %v4824
      %v4861 = vpack.c.b16 %v4846, %v4845
      %v4862 = vpack.c.b16 %v4848, %v4847
      %v4863 = vpack.c.b16 %v4850, %v4849
      %v4864 = vpack.c.b16 %v4852, %v4851
      %v4865 = vpack.c.b16 %v4854, %v4853
      %v4866 = vpack.c.b16 %v4856, %v4855
      %v4867 = vpack.c.b16 %v4858, %v4857
      %v4868 = vpack.c.b16 %v4860, %v4859
      %4877 = vmatprep.subr.bf16.mxu0 0
      %4878 = vmatpush1.bf16.msra.mxu0 %v4868
      %4879 = vmatprep.subr.bf16.mxu0 0
      %4880 = vmatpush1.bf16.msra.mxu0 %v4867
      %4881 = vmatprep.subr.bf16.mxu0 0
      %4882 = vmatpush1.bf16.msra.mxu0 %v4866
      %4883 = vmatprep.subr.bf16.mxu0 0
      %4884 = vmatpush1.bf16.msra.mxu0 %v4865
      %4885 = vmatprep.subr.bf16.mxu0 0
      %4886 = vmatpush1.bf16.msra.mxu0 %v4864
      %4887 = vmatprep.subr.bf16.mxu0 0
      %4888 = vmatpush1.bf16.msra.mxu0 %v4863
      %4889 = vmatprep.subr.bf16.mxu0 0
      %4890 = vmatpush1.bf16.msra.mxu0 %v4862
      %4891 = vmatprep.subr.bf16.mxu0 0
      %4892 = vmatpush1.bf16.msra.mxu0 %v4861
      %4893 = vmatprep.subr.bf16.mxu0 0
      %4894 = vmatpush2.bf16.msra.mxu0 0
      %4895 = vmatprep.subr.bf16.mxu0 0
      %4896 = vmatpush2.bf16.msra.mxu0 0
      %4897 = vmatprep.subr.bf16.mxu0 0
      %4898 = vmatpush2.bf16.msra.mxu0 0
      %4899 = vmatprep.subr.bf16.mxu0 0
      %4900 = vmatpush2.bf16.msra.mxu0 0
      %4901 = vmatprep.subr.bf16.mxu0 0
      %4902 = vmatpush2.bf16.msra.mxu0 0
      %4903 = vmatprep.subr.bf16.mxu0 0
      %4904 = vmatpush2.bf16.msra.mxu0 0
      %4905 = vmatprep.subr.bf16.mxu0 0
      %4906 = vmatpush2.bf16.msra.mxu0 0
      %4907 = vmatprep.subr.bf16.mxu0 0
      %4908 = vmatpush2.bf16.msra.mxu0 0
      %4909 = vmatprep.mubr.bf16.mxu0 0
      %4910 = vmatmul.mubr.bf16.gmra.mxu0 %v4801
      %v4911 = vpop.f32.mrf.mxu0
      %v4912 = vadd.f32 %v4828, %v4911
      %v4913 = vpop.f32.mrf.mxu0
      %v4914 = vpop.f32.mrf.mxu0
      %v4915 = vadd.f32 %v4828, %v4914
      %v4916 = vpop.f32.mrf.mxu0
      %4917 = vmatprep.mubr.bf16.mxu0 0
      %4918 = vmatmul.mubr.bf16.gmra.mxu0 %v4802
      %v4919 = vpop.f32.mrf.mxu0
      %v4920 = vadd.f32 %v4828, %v4919
      %v4921 = vpop.f32.mrf.mxu0
      %v4922 = vpop.f32.mrf.mxu0
      %v4923 = vadd.f32 %v4828, %v4922
      %v4924 = vpop.f32.mrf.mxu0
      %4925 = vmatprep.mubr.bf16.mxu0 0
      %4926 = vmatmul.mubr.bf16.gmra.mxu0 %v4803
      %v4927 = vpop.f32.mrf.mxu0
      %v4928 = vadd.f32 %v4828, %v4927
      %v4929 = vpop.f32.mrf.mxu0
      %v4930 = vpop.f32.mrf.mxu0
      %v4931 = vadd.f32 %v4828, %v4930
      %v4932 = vpop.f32.mrf.mxu0
      %4933 = vmatprep.mubr.bf16.mxu0 0
      %4934 = vmatmul.mubr.bf16.gmra.mxu0 %v4804
      %v4935 = vpop.f32.mrf.mxu0
      %v4936 = vadd.f32 %v4828, %v4935
      %v4937 = vpop.f32.mrf.mxu0
      %v4938 = vpop.f32.mrf.mxu0
      %v4939 = vadd.f32 %v4828, %v4938
      %v4940 = vpop.f32.mrf.mxu0
      %4941 = vmatprep.mubr.bf16.mxu0 0
      %4942 = vmatmul.mubr.bf16.gmra.mxu0 %v4805
      %v4943 = vpop.f32.mrf.mxu0
      %v4944 = vadd.f32 %v4828, %v4943
      %v4945 = vpop.f32.mrf.mxu0
      %v4946 = vpop.f32.mrf.mxu0
      %v4947 = vadd.f32 %v4828, %v4946
      %v4948 = vpop.f32.mrf.mxu0
      %4949 = vmatprep.mubr.bf16.mxu0 0
      %4950 = vmatmul.mubr.bf16.gmra.mxu0 %v4806
      %v4951 = vpop.f32.mrf.mxu0
      %v4952 = vadd.f32 %v4828, %v4951
      %v4953 = vpop.f32.mrf.mxu0
      %v4954 = vpop.f32.mrf.mxu0
      %v4955 = vadd.f32 %v4828, %v4954
      %v4956 = vpop.f32.mrf.mxu0
      %4957 = vmatprep.mubr.bf16.mxu0 0
      %4958 = vmatmul.mubr.bf16.gmra.mxu0 %v4807
      %v4959 = vpop.f32.mrf.mxu0
      %v4960 = vadd.f32 %v4828, %v4959
      %v4961 = vpop.f32.mrf.mxu0
      %v4962 = vpop.f32.mrf.mxu0
      %v4963 = vadd.f32 %v4828, %v4962
      %v4964 = vpop.f32.mrf.mxu0
      %4965 = vmatprep.mubr.bf16.mxu0 0
      %4966 = vmatmul.mubr.bf16.gmra.mxu0 %v4808
      %v4967 = vpop.f32.mrf.mxu0
      %v4968 = vadd.f32 %v4828, %v4967
      %v4969 = vpop.f32.mrf.mxu0
      %v4970 = vpop.f32.mrf.mxu0
      %v4971 = vadd.f32 %v4828, %v4970
      %v4972 = vpop.f32.mrf.mxu0
      %4973 = vdwg.mxu0
      %4974 = vst [vmem:[%s359] sm:$0xff] %v4912
      %4975 = vst [vmem:[%s359 + $0x8] sm:$0xff] %v4915
      %4976 = vst [vmem:[%s359 + $0x10] sm:$0xff] %v4920
      %4977 = vst [vmem:[%s359 + $0x18] sm:$0xff] %v4923
      %4978 = vst [vmem:[%s359 + $0x20] sm:$0xff] %v4928
      %4979 = vst [vmem:[%s359 + $0x28] sm:$0xff] %v4931
      %4980 = vst [vmem:[%s359 + $0x30] sm:$0xff] %v4936
      %4981 = vst [vmem:[%s359 + $0x38] sm:$0xff] %v4939
      %4982 = vst [vmem:[%s359 + $0x40] sm:$0xff] %v4944
      %4983 = vst [vmem:[%s359 + $0x48] sm:$0xff] %v4947
      %4984 = vst [vmem:[%s359 + $0x50] sm:$0xff] %v4952
      %4985 = vst [vmem:[%s359 + $0x58] sm:$0xff] %v4955
      %4986 = vst [vmem:[%s359 + $0x60] sm:$0xff] %v4960
      %4987 = vst [vmem:[%s359 + $0x68] sm:$0xff] %v4963
      %4988 = vst [vmem:[%s359 + $0x70] sm:$0xff] %v4968
      %4989 = vst [vmem:[%s359 + $0x78] sm:$0xff] %v4971
      %s4990 = smul.u32 16, %s20
      %p4991 = scmp.lt.s32.totalorder %s4990, 31
      %s4992 = scalar_select %p4991, %s4990, 31
      %s4993 = smul.addr %s4992, 8
      %s4994 = scalar_lea.vmem %s9, %s4993
      // Predicated region
      $region57: #{vae_clf_forward.1} parent=55 // pred_check
        %p4995 = pneg %p237
      $region58: #{vae_clf_forward.1} parent=55 // pred_check_branch
        %4997 = sbr.rel (%p4995) target = $region60
      $region59: #{vae_clf_forward.1} parent=55 // pred_region
        %s4998 = smul.u32 16, %s20
      $region60: #{vae_clf_forward.1} parent=55 // pred_fallthru
        _
    $region56: #{vae_clf_forward.1} parent=5 // pred_fallthru
      _
    %p4999 = scmp.le.s32.totalorder 2, %s15
    // Predicated region
    $region61: #{vae_clf_forward.1} parent=5 // pred_check
      %p5000 = pneg %p4999
    $region62: #{vae_clf_forward.1} parent=5 // pred_check_branch
      %5002 = sbr.rel (%p5000) target = $region64
    $region63: #{vae_clf_forward.1} parent=5 // pred_region
      %s5003 = ssub.s32 %s15, 2
      // Predicated region
      $region65: #{vae_clf_forward.1} parent=63 // pred_check
        %p5004 = pneg %p243
      $region66: #{vae_clf_forward.1} parent=63 // pred_check_branch
        %5006 = sbr.rel (%p5004) target = $region68
      $region67: #{vae_clf_forward.1} parent=63 // pred_region
        %s5007 = smul.u32 16, %s21
        %p5008 = scmp.lt.s32.totalorder %s5007, 31
        %s5009 = scalar_select %p5008, %s5007, 31
        %s5010 = smul.addr %s5009, 8
        %s5011 = scalar_lea.vmem %s9, %s5010
      $region68: #{vae_clf_forward.1} parent=63 // pred_fallthru
        _
    $region64: #{vae_clf_forward.1} parent=5 // pred_fallthru
      _
  $region6: #{vae_clf_forward.1} parent=0 // loop_footer
    %s19 = sadd.s32 1, %s15
  $region7: #{vae_clf_forward.1} parent=0 // loop_footer_branch
    %14 = sbr.rel target = $region3
  $region8: #{vae_clf_forward.1} parent=0 // loop_exit
    _

</llo_original>
